<compile_context>
chip_gen: v7x
topology: tpu7x:2x2x1
jax: 0.10.0
libtpu: 0.0.40
codegen_flags: <defaults>
</compile_context>

<pallas_src>
import functools

import jax
import jax.numpy as jnp
from jax.experimental import pallas as pl
from jax.experimental.pallas import tpu as pltpu


def _vmem_limit_bytes():
    """Generation-aware VMEM cap: ~3/4 of physical VMEM, capped at 112 MiB."""
    cap = 64 * 1024 * 1024
    try:
        info = pltpu.get_tpu_info()
        cap = int(getattr(info, "vmem_capacity_bytes", cap))
    except Exception:
        pass
    return max(32 * 1024 * 1024, min((cap * 3) // 4, 112 * 1024 * 1024))


def _pick_batch_tile(B, N, per_elem_bytes, budget_bytes, min_rows=256):
    """Smallest divisor of B whose fc2 matmul has >= min_rows rows (fills the
    256-wide MXU on v6e/v7x) while the per-step footprint stays in budget."""
    bt = 1
    for cand in range(1, B + 1):
        if B % cand != 0:
            continue
        if cand > 1 and cand * per_elem_bytes > budget_bytes:
            break
        bt = cand
        if cand * N >= min_rows:
            break
    return bt


# ---------------------------------------------------------------------------
# Fused kernel: fc1 (+ReLU) -> depthwise 3x3 conv -> GELU -> fc2
# ---------------------------------------------------------------------------
def _mlp_dwconv_fused_kernel(x_ref, w1_ref, b1_ref, wdw_ref, bdw_ref,
                             w2_ref, b2_ref, o_ref, *, H, W, extra_relu):
    # x:   (bt, N, Cin)   one batch tile, N == H*W
    # w1:  (Cin, Chid), b1: (1, Chid)
    # wdw: (3, 3, Chid) depthwise weights, bdw: (1, Chid)
    # w2:  (Chid, Cout), b2: (1, Cout)
    # o:   (bt, N, Cout)
    bt, N, Cin = x_ref.shape
    Chid = w1_ref.shape[1]
    Cout = w2_ref.shape[1]

    # ---- fc1 (+ optional ReLU): one MXU matmul for the whole batch tile ------
    # (bt, N, Cin) -> (bt*N, Cin) is a leading-dim collapse (layout-free when
    # N % 8 == 0).  Operands stay in the input dtype; f32 accumulation.
    x2d = x_ref[...].reshape(bt * N, Cin)
    h = jnp.dot(x2d, w1_ref[...], preferred_element_type=jnp.float32)
    h = h + b1_ref[...].astype(jnp.float32)
    if extra_relu:
        h = jnp.maximum(h, 0.0)

    # ---- depthwise 3x3 SAME conv on the flattened (N, Chid) grid -------------
    # Pixel r = i*W + j.  Every tap is a circular sublane roll of the flattened
    # tensor; SAME zero-padding is reproduced by zeroing the source rows/columns
    # that would otherwise wrap, so no per-tap post-select is needed.  Masks are
    # built once and shared by all batch elements and all kernel rows.
    r = jax.lax.broadcasted_iota(jnp.int32, (N, Chid), 0)
    j = r % W
    col_not_last = j != (W - 1)     # valid sources for the left-neighbour tap
    col_not_first = j != 0          # valid sources for the right-neighbour tap
    row_not_last = r < (H - 1) * W  # valid sources for the up-neighbour row
    row_not_first = r >= W          # valid sources for the down-neighbour row

    wdw = wdw_ref[...].astype(jnp.float32)                       # (3, 3, Chid)
    wt = [[wdw[kh, kw:kw + 1] for kw in range(3)] for kh in range(3)]  # (1,Chid)
    bdw = bdw_ref[...].astype(jnp.float32)                       # (1, Chid)
    b2 = b2_ref[...].astype(jnp.float32)                         # (1, Cout)
    inv_sqrt2 = jnp.float32(0.7071067811865476)

    g_parts = []
    for bi in range(bt):                                          # static unroll
        hb = h[bi * N:(bi + 1) * N]                                # (N, Chid) f32
        # Horizontal neighbours (shared by all three kernel rows): pre-mask the
        # wrap-around column, then a single sublane roll each.
        left = pltpu.roll(jnp.where(col_not_last, hb, 0.0), 1, axis=0)
        right = pltpu.roll(jnp.where(col_not_first, hb, 0.0), N - 1, axis=0)
        # One combined horizontal expression per kernel row (3 writes total,
        # no read-modify-write accumulator scratch).
        s_top = left * wt[0][0] + hb * wt[0][1] + right * wt[0][2]
        s_mid = left * wt[1][0] + hb * wt[1][1] + right * wt[1][2]
        s_bot = left * wt[2][0] + hb * wt[2][1] + right * wt[2][2]
        # Vertical shifts: pre-mask the wrap-around row, one roll per direction.
        acc = (s_mid
               + pltpu.roll(jnp.where(row_not_last, s_top, 0.0), W, axis=0)
               + pltpu.roll(jnp.where(row_not_first, s_bot, 0.0), N - W, axis=0))
        y = acc + bdw
        # Exact-erf GELU (matches nn.GELU default).
        g_parts.append(0.5 * y * (1.0 + jax.lax.erf(y * inv_sqrt2)))

    g = g_parts[0] if bt == 1 else jnp.concatenate(g_parts, axis=0)  # (bt*N, Chid)

    # ---- fc2: one MXU matmul over the whole batch tile -----------------------
    out = jnp.dot(g.astype(w2_ref.dtype), w2_ref[...],
                  preferred_element_type=jnp.float32)
    out = out + b2
    o_ref[...] = out.reshape(bt, N, Cout).astype(o_ref.dtype)


# ---------------------------------------------------------------------------
# Module wrapper
# ---------------------------------------------------------------------------
def mlp_with_depthwise_conv(x, params, feat_size, extra_relu=False, batch_tile=None):
    """x: (B, N, C_in), feat_size = (H, W) with N == H*W.  Returns (B, N, C_out)."""
    w1, b1, wdw, bdw, w2, b2 = params
    B, N, Cin = x.shape
    H, W = feat_size
    assert N == H * W, "sequence length must equal H*W"
    Chid = w1.shape[1]
    Cout = w2.shape[1]
    itemsize = jnp.dtype(x.dtype).itemsize

    vmem_limit = _vmem_limit_bytes()
    weight_bytes = sum(p.size * jnp.dtype(p.dtype).itemsize
                       for p in (w1, b1, wdw, bdw, w2, b2))
    # Per-batch-element footprint estimate: double-buffered x/out blocks plus
    # the live f32 intermediates of the conv/GELU value chain (~6 (N, Chid) f32
    # arrays incl. masks).
    per_elem = (2 * N * Cin * itemsize + 2 * N * Cout * itemsize
                + 6 * N * Chid * 4)
    budget = vmem_limit - weight_bytes - (4 << 20)
    bt = batch_tile if batch_tile is not None else _pick_batch_tile(B, N, per_elem, budget)
    assert B % bt == 0
    # TODO(synk): for very large feature maps whose per-element footprint exceeds
    # the VMEM budget (e.g. PVT stage-1 on v7x's 64 MiB), add an H-tiled variant
    # with 1-row halo recomputation of fc1 instead of the per-batch grid.

    kernel = functools.partial(_mlp_dwconv_fused_kernel, H=H, W=W, extra_relu=extra_relu)

    flops = 2 * B * N * Cin * Chid + 18 * B * N * Chid + 2 * B * N * Chid * Cout
    bytes_accessed = (B * N * Cin + B * N * Cout) * itemsize + weight_bytes

    out = pl.pallas_call(
        kernel,
        out_shape=jax.ShapeDtypeStruct((B, N, Cout), x.dtype),
        grid=(B // bt,),
        in_specs=[
            pl.BlockSpec((bt, N, Cin), lambda b: (b, 0, 0)),
            # Constant weight/bias operands: whole-array VMEM placement, not run
            # through the double-buffered pipeline (VMEM headroom on v7x).
            pl.BlockSpec(memory_space=pltpu.MemorySpace.VMEM),  # w1
            pl.BlockSpec(memory_space=pltpu.MemorySpace.VMEM),  # b1
            pl.BlockSpec(memory_space=pltpu.MemorySpace.VMEM),  # wdw
            pl.BlockSpec(memory_space=pltpu.MemorySpace.VMEM),  # bdw
            pl.BlockSpec(memory_space=pltpu.MemorySpace.VMEM),  # w2
            pl.BlockSpec(memory_space=pltpu.MemorySpace.VMEM),  # b2
        ],
        out_specs=pl.BlockSpec((bt, N, Cout), lambda b: (b, 0, 0)),
        compiler_params=pltpu.CompilerParams(
            dimension_semantics=("parallel",),   # batch-tile axis -> 2 TCs
            vmem_limit_bytes=vmem_limit,
        ),
        cost_estimate=pl.CostEstimate(
            flops=flops,
            transcendentals=B * N * Chid,
            bytes_accessed=bytes_accessed,
        ),
    )(x, w1, b1, wdw, bdw, w2, b2)
    return out


# ---------------------------------------------------------------------------
# Pure-JAX reference (for the in-script sanity check)
# ---------------------------------------------------------------------------
def reference(x, params, feat_size, extra_relu=False):
    w1, b1, wdw, bdw, w2, b2 = params
    B, N, _ = x.shape
    H, W = feat_size
    C = w1.shape[1]
    h = x @ w1 + b1
    hh = h.reshape(B, H, W, C)
    if extra_relu:
        hh = jnp.maximum(hh, 0.0)
    k = wdw.reshape(3, 3, 1, C)          # HWIO, depthwise via feature_group_count
    y = jax.lax.conv_general_dilated(
        hh, k, window_strides=(1, 1), padding="SAME",
        dimension_numbers=("NHWC", "HWIO", "NHWC"), feature_group_count=C,
    ) + bdw.reshape(1, 1, 1, C)
    y = y.reshape(B, N, C)
    y = jax.nn.gelu(y, approximate=False)
    return y @ w2 + b2


# ---------------------------------------------------------------------------
if __name__ == "__main__":
    # Small but lane-dense shapes (channel dims multiples of 128, N multiple of 8).
    B, H, W = 2, 16, 16
    N = H * W
    in_features, hidden_features, out_features = 128, 256, 128

    key = jax.random.PRNGKey(0)
    kx, k1, k2, k3, k4, k5, k6 = jax.random.split(key, 7)

    x = jax.random.normal(kx, (B, N, in_features), jnp.float32)

    # Parameter layouts mirror nn.Linear / depthwise Conv2d:
    #   torch dwconv weight (Chid, 1, 3, 3)[c, 0, kh, kw]  <->  wdw[kh, kw, c].
    w1 = jax.random.normal(k1, (in_features, hidden_features), jnp.float32) * 0.02
    b1 = jax.random.normal(k2, (1, hidden_features), jnp.float32) * 0.02
    wdw = jax.random.normal(k3, (3, 3, hidden_features), jnp.float32) * 0.1
    bdw = jax.random.normal(k4, (1, hidden_features), jnp.float32) * 0.05
    w2 = jax.random.normal(k5, (hidden_features, out_features), jnp.float32) * 0.02
    b2 = jax.random.normal(k6, (1, out_features), jnp.float32) * 0.02
    params = (w1, b1, wdw, bdw, w2, b2)

    feat_size = (H, W)

    out = mlp_with_depthwise_conv(x, params, feat_size, extra_relu=False)
    out = jax.block_until_ready(out)
    ref = reference(x, params, feat_size, extra_relu=False)
    assert out.shape == (B, N, out_features)
    err = jnp.max(jnp.abs(out - ref))
    assert jnp.allclose(out, ref, atol=1e-3, rtol=1e-3), f"max abs err {err}"

    out_r = mlp_with_depthwise_conv(x, params, feat_size, extra_relu=True)
    out_r = jax.block_until_ready(out_r)
    ref_r = reference(x, params, feat_size, extra_relu=True)
    err_r = jnp.max(jnp.abs(out_r - ref_r))
    assert jnp.allclose(out_r, ref_r, atol=1e-3, rtol=1e-3), f"max abs err {err_r}"

    print("KERNEL_OK")
</pallas_src>

<mosaic_0001>
module attributes {stable_mosaic.version = 11 : i64} {
  func.func @_mlp_dwconv_fused_kernel(%arg0: i32, %arg1: memref<1x256x128xf32, #tpu.memory_space<vmem>>, %arg2: memref<128x256xf32, #tpu.memory_space<vmem>>, %arg3: memref<1x256xf32, #tpu.memory_space<vmem>>, %arg4: memref<3x3x256xf32, #tpu.memory_space<vmem>>, %arg5: memref<1x256xf32, #tpu.memory_space<vmem>>, %arg6: memref<256x128xf32, #tpu.memory_space<vmem>>, %arg7: memref<1x128xf32, #tpu.memory_space<vmem>>, %arg8: memref<1x256x128xf32, #tpu.memory_space<vmem>>) attributes {dimension_semantics = [#tpu.dimension_semantics<parallel>], iteration_bounds = array<i64: 2>, scalar_prefetch = 0 : i64, scratch_operands = 0 : i64, tpu.core_type = #tpu.core_type<tc>, window_params = [{transform_indices = @transform_0, window_bounds = array<i64: 1, 256, 128>}, {pipeline_mode = #tpu.pipeline_mode<synchronous>, transform_indices = @transform_1, window_bounds = array<i64: 128, 256>}, {pipeline_mode = #tpu.pipeline_mode<synchronous>, transform_indices = @transform_2, window_bounds = array<i64: 1, 256>}, {pipeline_mode = #tpu.pipeline_mode<synchronous>, transform_indices = @transform_3, window_bounds = array<i64: 3, 3, 256>}, {pipeline_mode = #tpu.pipeline_mode<synchronous>, transform_indices = @transform_4, window_bounds = array<i64: 1, 256>}, {pipeline_mode = #tpu.pipeline_mode<synchronous>, transform_indices = @transform_5, window_bounds = array<i64: 256, 128>}, {pipeline_mode = #tpu.pipeline_mode<synchronous>, transform_indices = @transform_6, window_bounds = array<i64: 1, 128>}, {transform_indices = @transform_7, window_bounds = array<i64: 1, 256, 128>}]} {
    %c0 = arith.constant 0 : index
    %c0_0 = arith.constant 0 : index
    %c0_1 = arith.constant 0 : index
    %0 = vector.load %arg1[%c0, %c0_0, %c0_1] : memref<1x256x128xf32, #tpu.memory_space<vmem>>, vector<1x256x128xf32>
    %1 = vector.shape_cast %0 : vector<1x256x128xf32> to vector<256x128xf32>
    %c0_2 = arith.constant 0 : index
    %c0_3 = arith.constant 0 : index
    %2 = vector.load %arg2[%c0_2, %c0_3] : memref<128x256xf32, #tpu.memory_space<vmem>>, vector<128x256xf32>
    %cst = arith.constant dense<0.000000e+00> : vector<256x256xf32>
    %3 = tpu.matmul %1, %2, %cst {dimension_numbers = #tpu.dot_dimension_numbers<[1], [0], [0], [1], [0, 0, 1, 1], [], []>} : vector<256x128xf32>, vector<128x256xf32>, vector<256x256xf32> -> vector<256x256xf32>
    %c0_4 = arith.constant 0 : index
    %c0_5 = arith.constant 0 : index
    %4 = vector.load %arg3[%c0_4, %c0_5] : memref<1x256xf32, #tpu.memory_space<vmem>>, vector<1x256xf32>
    %5 = vector.broadcast %4 : vector<1x256xf32> to vector<256x256xf32>
    %6 = arith.addf %3, %5 : vector<256x256xf32>
    %7 = tpu.iota {dimensions = array<i32: 0>} : vector<256x256xi32>
    %c16_i32 = arith.constant 16 : i32
    %c0_i32 = arith.constant 0 : i32
    %8 = arith.cmpi eq, %c16_i32, %c0_i32 : i32
    %c1_i32 = arith.constant 1 : i32
    %9 = arith.select %8, %c1_i32, %c16_i32 : i32
    %10 = vector.broadcast %9 : i32 to vector<256x256xi32>
    %11 = arith.remsi %7, %10 : vector<256x256xi32>
    %c0_i32_6 = arith.constant 0 : i32
    %12 = vector.broadcast %c0_i32_6 : i32 to vector<256x256xi32>
    %13 = arith.cmpi ne, %11, %12 : vector<256x256xi32>
    %c0_i32_7 = arith.constant 0 : i32
    %14 = vector.broadcast %c0_i32_7 : i32 to vector<256x256xi32>
    %15 = arith.cmpi slt, %11, %14 : vector<256x256xi32>
    %c0_i32_8 = arith.constant 0 : i32
    %16 = arith.cmpi slt, %9, %c0_i32_8 : i32
    %17 = vector.broadcast %16 : i1 to vector<256x256xi1>
    %18 = vector.broadcast %17 : vector<256x256xi1> to vector<256x256xi1>
    %19 = arith.xori %15, %18 : vector<256x256xi1>
    %20 = arith.andi %19, %13 : vector<256x256xi1>
    %21 = vector.broadcast %9 : i32 to vector<256x256xi32>
    %22 = arith.addi %11, %21 : vector<256x256xi32>
    %23 = arith.select %20, %22, %11 : vector<256x256xi1>, vector<256x256xi32>
    %c15_i32 = arith.constant 15 : i32
    %24 = vector.broadcast %c15_i32 : i32 to vector<256x256xi32>
    %25 = arith.cmpi ne, %23, %24 : vector<256x256xi32>
    %c0_i32_9 = arith.constant 0 : i32
    %26 = vector.broadcast %c0_i32_9 : i32 to vector<256x256xi32>
    %27 = arith.cmpi ne, %23, %26 : vector<256x256xi32>
    %c240_i32 = arith.constant 240 : i32
    %28 = vector.broadcast %c240_i32 : i32 to vector<256x256xi32>
    %29 = arith.cmpi slt, %7, %28 : vector<256x256xi32>
    %c16_i32_10 = arith.constant 16 : i32
    %30 = vector.broadcast %c16_i32_10 : i32 to vector<256x256xi32>
    %31 = arith.cmpi sge, %7, %30 : vector<256x256xi32>
    %c0_11 = arith.constant 0 : index
    %c0_12 = arith.constant 0 : index
    %c0_13 = arith.constant 0 : index
    %32 = vector.load %arg4[%c0_11, %c0_12, %c0_13] : memref<3x3x256xf32, #tpu.memory_space<vmem>>, vector<3x3x256xf32>
    %33 = vector.extract_strided_slice %32 {offsets = [0, 0, 0], sizes = [1, 1, 256], strides = [1, 1, 1]} : vector<3x3x256xf32> to vector<1x1x256xf32>
    %34 = vector.shape_cast %33 : vector<1x1x256xf32> to vector<1x256xf32>
    %35 = vector.extract_strided_slice %32 {offsets = [0, 1, 0], sizes = [1, 1, 256], strides = [1, 1, 1]} : vector<3x3x256xf32> to vector<1x1x256xf32>
    %36 = vector.shape_cast %35 : vector<1x1x256xf32> to vector<1x256xf32>
    %37 = vector.extract_strided_slice %32 {offsets = [0, 2, 0], sizes = [1, 1, 256], strides = [1, 1, 1]} : vector<3x3x256xf32> to vector<1x1x256xf32>
    %38 = vector.shape_cast %37 : vector<1x1x256xf32> to vector<1x256xf32>
    %39 = vector.extract_strided_slice %32 {offsets = [1, 0, 0], sizes = [1, 1, 256], strides = [1, 1, 1]} : vector<3x3x256xf32> to vector<1x1x256xf32>
    %40 = vector.shape_cast %39 : vector<1x1x256xf32> to vector<1x256xf32>
    %41 = vector.extract_strided_slice %32 {offsets = [1, 1, 0], sizes = [1, 1, 256], strides = [1, 1, 1]} : vector<3x3x256xf32> to vector<1x1x256xf32>
    %42 = vector.shape_cast %41 : vector<1x1x256xf32> to vector<1x256xf32>
    %43 = vector.extract_strided_slice %32 {offsets = [1, 2, 0], sizes = [1, 1, 256], strides = [1, 1, 1]} : vector<3x3x256xf32> to vector<1x1x256xf32>
    %44 = vector.shape_cast %43 : vector<1x1x256xf32> to vector<1x256xf32>
    %45 = vector.extract_strided_slice %32 {offsets = [2, 0, 0], sizes = [1, 1, 256], strides = [1, 1, 1]} : vector<3x3x256xf32> to vector<1x1x256xf32>
    %46 = vector.shape_cast %45 : vector<1x1x256xf32> to vector<1x256xf32>
    %47 = vector.extract_strided_slice %32 {offsets = [2, 1, 0], sizes = [1, 1, 256], strides = [1, 1, 1]} : vector<3x3x256xf32> to vector<1x1x256xf32>
    %48 = vector.shape_cast %47 : vector<1x1x256xf32> to vector<1x256xf32>
    %49 = vector.extract_strided_slice %32 {offsets = [2, 2, 0], sizes = [1, 1, 256], strides = [1, 1, 1]} : vector<3x3x256xf32> to vector<1x1x256xf32>
    %50 = vector.shape_cast %49 : vector<1x1x256xf32> to vector<1x256xf32>
    %c0_14 = arith.constant 0 : index
    %c0_15 = arith.constant 0 : index
    %51 = vector.load %arg5[%c0_14, %c0_15] : memref<1x256xf32, #tpu.memory_space<vmem>>, vector<1x256xf32>
    %c0_16 = arith.constant 0 : index
    %c0_17 = arith.constant 0 : index
    %52 = vector.load %arg7[%c0_16, %c0_17] : memref<1x128xf32, #tpu.memory_space<vmem>>, vector<1x128xf32>
    %cst_18 = arith.constant 0.000000e+00 : f32
    %53 = vector.broadcast %cst_18 : f32 to vector<256x256xf32>
    %54 = arith.select %25, %6, %53 : vector<256x256xi1>, vector<256x256xf32>
    %c1_i32_19 = arith.constant 1 : i32
    %55 = tpu.dynamic_rotate %54 by %c1_i32_19 dim 0 : vector<256x256xf32>, i32 -> vector<256x256xf32>
    %cst_20 = arith.constant 0.000000e+00 : f32
    %56 = vector.broadcast %cst_20 : f32 to vector<256x256xf32>
    %57 = arith.select %27, %6, %56 : vector<256x256xi1>, vector<256x256xf32>
    %c255_i32 = arith.constant 255 : i32
    %58 = tpu.dynamic_rotate %57 by %c255_i32 dim 0 : vector<256x256xf32>, i32 -> vector<256x256xf32>
    %59 = vector.broadcast %34 : vector<1x256xf32> to vector<256x256xf32>
    %60 = arith.mulf %55, %59 : vector<256x256xf32>
    %61 = vector.broadcast %36 : vector<1x256xf32> to vector<256x256xf32>
    %62 = arith.mulf %6, %61 : vector<256x256xf32>
    %63 = arith.addf %60, %62 : vector<256x256xf32>
    %64 = vector.broadcast %38 : vector<1x256xf32> to vector<256x256xf32>
    %65 = arith.mulf %58, %64 : vector<256x256xf32>
    %66 = arith.addf %63, %65 : vector<256x256xf32>
    %67 = vector.broadcast %40 : vector<1x256xf32> to vector<256x256xf32>
    %68 = arith.mulf %55, %67 : vector<256x256xf32>
    %69 = vector.broadcast %42 : vector<1x256xf32> to vector<256x256xf32>
    %70 = arith.mulf %6, %69 : vector<256x256xf32>
    %71 = arith.addf %68, %70 : vector<256x256xf32>
    %72 = vector.broadcast %44 : vector<1x256xf32> to vector<256x256xf32>
    %73 = arith.mulf %58, %72 : vector<256x256xf32>
    %74 = arith.addf %71, %73 : vector<256x256xf32>
    %75 = vector.broadcast %46 : vector<1x256xf32> to vector<256x256xf32>
    %76 = arith.mulf %55, %75 : vector<256x256xf32>
    %77 = vector.broadcast %48 : vector<1x256xf32> to vector<256x256xf32>
    %78 = arith.mulf %6, %77 : vector<256x256xf32>
    %79 = arith.addf %76, %78 : vector<256x256xf32>
    %80 = vector.broadcast %50 : vector<1x256xf32> to vector<256x256xf32>
    %81 = arith.mulf %58, %80 : vector<256x256xf32>
    %82 = arith.addf %79, %81 : vector<256x256xf32>
    %cst_21 = arith.constant 0.000000e+00 : f32
    %83 = vector.broadcast %cst_21 : f32 to vector<256x256xf32>
    %84 = arith.select %29, %66, %83 : vector<256x256xi1>, vector<256x256xf32>
    %c16_i32_22 = arith.constant 16 : i32
    %85 = tpu.dynamic_rotate %84 by %c16_i32_22 dim 0 : vector<256x256xf32>, i32 -> vector<256x256xf32>
    %86 = arith.addf %74, %85 : vector<256x256xf32>
    %cst_23 = arith.constant 0.000000e+00 : f32
    %87 = vector.broadcast %cst_23 : f32 to vector<256x256xf32>
    %88 = arith.select %31, %82, %87 : vector<256x256xi1>, vector<256x256xf32>
    %c240_i32_24 = arith.constant 240 : i32
    %89 = tpu.dynamic_rotate %88 by %c240_i32_24 dim 0 : vector<256x256xf32>, i32 -> vector<256x256xf32>
    %90 = arith.addf %86, %89 : vector<256x256xf32>
    %91 = vector.broadcast %51 : vector<1x256xf32> to vector<256x256xf32>
    %92 = arith.addf %90, %91 : vector<256x256xf32>
    %cst_25 = arith.constant 5.000000e-01 : f32
    %93 = vector.broadcast %cst_25 : f32 to vector<256x256xf32>
    %94 = arith.mulf %93, %92 : vector<256x256xf32>
    %cst_26 = arith.constant 0.707106769 : f32
    %95 = vector.broadcast %cst_26 : f32 to vector<256x256xf32>
    %96 = arith.mulf %92, %95 : vector<256x256xf32>
    %97 = math.erf %96 : vector<256x256xf32>
    %cst_27 = arith.constant 1.000000e+00 : f32
    %98 = vector.broadcast %cst_27 : f32 to vector<256x256xf32>
    %99 = arith.addf %98, %97 : vector<256x256xf32>
    %100 = arith.mulf %94, %99 : vector<256x256xf32>
    %c0_28 = arith.constant 0 : index
    %c0_29 = arith.constant 0 : index
    %101 = vector.load %arg6[%c0_28, %c0_29] : memref<256x128xf32, #tpu.memory_space<vmem>>, vector<256x128xf32>
    %cst_30 = arith.constant dense<0.000000e+00> : vector<256x128xf32>
    %102 = tpu.matmul %100, %101, %cst_30 {dimension_numbers = #tpu.dot_dimension_numbers<[1], [0], [0], [1], [0, 0, 1, 1], [], []>} : vector<256x256xf32>, vector<256x128xf32>, vector<256x128xf32> -> vector<256x128xf32>
    %103 = vector.broadcast %52 : vector<1x128xf32> to vector<256x128xf32>
    %104 = arith.addf %102, %103 : vector<256x128xf32>
    %105 = vector.shape_cast %104 : vector<256x128xf32> to vector<1x256x128xf32>
    %c0_31 = arith.constant 0 : index
    %c0_32 = arith.constant 0 : index
    %c0_33 = arith.constant 0 : index
    %106 = vector.load %arg8[%c0_31, %c0_32, %c0_33] : memref<1x256x128xf32, #tpu.memory_space<vmem>>, vector<1x256x128xf32>
    tpu.vector_store %arg8[%c0_31, %c0_32, %c0_33], %105 {strides = array<i32>} : memref<1x256x128xf32, #tpu.memory_space<vmem>>, vector<1x256x128xf32>,
    return
  }
  func.func @transform_0(%arg0: i32) -> (i32, i32, i32) {
    %c0_i32 = arith.constant 0 : i32
    %c0_i32_0 = arith.constant 0 : i32
    %c0_i32_1 = arith.constant 0 : i32
    return %arg0, %c0_i32, %c0_i32_0 : i32, i32, i32
  }
  func.func @transform_1(%arg0: i32) -> (i32, i32) {
    %c0_i32 = arith.constant 0 : i32
    %c0_i32_0 = arith.constant 0 : i32
    %c0_i32_1 = arith.constant 0 : i32
    return %c0_i32, %c0_i32_0 : i32, i32
  }
  func.func @transform_2(%arg0: i32) -> (i32, i32) {
    %c0_i32 = arith.constant 0 : i32
    %c0_i32_0 = arith.constant 0 : i32
    %c0_i32_1 = arith.constant 0 : i32
    return %c0_i32, %c0_i32_0 : i32, i32
  }
  func.func @transform_3(%arg0: i32) -> (i32, i32, i32) {
    %c0_i32 = arith.constant 0 : i32
    %c0_i32_0 = arith.constant 0 : i32
    %c0_i32_1 = arith.constant 0 : i32
    %c0_i32_2 = arith.constant 0 : i32
    return %c0_i32, %c0_i32_0, %c0_i32_1 : i32, i32, i32
  }
  func.func @transform_4(%arg0: i32) -> (i32, i32) {
    %c0_i32 = arith.constant 0 : i32
    %c0_i32_0 = arith.constant 0 : i32
    %c0_i32_1 = arith.constant 0 : i32
    return %c0_i32, %c0_i32_0 : i32, i32
  }
  func.func @transform_5(%arg0: i32) -> (i32, i32) {
    %c0_i32 = arith.constant 0 : i32
    %c0_i32_0 = arith.constant 0 : i32
    %c0_i32_1 = arith.constant 0 : i32
    return %c0_i32, %c0_i32_0 : i32, i32
  }
  func.func @transform_6(%arg0: i32) -> (i32, i32) {
    %c0_i32 = arith.constant 0 : i32
    %c0_i32_0 = arith.constant 0 : i32
    %c0_i32_1 = arith.constant 0 : i32
    return %c0_i32, %c0_i32_0 : i32, i32
  }
  func.func @transform_7(%arg0: i32) -> (i32, i32, i32) {
    %c0_i32 = arith.constant 0 : i32
    %c0_i32_0 = arith.constant 0 : i32
    %c0_i32_1 = arith.constant 0 : i32
    return %arg0, %c0_i32, %c0_i32_0 : i32, i32, i32
  }
}

</mosaic_0001>

<llo_original>
// kernel: tpu_custom_call.1
$region0: #{tpu_custom_call.1}
  #allocation0 [shape = 'u32[]', space=smem, size = 0x4, offset = 0x4, fixed_abs, tag = 'smem constant byte address 0x4 - core index']
  #allocation1 [shape = 'u32[144,128]{1,0:T(1,128)}', space=vmem, size = 0x12000, scoped, tag = 'internal scratch']
  %s0 = inlined_call_operand.hbm [shape: f32[2,256,128], index: 0, kind: input, shape index: {}]
  %s1 = inlined_call_operand.hbm [shape: f32[128,256], index: 1, kind: input, shape index: {}]
  %s2 = inlined_call_operand.vmem [shape: f32[1,256], index: 2, kind: input, shape index: {}]
  %s3 = inlined_call_operand.hbm [shape: f32[3,3,256], index: 3, kind: input, shape index: {}]
  %s4 = inlined_call_operand.vmem [shape: f32[1,256], index: 4, kind: input, shape index: {}]
  %s5 = inlined_call_operand.hbm [shape: f32[256,128], index: 5, kind: input, shape index: {}]
  %s6 = inlined_call_operand.vmem [shape: f32[1,128], index: 6, kind: input, shape index: {}]
  %s7 = inlined_call_operand.hbm [shape: f32[2,256,128], index: 7, kind: output, shape index: {}]
  %s8 = sld [smem:[#allocation0]]
  $region77: #{tpu_custom_call.1} parent=0
    _
  %s10 = ssub.s32 1, %s8
  %s11 = scalar_select 0, %s10, %s8
  $region1: #{tpu_custom_call.1} parent=0
    #allocation2 [shape = 'u8[262144]{0}', space=vmem, size = 0x40000, scoped, tag = 'input window, operand 0']
    #allocation3 [shape = 's32[2]{0}', space=sflag, size = 0x8, scoped, tag = 'scoped memory for tpu_custom_call.1']
    #allocation4 [shape = 's32[2]{0}', space=sflag, size = 0x8, scoped, tag = 'scoped memory for tpu_custom_call.1']
    #allocation5 [shape = 'u8[131072]{0}', space=vmem, size = 0x20000, scoped, tag = 'input window, operand 1, single buffered']
    #allocation6 [shape = 's32[1]{0}', space=sflag, size = 0x4, scoped, tag = 'scoped memory for tpu_custom_call.1']
    #allocation7 [shape = 'u8[12288]{0}', space=vmem, size = 0x3000, scoped, tag = 'input window, operand 3, single buffered']
    #allocation8 [shape = 'u8[131072]{0}', space=vmem, size = 0x20000, scoped, tag = 'input window, operand 5, single buffered']
    #allocation9 [shape = 's32[1]{0}', space=sflag, size = 0x4, scoped, tag = 'scoped memory for tpu_custom_call.1']
    #allocation10 [shape = 'u8[262144]{0}', space=vmem, size = 0x40000, scoped, tag = 'output window, operand 0']
    %12 = vsyncpa [#allocation3], 0
    %s13 = scalar_lea.sflag [#allocation3], 1
    %14 = vsyncpa %s13, 0
    %15 = vsyncpa [#allocation6], 0
    %16 = vsyncpa [#allocation9], 0
    %17 = vsyncpa [#allocation4], 0
    %s18 = scalar_lea.sflag [#allocation4], 1
    %19 = vsyncpa %s18, 0
    loop: start=0, step=1, limit=4
    $region2: #{tpu_custom_call.1} parent=1 // loop_pre_header
      _
    $region3: #{tpu_custom_call.1} parent=1 // loop_header
      %s21 = sphi 0, %s25
      %p22 = scmp.ge.s32.totalorder %s21, 4
      %s31 = sphi 0, %s33
      %s34 = sphi 0, %s31
      %s35 = sphi 0, %s34
      %s51 = sphi 0, %s35
      %s55 = sphi 0, %s55
      %s57 = sphi 0, %s55
      %s58 = sphi 0, %s57
      %s72 = sphi 0, %s58
      %s76 = sphi 0, %s76
      %s78 = sphi 0, %s76
      %s79 = sphi 0, %s78
      %s93 = sphi 0, %s79
      %s97 = sphi 0, %s97
      %s99 = sphi 0, %s97
      %s100 = sphi 0, %s99
      %s114 = sphi 0, %s100
      %s118 = sphi 0, %s118
      %s120 = sphi 0, %s118
      %s121 = sphi 0, %s120
      %s135 = sphi 0, %s121
      %s139 = sphi 0, %s139
      %s141 = sphi 0, %s139
      %s142 = sphi 0, %s141
      %s156 = sphi 0, %s142
      %s160 = sphi 0, %s160
      %s162 = sphi 0, %s160
      %s163 = sphi 0, %s162
      %s177 = sphi 0, %s163
      %s183 = sphi 0, %s185
      %s186 = sphi 0, %s183
      %s187 = sphi 0, %s186
      %s203 = sphi 0, %s187
    $region4: #{tpu_custom_call.1} parent=1 // loop_header_branch
      %24 = sbr.rel (%p22) target = $region8
    $region5: #{tpu_custom_call.1} parent=1 // loop_body
      %s26 = ssub.s32 %s21, 1
      %s27 = ssub.s32 %s21, 2
      %s28 = sadd.s32 %s21, 1
      %s29 = ssub.s32 %s21, %s28
      %p30 = scmp.eq.s32.totalorder %s29, 0
      %s32 = sadd.s32 %s31, 1
      %s33 = scalar_select %p30, %s31, %s32
      %p36 = pneg %p30
      %p37 = scmp.eq.s32.totalorder %s21, 1
      %p38 = por %p36, %p37
      %p39 = scmp.ne.s32.totalorder %s31, %s34
      %p40 = scmp.eq.s32.totalorder %s21, 0
      %p41 = por %p39, %p40
      %p42 = scmp.ne.s32.totalorder %s31, %s34
      %p43 = scmp.eq.s32.totalorder %s26, 1
      %p44 = por %p42, %p43
      %p45 = scmp.ne.s32.totalorder %s34, %s35
      %p46 = scmp.eq.s32.totalorder %s26, 0
      %p47 = por %p45, %p46
      %p48 = scmp.ne.s32.totalorder %s34, %s35
      %p49 = scmp.eq.s32.totalorder %s27, 1
      %p50 = por %p48, %p49
      %p52 = scmp.ne.s32.totalorder %s35, %s51
      %p53 = scmp.eq.s32.totalorder %s27, 0
      %p54 = por %p52, %p53
      %s56 = sadd.s32 %s55, 1
      %p59 = scmp.eq.s32.totalorder %s21, 1
      %p60 = scmp.ne.s32.totalorder %s55, %s57
      %p61 = scmp.eq.s32.totalorder %s21, 0
      %p62 = por %p60, %p61
      %p63 = scmp.ne.s32.totalorder %s55, %s57
      %p64 = scmp.eq.s32.totalorder %s26, 1
      %p65 = por %p63, %p64
      %p66 = scmp.ne.s32.totalorder %s57, %s58
      %p67 = scmp.eq.s32.totalorder %s26, 0
      %p68 = por %p66, %p67
      %p69 = scmp.ne.s32.totalorder %s57, %s58
      %p70 = scmp.eq.s32.totalorder %s27, 1
      %p71 = por %p69, %p70
      %p73 = scmp.ne.s32.totalorder %s58, %s72
      %p74 = scmp.eq.s32.totalorder %s27, 0
      %p75 = por %p73, %p74
      %s77 = sadd.s32 %s76, 1
      %p80 = scmp.eq.s32.totalorder %s21, 1
      %p81 = scmp.ne.s32.totalorder %s76, %s78
      %p82 = scmp.eq.s32.totalorder %s21, 0
      %p83 = por %p81, %p82
      %p84 = scmp.ne.s32.totalorder %s76, %s78
      %p85 = scmp.eq.s32.totalorder %s26, 1
      %p86 = por %p84, %p85
      %p87 = scmp.ne.s32.totalorder %s78, %s79
      %p88 = scmp.eq.s32.totalorder %s26, 0
      %p89 = por %p87, %p88
      %p90 = scmp.ne.s32.totalorder %s78, %s79
      %p91 = scmp.eq.s32.totalorder %s27, 1
      %p92 = por %p90, %p91
      %p94 = scmp.ne.s32.totalorder %s79, %s93
      %p95 = scmp.eq.s32.totalorder %s27, 0
      %p96 = por %p94, %p95
      %s98 = sadd.s32 %s97, 1
      %p101 = scmp.eq.s32.totalorder %s21, 1
      %p102 = scmp.ne.s32.totalorder %s97, %s99
      %p103 = scmp.eq.s32.totalorder %s21, 0
      %p104 = por %p102, %p103
      %p105 = scmp.ne.s32.totalorder %s97, %s99
      %p106 = scmp.eq.s32.totalorder %s26, 1
      %p107 = por %p105, %p106
      %p108 = scmp.ne.s32.totalorder %s99, %s100
      %p109 = scmp.eq.s32.totalorder %s26, 0
      %p110 = por %p108, %p109
      %p111 = scmp.ne.s32.totalorder %s99, %s100
      %p112 = scmp.eq.s32.totalorder %s27, 1
      %p113 = por %p111, %p112
      %p115 = scmp.ne.s32.totalorder %s100, %s114
      %p116 = scmp.eq.s32.totalorder %s27, 0
      %p117 = por %p115, %p116
      %s119 = sadd.s32 %s118, 1
      %p122 = scmp.eq.s32.totalorder %s21, 1
      %p123 = scmp.ne.s32.totalorder %s118, %s120
      %p124 = scmp.eq.s32.totalorder %s21, 0
      %p125 = por %p123, %p124
      %p126 = scmp.ne.s32.totalorder %s118, %s120
      %p127 = scmp.eq.s32.totalorder %s26, 1
      %p128 = por %p126, %p127
      %p129 = scmp.ne.s32.totalorder %s120, %s121
      %p130 = scmp.eq.s32.totalorder %s26, 0
      %p131 = por %p129, %p130
      %p132 = scmp.ne.s32.totalorder %s120, %s121
      %p133 = scmp.eq.s32.totalorder %s27, 1
      %p134 = por %p132, %p133
      %p136 = scmp.ne.s32.totalorder %s121, %s135
      %p137 = scmp.eq.s32.totalorder %s27, 0
      %p138 = por %p136, %p137
      %s140 = sadd.s32 %s139, 1
      %p143 = scmp.eq.s32.totalorder %s21, 1
      %p144 = scmp.ne.s32.totalorder %s139, %s141
      %p145 = scmp.eq.s32.totalorder %s21, 0
      %p146 = por %p144, %p145
      %p147 = scmp.ne.s32.totalorder %s139, %s141
      %p148 = scmp.eq.s32.totalorder %s26, 1
      %p149 = por %p147, %p148
      %p150 = scmp.ne.s32.totalorder %s141, %s142
      %p151 = scmp.eq.s32.totalorder %s26, 0
      %p152 = por %p150, %p151
      %p153 = scmp.ne.s32.totalorder %s141, %s142
      %p154 = scmp.eq.s32.totalorder %s27, 1
      %p155 = por %p153, %p154
      %p157 = scmp.ne.s32.totalorder %s142, %s156
      %p158 = scmp.eq.s32.totalorder %s27, 0
      %p159 = por %p157, %p158
      %s161 = sadd.s32 %s160, 1
      %p164 = scmp.eq.s32.totalorder %s21, 1
      %p165 = scmp.ne.s32.totalorder %s160, %s162
      %p166 = scmp.eq.s32.totalorder %s21, 0
      %p167 = por %p165, %p166
      %p168 = scmp.ne.s32.totalorder %s160, %s162
      %p169 = scmp.eq.s32.totalorder %s26, 1
      %p170 = por %p168, %p169
      %p171 = scmp.ne.s32.totalorder %s162, %s163
      %p172 = scmp.eq.s32.totalorder %s26, 0
      %p173 = por %p171, %p172
      %p174 = scmp.ne.s32.totalorder %s162, %s163
      %p175 = scmp.eq.s32.totalorder %s27, 1
      %p176 = por %p174, %p175
      %p178 = scmp.ne.s32.totalorder %s163, %s177
      %p179 = scmp.eq.s32.totalorder %s27, 0
      %p180 = por %p178, %p179
      %s181 = ssub.s32 %s21, %s28
      %p182 = scmp.eq.s32.totalorder %s181, 0
      %s184 = sadd.s32 %s183, 1
      %s185 = scalar_select %p182, %s183, %s184
      %p188 = pneg %p182
      %p189 = scmp.eq.s32.totalorder %s21, 1
      %p190 = por %p188, %p189
      %p191 = scmp.ne.s32.totalorder %s183, %s186
      %p192 = scmp.eq.s32.totalorder %s21, 0
      %p193 = por %p191, %p192
      %p194 = scmp.ne.s32.totalorder %s183, %s186
      %p195 = scmp.eq.s32.totalorder %s26, 1
      %p196 = por %p194, %p195
      %p197 = scmp.ne.s32.totalorder %s186, %s187
      %p198 = scmp.eq.s32.totalorder %s26, 0
      %p199 = por %p197, %p198
      %p200 = scmp.ne.s32.totalorder %s186, %s187
      %p201 = scmp.eq.s32.totalorder %s27, 1
      %p202 = por %p200, %p201
      %p204 = scmp.ne.s32.totalorder %s187, %s203
      %p205 = scmp.eq.s32.totalorder %s27, 0
      %p206 = por %p204, %p205
      %p207 = scmp.le.s32.totalorder 1, %s21
      %p208 = scmp.lt.s32.totalorder %s21, 3
      %p209 = pnand %p207, %p208
      %p210 = pneg %p209
      // Predicated region
      $region9: #{tpu_custom_call.1} parent=5 // pred_check
        _
      $region10: #{tpu_custom_call.1} parent=5 // pred_check_branch
        %212 = sbr.rel (%p209) target = $region12
      $region11: #{tpu_custom_call.1} parent=5 // pred_region
        %s213 = ssub.s32 %s21, 1
        // Predicated region
        $region13: #{tpu_custom_call.1} parent=11 // pred_check
          %p214 = pneg %p68
        $region14: #{tpu_custom_call.1} parent=11 // pred_check_branch
          %216 = sbr.rel (%p214) target = $region16
        $region15: #{tpu_custom_call.1} parent=11 // pred_region
          %s218 = ssub.s32 4096, 4096
          %219 = vsyncadd [#allocation6], %s218
          %s220 = sshll.u32 [#allocation5], 4
          %s221 = int_to_ptr.vmem [resolvable:$true] %s220
          %226 = dma.hbm_to_vmem [thread:$0]  %s1, 4096, %s221, [#allocation6], 256, 256, 16
        $region16: #{tpu_custom_call.1} parent=11 // pred_fallthru
          _
        // Predicated region
        $region17: #{tpu_custom_call.1} parent=11 // pred_check
          %p227 = pneg %p89
        $region18: #{tpu_custom_call.1} parent=11 // pred_check_branch
          %229 = sbr.rel (%p227) target = $region20
        $region19: #{tpu_custom_call.1} parent=11 // pred_region
          _
        $region20: #{tpu_custom_call.1} parent=11 // pred_fallthru
          _
        // Predicated region
        $region21: #{tpu_custom_call.1} parent=11 // pred_check
          %p230 = pneg %p110
        $region22: #{tpu_custom_call.1} parent=11 // pred_check_branch
          %232 = sbr.rel (%p230) target = $region24
        $region23: #{tpu_custom_call.1} parent=11 // pred_region
          %s234 = ssub.s32 384, 384
          %235 = vsyncadd [#allocation6], %s234
          %s236 = sshll.u32 [#allocation7], 4
          %s237 = int_to_ptr.vmem [resolvable:$true] %s236
          %242 = dma.hbm_to_vmem [thread:$0]  %s3, 384, %s237, [#allocation6], 128, 128, 8
        $region24: #{tpu_custom_call.1} parent=11 // pred_fallthru
          _
        // Predicated region
        $region25: #{tpu_custom_call.1} parent=11 // pred_check
          %p243 = pneg %p131
        $region26: #{tpu_custom_call.1} parent=11 // pred_check_branch
          %245 = sbr.rel (%p243) target = $region28
        $region27: #{tpu_custom_call.1} parent=11 // pred_region
          _
        $region28: #{tpu_custom_call.1} parent=11 // pred_fallthru
          _
        // Predicated region
        $region29: #{tpu_custom_call.1} parent=11 // pred_check
          %p246 = pneg %p152
        $region30: #{tpu_custom_call.1} parent=11 // pred_check_branch
          %248 = sbr.rel (%p246) target = $region32
        $region31: #{tpu_custom_call.1} parent=11 // pred_region
          %s250 = ssub.s32 4096, 4096
          %251 = vsyncadd [#allocation9], %s250
          %s252 = sshll.u32 [#allocation8], 4
          %s253 = int_to_ptr.vmem [resolvable:$true] %s252
          %258 = dma.hbm_to_vmem [thread:$0]  %s5, 4096, %s253, [#allocation9], 128, 128, 8
        $region32: #{tpu_custom_call.1} parent=11 // pred_fallthru
          _
        // Predicated region
        $region33: #{tpu_custom_call.1} parent=11 // pred_check
          %p259 = pneg %p173
        $region34: #{tpu_custom_call.1} parent=11 // pred_check_branch
          %261 = sbr.rel (%p259) target = $region36
        $region35: #{tpu_custom_call.1} parent=11 // pred_region
          _
        $region36: #{tpu_custom_call.1} parent=11 // pred_fallthru
          _
      $region12: #{tpu_custom_call.1} parent=5 // pred_fallthru
        _
      %p262 = scmp.lt.s32.totalorder %s21, 2
      // Predicated region
      $region37: #{tpu_custom_call.1} parent=5 // pred_check
        %p263 = pneg %p262
      $region38: #{tpu_custom_call.1} parent=5 // pred_check_branch
        %265 = sbr.rel (%p263) target = $region40
      $region39: #{tpu_custom_call.1} parent=5 // pred_region
        // Predicated region
        $region41: #{tpu_custom_call.1} parent=39 // pred_check
          %p266 = pneg %p41
        $region42: #{tpu_custom_call.1} parent=39 // pred_check_branch
          %268 = sbr.rel (%p266) target = $region44
        $region43: #{tpu_custom_call.1} parent=39 // pred_region
          %s269 = sand.u32 %s31, 1
          %s270 = scalar_lea.sflag [#allocation3], %s269
          %s271 = sand.u32 %s31, 1
          %s272 = smul.addr %s271, 256
          %s273 = scalar_lea.vmem [#allocation2], %s272
          %s275 = ssub.s32 4096, 4096
          %276 = vsyncadd %s270, %s275
          %s277 = smul.addr %s21, 32
          %s278 = smul.addr %s277, 128
          %s279 = scalar_lea.hbm %s0, %s278
          %s280 = sshll.u32 %s273, 4
          %s281 = int_to_ptr.vmem [resolvable:$true] %s280
          %286 = dma.hbm_to_vmem [thread:$0]  %s279, 4096, %s281, %s270, 128, 128, 8
        $region44: #{tpu_custom_call.1} parent=39 // pred_fallthru
          _
      $region40: #{tpu_custom_call.1} parent=5 // pred_fallthru
        _
      %p287 = scmp.le.s32.totalorder 1, %s21
      %p288 = scmp.lt.s32.totalorder %s21, 3
      %p289 = pnand %p287, %p288
      %p290 = pneg %p289
      // Predicated region
      $region45: #{tpu_custom_call.1} parent=5 // pred_check
        _
      $region46: #{tpu_custom_call.1} parent=5 // pred_check_branch
        %292 = sbr.rel (%p289) target = $region48
      $region47: #{tpu_custom_call.1} parent=5 // pred_region
        %s293 = ssub.s32 %s21, 1
        %s294 = sand.u32 %s34, 1
        %s295 = scalar_lea.sflag [#allocation3], %s294
        %s296 = sand.u32 %s34, 1
        %s297 = smul.addr %s296, 256
        %s298 = scalar_lea.vmem [#allocation2], %s297
        // Predicated region
        $region49: #{tpu_custom_call.1} parent=47 // pred_check
          %p299 = pneg %p47
        $region50: #{tpu_custom_call.1} parent=47 // pred_check_branch
          %301 = sbr.rel (%p299) target = $region52
        $region51: #{tpu_custom_call.1} parent=47 // pred_region
          %302 = dma.done %s295, 4096
        $region52: #{tpu_custom_call.1} parent=47 // pred_fallthru
          _
        // Predicated region
        $region53: #{tpu_custom_call.1} parent=47 // pred_check
          %p303 = pneg %p68
        $region54: #{tpu_custom_call.1} parent=47 // pred_check_branch
          %305 = sbr.rel (%p303) target = $region56
        $region55: #{tpu_custom_call.1} parent=47 // pred_region
          %306 = dma.done [#allocation6], 4096
        $region56: #{tpu_custom_call.1} parent=47 // pred_fallthru
          _
        // Predicated region
        $region57: #{tpu_custom_call.1} parent=47 // pred_check
          %p307 = pneg %p110
        $region58: #{tpu_custom_call.1} parent=47 // pred_check_branch
          %309 = sbr.rel (%p307) target = $region60
        $region59: #{tpu_custom_call.1} parent=47 // pred_region
          %310 = dma.done [#allocation6], 384
        $region60: #{tpu_custom_call.1} parent=47 // pred_fallthru
          _
        // Predicated region
        $region61: #{tpu_custom_call.1} parent=47 // pred_check
          %p311 = pneg %p152
        $region62: #{tpu_custom_call.1} parent=47 // pred_check_branch
          %313 = sbr.rel (%p311) target = $region64
        $region63: #{tpu_custom_call.1} parent=47 // pred_region
          %314 = dma.done [#allocation9], 4096
        $region64: #{tpu_custom_call.1} parent=47 // pred_fallthru
          _
        %s315 = sand.u32 %s34, 1
        %s316 = scalar_lea.sflag [#allocation3], %s315
        %s317 = sand.u32 %s34, 1
        %s318 = smul.addr %s317, 256
        %s319 = scalar_lea.vmem [#allocation2], %s318
        %p320 = pneg %p47
        %p321 = pneg %p44
        %p322 = pneg %p68
        %p323 = pneg %p65
        %p324 = pneg %p89
        %p325 = pneg %p86
        %p326 = pneg %p110
        %p327 = pneg %p107
        %p328 = pneg %p131
        %p329 = pneg %p128
        %p330 = pneg %p152
        %p331 = pneg %p149
        %p332 = pneg %p173
        %p333 = pneg %p170
        %p334 = pneg %p199
        %p335 = pneg %p196
        %s336 = sand.u32 %s186, 1
        %s337 = scalar_lea.sflag [#allocation4], %s336
        %s338 = sand.u32 %s186, 1
        %s339 = smul.addr %s338, 256
        %s340 = scalar_lea.vmem [#allocation10], %s339
        %v341 = vld [vmem:[%s298] sm:$0xff]
        %v342 = vld [vmem:[%s298 + $0x8] sm:$0xff]
        %v343 = vld [vmem:[%s298 + $0x10] sm:$0xff]
        %v344 = vld [vmem:[%s298 + $0x18] sm:$0xff]
        %v345 = vld [vmem:[%s298 + $0x20] sm:$0xff]
        %v346 = vld [vmem:[%s298 + $0x28] sm:$0xff]
        %v347 = vld [vmem:[%s298 + $0x30] sm:$0xff]
        %v348 = vld [vmem:[%s298 + $0x38] sm:$0xff]
        %v349 = vld [vmem:[%s298 + $0x40] sm:$0xff]
        %v350 = vld [vmem:[%s298 + $0x48] sm:$0xff]
        %v351 = vld [vmem:[%s298 + $0x50] sm:$0xff]
        %v352 = vld [vmem:[%s298 + $0x58] sm:$0xff]
        %v353 = vld [vmem:[%s298 + $0x60] sm:$0xff]
        %v354 = vld [vmem:[%s298 + $0x68] sm:$0xff]
        %v355 = vld [vmem:[%s298 + $0x70] sm:$0xff]
        %v356 = vld [vmem:[%s298 + $0x78] sm:$0xff]
        %v357 = vld [vmem:[%s298 + $0x80] sm:$0xff]
        %v358 = vld [vmem:[%s298 + $0x88] sm:$0xff]
        %v359 = vld [vmem:[%s298 + $0x90] sm:$0xff]
        %v360 = vld [vmem:[%s298 + $0x98] sm:$0xff]
        %v361 = vld [vmem:[%s298 + $0xa0] sm:$0xff]
        %v362 = vld [vmem:[%s298 + $0xa8] sm:$0xff]
        %v363 = vld [vmem:[%s298 + $0xb0] sm:$0xff]
        %v364 = vld [vmem:[%s298 + $0xb8] sm:$0xff]
        %v365 = vld [vmem:[%s298 + $0xc0] sm:$0xff]
        %v366 = vld [vmem:[%s298 + $0xc8] sm:$0xff]
        %v367 = vld [vmem:[%s298 + $0xd0] sm:$0xff]
        %v368 = vld [vmem:[%s298 + $0xd8] sm:$0xff]
        %v369 = vld [vmem:[%s298 + $0xe0] sm:$0xff]
        %v370 = vld [vmem:[%s298 + $0xe8] sm:$0xff]
        %v371 = vld [vmem:[%s298 + $0xf0] sm:$0xff]
        %v372 = vld [vmem:[%s298 + $0xf8] sm:$0xff]
        %v373 = vld [vmem:[#allocation5] sm:$0xff]
        %v374 = vld [vmem:[#allocation5 + $0x8] sm:$0xff]
        %v375 = vld [vmem:[#allocation5 + $0x10] sm:$0xff]
        %v376 = vld [vmem:[#allocation5 + $0x18] sm:$0xff]
        %v377 = vld [vmem:[#allocation5 + $0x20] sm:$0xff]
        %v378 = vld [vmem:[#allocation5 + $0x28] sm:$0xff]
        %v379 = vld [vmem:[#allocation5 + $0x30] sm:$0xff]
        %v380 = vld [vmem:[#allocation5 + $0x38] sm:$0xff]
        %v381 = vld [vmem:[#allocation5 + $0x40] sm:$0xff]
        %v382 = vld [vmem:[#allocation5 + $0x48] sm:$0xff]
        %v383 = vld [vmem:[#allocation5 + $0x50] sm:$0xff]
        %v384 = vld [vmem:[#allocation5 + $0x58] sm:$0xff]
        %v385 = vld [vmem:[#allocation5 + $0x60] sm:$0xff]
        %v386 = vld [vmem:[#allocation5 + $0x68] sm:$0xff]
        %v387 = vld [vmem:[#allocation5 + $0x70] sm:$0xff]
        %v388 = vld [vmem:[#allocation5 + $0x78] sm:$0xff]
        %v389 = vld [vmem:[#allocation5 + $0x80] sm:$0xff]
        %v390 = vld [vmem:[#allocation5 + $0x88] sm:$0xff]
        %v391 = vld [vmem:[#allocation5 + $0x90] sm:$0xff]
        %v392 = vld [vmem:[#allocation5 + $0x98] sm:$0xff]
        %v393 = vld [vmem:[#allocation5 + $0xa0] sm:$0xff]
        %v394 = vld [vmem:[#allocation5 + $0xa8] sm:$0xff]
        %v395 = vld [vmem:[#allocation5 + $0xb0] sm:$0xff]
        %v396 = vld [vmem:[#allocation5 + $0xb8] sm:$0xff]
        %v397 = vld [vmem:[#allocation5 + $0xc0] sm:$0xff]
        %v398 = vld [vmem:[#allocation5 + $0xc8] sm:$0xff]
        %v399 = vld [vmem:[#allocation5 + $0xd0] sm:$0xff]
        %v400 = vld [vmem:[#allocation5 + $0xd8] sm:$0xff]
        %v401 = vld [vmem:[#allocation5 + $0xe0] sm:$0xff]
        %v402 = vld [vmem:[#allocation5 + $0xe8] sm:$0xff]
        %v403 = vld [vmem:[#allocation5 + $0xf0] sm:$0xff]
        %v404 = vld [vmem:[#allocation5 + $0xf8] sm:$0xff]
        %v405 = vld [vmem:[%s2] sm:$0x3]
        %v407 = vlaneseq
        %v408 = vshrl.u32 %v407, 7
        %v409 = vsub.s32 0, %v408
        %v410 = vrot.slane %v405, %v409
        %v411 = vlaneseq
        %v412 = vshrl.u32 %v411, 7
        %v413 = vsub.s32 1, %v412
        %v414 = vrot.slane %v405, %v413
        %417 = vmatprep.subr.mxu0 %v374
        %418 = vmatpush1.msra.mxu0 %v373
        %419 = vmatprep.subr.mxu0 %v376
        %420 = vmatpush1.msra.mxu0 %v375
        %421 = vmatprep.subr.mxu0 %v378
        %422 = vmatpush1.msra.mxu0 %v377
        %423 = vmatprep.subr.mxu0 %v380
        %424 = vmatpush1.msra.mxu0 %v379
        %425 = vmatprep.subr.mxu0 %v382
        %426 = vmatpush1.msra.mxu0 %v381
        %427 = vmatprep.subr.mxu0 %v384
        %428 = vmatpush1.msra.mxu0 %v383
        %429 = vmatprep.subr.mxu0 %v386
        %430 = vmatpush1.msra.mxu0 %v385
        %431 = vmatprep.subr.mxu0 %v388
        %432 = vmatpush1.msra.mxu0 %v387
        %433 = vmatprep.subr.mxu0 %v390
        %434 = vmatpush1.msra.mxu0 %v389
        %435 = vmatprep.subr.mxu0 %v392
        %436 = vmatpush1.msra.mxu0 %v391
        %437 = vmatprep.subr.mxu0 %v394
        %438 = vmatpush1.msra.mxu0 %v393
        %439 = vmatprep.subr.mxu0 %v396
        %440 = vmatpush1.msra.mxu0 %v395
        %441 = vmatprep.subr.mxu0 %v398
        %442 = vmatpush1.msra.mxu0 %v397
        %443 = vmatprep.subr.mxu0 %v400
        %444 = vmatpush1.msra.mxu0 %v399
        %445 = vmatprep.subr.mxu0 %v402
        %446 = vmatpush1.msra.mxu0 %v401
        %447 = vmatprep.subr.mxu0 %v404
        %448 = vmatpush1.msra.mxu0 %v403
        %449 = vmatprep.subr.mxu0 0.0
        %450 = vmatpush1.msra.mxu0 0.0
        %451 = vmatprep.subr.mxu0 0.0
        %452 = vmatpush1.msra.mxu0 0.0
        %453 = vmatprep.subr.mxu0 0.0
        %454 = vmatpush1.msra.mxu0 0.0
        %455 = vmatprep.subr.mxu0 0.0
        %456 = vmatpush1.msra.mxu0 0.0
        %457 = vmatprep.subr.mxu0 0.0
        %458 = vmatpush1.msra.mxu0 0.0
        %459 = vmatprep.subr.mxu0 0.0
        %460 = vmatpush1.msra.mxu0 0.0
        %461 = vmatprep.subr.mxu0 0.0
        %462 = vmatpush1.msra.mxu0 0.0
        %463 = vmatprep.subr.mxu0 0.0
        %464 = vmatpush1.msra.mxu0 0.0
        %465 = vmatprep.subr.mxu0 0.0
        %466 = vmatpush1.msra.mxu0 0.0
        %467 = vmatprep.subr.mxu0 0.0
        %468 = vmatpush1.msra.mxu0 0.0
        %469 = vmatprep.subr.mxu0 0.0
        %470 = vmatpush1.msra.mxu0 0.0
        %471 = vmatprep.subr.mxu0 0.0
        %472 = vmatpush1.msra.mxu0 0.0
        %473 = vmatprep.subr.mxu0 0.0
        %474 = vmatpush1.msra.mxu0 0.0
        %475 = vmatprep.subr.mxu0 0.0
        %476 = vmatpush1.msra.mxu0 0.0
        %477 = vmatprep.subr.mxu0 0.0
        %478 = vmatpush1.msra.mxu0 0.0
        %479 = vmatprep.subr.mxu0 0.0
        %480 = vmatpush1.msra.mxu0 0.0
        %481 = vmatprep.mubr.f32.mxu0 0.0
        %482 = vmatmul.mubr.f32.gmra.mrb[0].mxu0 %v341
        %v483 = vpop.f32.mrb[0].mxu0
        %v484 = vadd.f32 %v410, %v483
        %v485 = vpop.f32.mrb[0].mxu0
        %v486 = vadd.f32 %v414, %v485
        %487 = vmatprep.mubr.f32.mxu0 0.0
        %488 = vmatmul.mubr.f32.gmra.mrb[0].mxu0 %v342
        %v489 = vpop.f32.mrb[0].mxu0
        %v490 = vadd.f32 %v410, %v489
        %v491 = vpop.f32.mrb[0].mxu0
        %v492 = vadd.f32 %v414, %v491
        %493 = vmatprep.mubr.f32.mxu0 0.0
        %494 = vmatmul.mubr.f32.gmra.mrb[0].mxu0 %v343
        %v495 = vpop.f32.mrb[0].mxu0
        %v496 = vadd.f32 %v410, %v495
        %v497 = vpop.f32.mrb[0].mxu0
        %v498 = vadd.f32 %v414, %v497
        %499 = vmatprep.mubr.f32.mxu0 0.0
        %500 = vmatmul.mubr.f32.gmra.mrb[0].mxu0 %v344
        %v501 = vpop.f32.mrb[0].mxu0
        %v502 = vadd.f32 %v410, %v501
        %v503 = vpop.f32.mrb[0].mxu0
        %v504 = vadd.f32 %v414, %v503
        %505 = vmatprep.mubr.f32.mxu0 0.0
        %506 = vmatmul.mubr.f32.gmra.mrb[0].mxu0 %v345
        %v507 = vpop.f32.mrb[0].mxu0
        %v508 = vadd.f32 %v410, %v507
        %v509 = vpop.f32.mrb[0].mxu0
        %v510 = vadd.f32 %v414, %v509
        %511 = vmatprep.mubr.f32.mxu0 0.0
        %512 = vmatmul.mubr.f32.gmra.mrb[0].mxu0 %v346
        %v513 = vpop.f32.mrb[0].mxu0
        %v514 = vadd.f32 %v410, %v513
        %v515 = vpop.f32.mrb[0].mxu0
        %v516 = vadd.f32 %v414, %v515
        %517 = vmatprep.mubr.f32.mxu0 0.0
        %518 = vmatmul.mubr.f32.gmra.mrb[0].mxu0 %v347
        %v519 = vpop.f32.mrb[0].mxu0
        %v520 = vadd.f32 %v410, %v519
        %v521 = vpop.f32.mrb[0].mxu0
        %v522 = vadd.f32 %v414, %v521
        %523 = vmatprep.mubr.f32.mxu0 0.0
        %524 = vmatmul.mubr.f32.gmra.mrb[0].mxu0 %v348
        %v525 = vpop.f32.mrb[0].mxu0
        %v526 = vadd.f32 %v410, %v525
        %v527 = vpop.f32.mrb[0].mxu0
        %v528 = vadd.f32 %v414, %v527
        %529 = vmatprep.mubr.f32.mxu0 0.0
        %530 = vmatmul.mubr.f32.gmra.mrb[0].mxu0 %v349
        %v531 = vpop.f32.mrb[0].mxu0
        %v532 = vadd.f32 %v410, %v531
        %v533 = vpop.f32.mrb[0].mxu0
        %v534 = vadd.f32 %v414, %v533
        %535 = vmatprep.mubr.f32.mxu0 0.0
        %536 = vmatmul.mubr.f32.gmra.mrb[0].mxu0 %v350
        %v537 = vpop.f32.mrb[0].mxu0
        %v538 = vadd.f32 %v410, %v537
        %v539 = vpop.f32.mrb[0].mxu0
        %v540 = vadd.f32 %v414, %v539
        %541 = vmatprep.mubr.f32.mxu0 0.0
        %542 = vmatmul.mubr.f32.gmra.mrb[0].mxu0 %v351
        %v543 = vpop.f32.mrb[0].mxu0
        %v544 = vadd.f32 %v410, %v543
        %v545 = vpop.f32.mrb[0].mxu0
        %v546 = vadd.f32 %v414, %v545
        %547 = vmatprep.mubr.f32.mxu0 0.0
        %548 = vmatmul.mubr.f32.gmra.mrb[0].mxu0 %v352
        %v549 = vpop.f32.mrb[0].mxu0
        %v550 = vadd.f32 %v410, %v549
        %v551 = vpop.f32.mrb[0].mxu0
        %v552 = vadd.f32 %v414, %v551
        %553 = vmatprep.mubr.f32.mxu0 0.0
        %554 = vmatmul.mubr.f32.gmra.mrb[0].mxu0 %v353
        %v555 = vpop.f32.mrb[0].mxu0
        %v556 = vadd.f32 %v410, %v555
        %v557 = vpop.f32.mrb[0].mxu0
        %v558 = vadd.f32 %v414, %v557
        %559 = vmatprep.mubr.f32.mxu0 0.0
        %560 = vmatmul.mubr.f32.gmra.mrb[0].mxu0 %v354
        %v561 = vpop.f32.mrb[0].mxu0
        %v562 = vadd.f32 %v410, %v561
        %v563 = vpop.f32.mrb[0].mxu0
        %v564 = vadd.f32 %v414, %v563
        %565 = vmatprep.mubr.f32.mxu0 0.0
        %566 = vmatmul.mubr.f32.gmra.mrb[0].mxu0 %v355
        %v567 = vpop.f32.mrb[0].mxu0
        %v568 = vadd.f32 %v410, %v567
        %v569 = vpop.f32.mrb[0].mxu0
        %v570 = vadd.f32 %v414, %v569
        %571 = vmatprep.mubr.f32.mxu0 0.0
        %572 = vmatmul.mubr.f32.gmra.mrb[0].mxu0 %v356
        %v573 = vpop.f32.mrb[0].mxu0
        %v574 = vadd.f32 %v410, %v573
        %v575 = vpop.f32.mrb[0].mxu0
        %v576 = vadd.f32 %v414, %v575
        %577 = vmatprep.mubr.f32.mxu0 0.0
        %578 = vmatmul.mubr.f32.gmra.mrb[0].mxu0 %v357
        %v579 = vpop.f32.mrb[0].mxu0
        %v580 = vadd.f32 %v410, %v579
        %v581 = vpop.f32.mrb[0].mxu0
        %v582 = vadd.f32 %v414, %v581
        %583 = vmatprep.mubr.f32.mxu0 0.0
        %584 = vmatmul.mubr.f32.gmra.mrb[0].mxu0 %v358
        %v585 = vpop.f32.mrb[0].mxu0
        %v586 = vadd.f32 %v410, %v585
        %v587 = vpop.f32.mrb[0].mxu0
        %v588 = vadd.f32 %v414, %v587
        %589 = vmatprep.mubr.f32.mxu0 0.0
        %590 = vmatmul.mubr.f32.gmra.mrb[0].mxu0 %v359
        %v591 = vpop.f32.mrb[0].mxu0
        %v592 = vadd.f32 %v410, %v591
        %v593 = vpop.f32.mrb[0].mxu0
        %v594 = vadd.f32 %v414, %v593
        %595 = vmatprep.mubr.f32.mxu0 0.0
        %596 = vmatmul.mubr.f32.gmra.mrb[0].mxu0 %v360
        %v597 = vpop.f32.mrb[0].mxu0
        %v598 = vadd.f32 %v410, %v597
        %v599 = vpop.f32.mrb[0].mxu0
        %v600 = vadd.f32 %v414, %v599
        %601 = vmatprep.mubr.f32.mxu0 0.0
        %602 = vmatmul.mubr.f32.gmra.mrb[0].mxu0 %v361
        %v603 = vpop.f32.mrb[0].mxu0
        %v604 = vadd.f32 %v410, %v603
        %v605 = vpop.f32.mrb[0].mxu0
        %v606 = vadd.f32 %v414, %v605
        %607 = vmatprep.mubr.f32.mxu0 0.0
        %608 = vmatmul.mubr.f32.gmra.mrb[0].mxu0 %v362
        %v609 = vpop.f32.mrb[0].mxu0
        %v610 = vadd.f32 %v410, %v609
        %v611 = vpop.f32.mrb[0].mxu0
        %v612 = vadd.f32 %v414, %v611
        %613 = vmatprep.mubr.f32.mxu0 0.0
        %614 = vmatmul.mubr.f32.gmra.mrb[0].mxu0 %v363
        %v615 = vpop.f32.mrb[0].mxu0
        %v616 = vadd.f32 %v410, %v615
        %v617 = vpop.f32.mrb[0].mxu0
        %v618 = vadd.f32 %v414, %v617
        %619 = vmatprep.mubr.f32.mxu0 0.0
        %620 = vmatmul.mubr.f32.gmra.mrb[0].mxu0 %v364
        %v621 = vpop.f32.mrb[0].mxu0
        %v622 = vadd.f32 %v410, %v621
        %v623 = vpop.f32.mrb[0].mxu0
        %v624 = vadd.f32 %v414, %v623
        %625 = vmatprep.mubr.f32.mxu0 0.0
        %626 = vmatmul.mubr.f32.gmra.mrb[0].mxu0 %v365
        %v627 = vpop.f32.mrb[0].mxu0
        %v628 = vadd.f32 %v410, %v627
        %v629 = vpop.f32.mrb[0].mxu0
        %v630 = vadd.f32 %v414, %v629
        %631 = vmatprep.mubr.f32.mxu0 0.0
        %632 = vmatmul.mubr.f32.gmra.mrb[0].mxu0 %v366
        %v633 = vpop.f32.mrb[0].mxu0
        %v634 = vadd.f32 %v410, %v633
        %v635 = vpop.f32.mrb[0].mxu0
        %v636 = vadd.f32 %v414, %v635
        %637 = vmatprep.mubr.f32.mxu0 0.0
        %638 = vmatmul.mubr.f32.gmra.mrb[0].mxu0 %v367
        %v639 = vpop.f32.mrb[0].mxu0
        %v640 = vadd.f32 %v410, %v639
        %v641 = vpop.f32.mrb[0].mxu0
        %v642 = vadd.f32 %v414, %v641
        %643 = vmatprep.mubr.f32.mxu0 0.0
        %644 = vmatmul.mubr.f32.gmra.mrb[0].mxu0 %v368
        %v645 = vpop.f32.mrb[0].mxu0
        %v646 = vadd.f32 %v410, %v645
        %v647 = vpop.f32.mrb[0].mxu0
        %v648 = vadd.f32 %v414, %v647
        %649 = vmatprep.mubr.f32.mxu0 0.0
        %650 = vmatmul.mubr.f32.gmra.mrb[0].mxu0 %v369
        %v651 = vpop.f32.mrb[0].mxu0
        %v652 = vadd.f32 %v410, %v651
        %v653 = vpop.f32.mrb[0].mxu0
        %v654 = vadd.f32 %v414, %v653
        %655 = vmatprep.mubr.f32.mxu0 0.0
        %656 = vmatmul.mubr.f32.gmra.mrb[0].mxu0 %v370
        %v657 = vpop.f32.mrb[0].mxu0
        %v658 = vadd.f32 %v410, %v657
        %v659 = vpop.f32.mrb[0].mxu0
        %v660 = vadd.f32 %v414, %v659
        %661 = vmatprep.mubr.f32.mxu0 0.0
        %662 = vmatmul.mubr.f32.gmra.mrb[0].mxu0 %v371
        %v663 = vpop.f32.mrb[0].mxu0
        %v664 = vadd.f32 %v410, %v663
        %v665 = vpop.f32.mrb[0].mxu0
        %v666 = vadd.f32 %v414, %v665
        %667 = vmatprep.mubr.f32.mxu0 0.0
        %668 = vmatmul.mubr.f32.gmra.mrb[0].mxu0 %v372
        %v669 = vpop.f32.mrb[0].mxu0
        %v670 = vadd.f32 %v410, %v669
        %v671 = vpop.f32.mrb[0].mxu0
        %v672 = vadd.f32 %v414, %v671
        %673 = vdwg.mxu0
        %v674 = vlaneseq
        %v675 = vshrl.u32 %v674, 7
        %v676 = vadd.s32 %v675, 8
        %v677 = vadd.s32 %v675, 16
        %v678 = vadd.s32 %v675, 24
        %v679 = vadd.s32 %v675, 32
        %v680 = vadd.s32 %v675, 40
        %v681 = vadd.s32 %v675, 48
        %v682 = vadd.s32 %v675, 56
        %v683 = vadd.s32 %v675, 64
        %v684 = vadd.s32 %v675, 72
        %v685 = vadd.s32 %v675, 80
        %v686 = vadd.s32 %v675, 88
        %v687 = vadd.s32 %v675, 96
        %v688 = vadd.s32 %v675, 104
        %v689 = vadd.s32 %v675, 112
        %v690 = vadd.s32 %v675, 120
        %v691 = vadd.s32 %v675, 128
        %v692 = vadd.s32 %v675, 136
        %v693 = vadd.s32 %v675, 144
        %v694 = vadd.s32 %v675, 152
        %v695 = vadd.s32 %v675, 160
        %v696 = vadd.s32 %v675, 168
        %v697 = vadd.s32 %v675, 176
        %v698 = vadd.s32 %v675, 184
        %v699 = vadd.s32 %v675, 192
        %v700 = vadd.s32 %v675, 200
        %v701 = vadd.s32 %v675, 208
        %v702 = vadd.s32 %v675, 216
        %v703 = vadd.s32 %v675, 224
        %v704 = vadd.s32 %v675, 232
        %v705 = vadd.s32 %v675, 240
        %v706 = vadd.s32 %v675, 248
        %vm707 = vcmp.lt.s32.totalorder %v675, 0
        %v708 = vsub.s32 0, %v675
        %v709 = vsel %vm707, %v708, %v675
        %v710 = vshrl.u32 %v709, 4
        %v711 = vand.u32 %v709, 15
        %v712 = vsub.s32 0, %v711
        %v713 = vsel %vm707, %v712, %v711
        %vm714 = vcmp.lt.s32.totalorder %v676, 0
        %v715 = vsub.s32 0, %v676
        %v716 = vsel %vm714, %v715, %v676
        %v717 = vshrl.u32 %v716, 4
        %v718 = vand.u32 %v716, 15
        %v719 = vsub.s32 0, %v718
        %v720 = vsel %vm714, %v719, %v718
        %vm721 = vcmp.lt.s32.totalorder %v677, 0
        %v722 = vsub.s32 0, %v677
        %v723 = vsel %vm721, %v722, %v677
        %v724 = vshrl.u32 %v723, 4
        %v725 = vand.u32 %v723, 15
        %v726 = vsub.s32 0, %v725
        %v727 = vsel %vm721, %v726, %v725
        %vm728 = vcmp.lt.s32.totalorder %v678, 0
        %v729 = vsub.s32 0, %v678
        %v730 = vsel %vm728, %v729, %v678
        %v731 = vshrl.u32 %v730, 4
        %v732 = vand.u32 %v730, 15
        %v733 = vsub.s32 0, %v732
        %v734 = vsel %vm728, %v733, %v732
        %vm735 = vcmp.lt.s32.totalorder %v679, 0
        %v736 = vsub.s32 0, %v679
        %v737 = vsel %vm735, %v736, %v679
        %v738 = vshrl.u32 %v737, 4
        %v739 = vand.u32 %v737, 15
        %v740 = vsub.s32 0, %v739
        %v741 = vsel %vm735, %v740, %v739
        %vm742 = vcmp.lt.s32.totalorder %v680, 0
        %v743 = vsub.s32 0, %v680
        %v744 = vsel %vm742, %v743, %v680
        %v745 = vshrl.u32 %v744, 4
        %v746 = vand.u32 %v744, 15
        %v747 = vsub.s32 0, %v746
        %v748 = vsel %vm742, %v747, %v746
        %vm749 = vcmp.lt.s32.totalorder %v681, 0
        %v750 = vsub.s32 0, %v681
        %v751 = vsel %vm749, %v750, %v681
        %v752 = vshrl.u32 %v751, 4
        %v753 = vand.u32 %v751, 15
        %v754 = vsub.s32 0, %v753
        %v755 = vsel %vm749, %v754, %v753
        %vm756 = vcmp.lt.s32.totalorder %v682, 0
        %v757 = vsub.s32 0, %v682
        %v758 = vsel %vm756, %v757, %v682
        %v759 = vshrl.u32 %v758, 4
        %v760 = vand.u32 %v758, 15
        %v761 = vsub.s32 0, %v760
        %v762 = vsel %vm756, %v761, %v760
        %vm763 = vcmp.lt.s32.totalorder %v683, 0
        %v764 = vsub.s32 0, %v683
        %v765 = vsel %vm763, %v764, %v683
        %v766 = vshrl.u32 %v765, 4
        %v767 = vand.u32 %v765, 15
        %v768 = vsub.s32 0, %v767
        %v769 = vsel %vm763, %v768, %v767
        %vm770 = vcmp.lt.s32.totalorder %v684, 0
        %v771 = vsub.s32 0, %v684
        %v772 = vsel %vm770, %v771, %v684
        %v773 = vshrl.u32 %v772, 4
        %v774 = vand.u32 %v772, 15
        %v775 = vsub.s32 0, %v774
        %v776 = vsel %vm770, %v775, %v774
        %vm777 = vcmp.lt.s32.totalorder %v685, 0
        %v778 = vsub.s32 0, %v685
        %v779 = vsel %vm777, %v778, %v685
        %v780 = vshrl.u32 %v779, 4
        %v781 = vand.u32 %v779, 15
        %v782 = vsub.s32 0, %v781
        %v783 = vsel %vm777, %v782, %v781
        %vm784 = vcmp.lt.s32.totalorder %v686, 0
        %v785 = vsub.s32 0, %v686
        %v786 = vsel %vm784, %v785, %v686
        %v787 = vshrl.u32 %v786, 4
        %v788 = vand.u32 %v786, 15
        %v789 = vsub.s32 0, %v788
        %v790 = vsel %vm784, %v789, %v788
        %vm791 = vcmp.lt.s32.totalorder %v687, 0
        %v792 = vsub.s32 0, %v687
        %v793 = vsel %vm791, %v792, %v687
        %v794 = vshrl.u32 %v793, 4
        %v795 = vand.u32 %v793, 15
        %v796 = vsub.s32 0, %v795
        %v797 = vsel %vm791, %v796, %v795
        %vm798 = vcmp.lt.s32.totalorder %v688, 0
        %v799 = vsub.s32 0, %v688
        %v800 = vsel %vm798, %v799, %v688
        %v801 = vshrl.u32 %v800, 4
        %v802 = vand.u32 %v800, 15
        %v803 = vsub.s32 0, %v802
        %v804 = vsel %vm798, %v803, %v802
        %vm805 = vcmp.lt.s32.totalorder %v689, 0
        %v806 = vsub.s32 0, %v689
        %v807 = vsel %vm805, %v806, %v689
        %v808 = vshrl.u32 %v807, 4
        %v809 = vand.u32 %v807, 15
        %v810 = vsub.s32 0, %v809
        %v811 = vsel %vm805, %v810, %v809
        %vm812 = vcmp.lt.s32.totalorder %v690, 0
        %v813 = vsub.s32 0, %v690
        %v814 = vsel %vm812, %v813, %v690
        %v815 = vshrl.u32 %v814, 4
        %v816 = vand.u32 %v814, 15
        %v817 = vsub.s32 0, %v816
        %v818 = vsel %vm812, %v817, %v816
        %vm819 = vcmp.lt.s32.totalorder %v691, 0
        %v820 = vsub.s32 0, %v691
        %v821 = vsel %vm819, %v820, %v691
        %v822 = vshrl.u32 %v821, 4
        %v823 = vand.u32 %v821, 15
        %v824 = vsub.s32 0, %v823
        %v825 = vsel %vm819, %v824, %v823
        %vm826 = vcmp.lt.s32.totalorder %v692, 0
        %v827 = vsub.s32 0, %v692
        %v828 = vsel %vm826, %v827, %v692
        %v829 = vshrl.u32 %v828, 4
        %v830 = vand.u32 %v828, 15
        %v831 = vsub.s32 0, %v830
        %v832 = vsel %vm826, %v831, %v830
        %vm833 = vcmp.lt.s32.totalorder %v693, 0
        %v834 = vsub.s32 0, %v693
        %v835 = vsel %vm833, %v834, %v693
        %v836 = vshrl.u32 %v835, 4
        %v837 = vand.u32 %v835, 15
        %v838 = vsub.s32 0, %v837
        %v839 = vsel %vm833, %v838, %v837
        %vm840 = vcmp.lt.s32.totalorder %v694, 0
        %v841 = vsub.s32 0, %v694
        %v842 = vsel %vm840, %v841, %v694
        %v843 = vshrl.u32 %v842, 4
        %v844 = vand.u32 %v842, 15
        %v845 = vsub.s32 0, %v844
        %v846 = vsel %vm840, %v845, %v844
        %vm847 = vcmp.lt.s32.totalorder %v695, 0
        %v848 = vsub.s32 0, %v695
        %v849 = vsel %vm847, %v848, %v695
        %v850 = vshrl.u32 %v849, 4
        %v851 = vand.u32 %v849, 15
        %v852 = vsub.s32 0, %v851
        %v853 = vsel %vm847, %v852, %v851
        %vm854 = vcmp.lt.s32.totalorder %v696, 0
        %v855 = vsub.s32 0, %v696
        %v856 = vsel %vm854, %v855, %v696
        %v857 = vshrl.u32 %v856, 4
        %v858 = vand.u32 %v856, 15
        %v859 = vsub.s32 0, %v858
        %v860 = vsel %vm854, %v859, %v858
        %vm861 = vcmp.lt.s32.totalorder %v697, 0
        %v862 = vsub.s32 0, %v697
        %v863 = vsel %vm861, %v862, %v697
        %v864 = vshrl.u32 %v863, 4
        %v865 = vand.u32 %v863, 15
        %v866 = vsub.s32 0, %v865
        %v867 = vsel %vm861, %v866, %v865
        %vm868 = vcmp.lt.s32.totalorder %v698, 0
        %v869 = vsub.s32 0, %v698
        %v870 = vsel %vm868, %v869, %v698
        %v871 = vshrl.u32 %v870, 4
        %v872 = vand.u32 %v870, 15
        %v873 = vsub.s32 0, %v872
        %v874 = vsel %vm868, %v873, %v872
        %vm875 = vcmp.lt.s32.totalorder %v699, 0
        %v876 = vsub.s32 0, %v699
        %v877 = vsel %vm875, %v876, %v699
        %v878 = vshrl.u32 %v877, 4
        %v879 = vand.u32 %v877, 15
        %v880 = vsub.s32 0, %v879
        %v881 = vsel %vm875, %v880, %v879
        %vm882 = vcmp.lt.s32.totalorder %v700, 0
        %v883 = vsub.s32 0, %v700
        %v884 = vsel %vm882, %v883, %v700
        %v885 = vshrl.u32 %v884, 4
        %v886 = vand.u32 %v884, 15
        %v887 = vsub.s32 0, %v886
        %v888 = vsel %vm882, %v887, %v886
        %vm889 = vcmp.lt.s32.totalorder %v701, 0
        %v890 = vsub.s32 0, %v701
        %v891 = vsel %vm889, %v890, %v701
        %v892 = vshrl.u32 %v891, 4
        %v893 = vand.u32 %v891, 15
        %v894 = vsub.s32 0, %v893
        %v895 = vsel %vm889, %v894, %v893
        %vm896 = vcmp.lt.s32.totalorder %v702, 0
        %v897 = vsub.s32 0, %v702
        %v898 = vsel %vm896, %v897, %v702
        %v899 = vshrl.u32 %v898, 4
        %v900 = vand.u32 %v898, 15
        %v901 = vsub.s32 0, %v900
        %v902 = vsel %vm896, %v901, %v900
        %vm903 = vcmp.lt.s32.totalorder %v703, 0
        %v904 = vsub.s32 0, %v703
        %v905 = vsel %vm903, %v904, %v703
        %v906 = vshrl.u32 %v905, 4
        %v907 = vand.u32 %v905, 15
        %v908 = vsub.s32 0, %v907
        %v909 = vsel %vm903, %v908, %v907
        %vm910 = vcmp.lt.s32.totalorder %v704, 0
        %v911 = vsub.s32 0, %v704
        %v912 = vsel %vm910, %v911, %v704
        %v913 = vshrl.u32 %v912, 4
        %v914 = vand.u32 %v912, 15
        %v915 = vsub.s32 0, %v914
        %v916 = vsel %vm910, %v915, %v914
        %vm917 = vcmp.lt.s32.totalorder %v705, 0
        %v918 = vsub.s32 0, %v705
        %v919 = vsel %vm917, %v918, %v705
        %v920 = vshrl.u32 %v919, 4
        %v921 = vand.u32 %v919, 15
        %v922 = vsub.s32 0, %v921
        %v923 = vsel %vm917, %v922, %v921
        %vm924 = vcmp.lt.s32.totalorder %v706, 0
        %v925 = vsub.s32 0, %v706
        %v926 = vsel %vm924, %v925, %v706
        %v927 = vshrl.u32 %v926, 4
        %v928 = vand.u32 %v926, 15
        %v929 = vsub.s32 0, %v928
        %v930 = vsel %vm924, %v929, %v928
        %vm931 = vcmp.ne.s32.totalorder %v713, 0
        %vm932 = vcmp.ne.s32.totalorder %v720, 0
        %vm933 = vcmp.ne.s32.totalorder %v727, 0
        %vm934 = vcmp.ne.s32.totalorder %v734, 0
        %vm935 = vcmp.ne.s32.totalorder %v741, 0
        %vm936 = vcmp.ne.s32.totalorder %v748, 0
        %vm937 = vcmp.ne.s32.totalorder %v755, 0
        %vm938 = vcmp.ne.s32.totalorder %v762, 0
        %vm939 = vcmp.ne.s32.totalorder %v769, 0
        %vm940 = vcmp.ne.s32.totalorder %v776, 0
        %vm941 = vcmp.ne.s32.totalorder %v783, 0
        %vm942 = vcmp.ne.s32.totalorder %v790, 0
        %vm943 = vcmp.ne.s32.totalorder %v797, 0
        %vm944 = vcmp.ne.s32.totalorder %v804, 0
        %vm945 = vcmp.ne.s32.totalorder %v811, 0
        %vm946 = vcmp.ne.s32.totalorder %v818, 0
        %vm947 = vcmp.ne.s32.totalorder %v825, 0
        %vm948 = vcmp.ne.s32.totalorder %v832, 0
        %vm949 = vcmp.ne.s32.totalorder %v839, 0
        %vm950 = vcmp.ne.s32.totalorder %v846, 0
        %vm951 = vcmp.ne.s32.totalorder %v853, 0
        %vm952 = vcmp.ne.s32.totalorder %v860, 0
        %vm953 = vcmp.ne.s32.totalorder %v867, 0
        %vm954 = vcmp.ne.s32.totalorder %v874, 0
        %vm955 = vcmp.ne.s32.totalorder %v881, 0
        %vm956 = vcmp.ne.s32.totalorder %v888, 0
        %vm957 = vcmp.ne.s32.totalorder %v895, 0
        %vm958 = vcmp.ne.s32.totalorder %v902, 0
        %vm959 = vcmp.ne.s32.totalorder %v909, 0
        %vm960 = vcmp.ne.s32.totalorder %v916, 0
        %vm961 = vcmp.ne.s32.totalorder %v923, 0
        %vm962 = vcmp.ne.s32.totalorder %v930, 0
        %vm963 = vcmp.lt.s32.totalorder %v713, 0
        %vm964 = vcmp.lt.s32.totalorder %v720, 0
        %vm965 = vcmp.lt.s32.totalorder %v727, 0
        %vm966 = vcmp.lt.s32.totalorder %v734, 0
        %vm967 = vcmp.lt.s32.totalorder %v741, 0
        %vm968 = vcmp.lt.s32.totalorder %v748, 0
        %vm969 = vcmp.lt.s32.totalorder %v755, 0
        %vm970 = vcmp.lt.s32.totalorder %v762, 0
        %vm971 = vcmp.lt.s32.totalorder %v769, 0
        %vm972 = vcmp.lt.s32.totalorder %v776, 0
        %vm973 = vcmp.lt.s32.totalorder %v783, 0
        %vm974 = vcmp.lt.s32.totalorder %v790, 0
        %vm975 = vcmp.lt.s32.totalorder %v797, 0
        %vm976 = vcmp.lt.s32.totalorder %v804, 0
        %vm977 = vcmp.lt.s32.totalorder %v811, 0
        %vm978 = vcmp.lt.s32.totalorder %v818, 0
        %vm979 = vcmp.lt.s32.totalorder %v825, 0
        %vm980 = vcmp.lt.s32.totalorder %v832, 0
        %vm981 = vcmp.lt.s32.totalorder %v839, 0
        %vm982 = vcmp.lt.s32.totalorder %v846, 0
        %vm983 = vcmp.lt.s32.totalorder %v853, 0
        %vm984 = vcmp.lt.s32.totalorder %v860, 0
        %vm985 = vcmp.lt.s32.totalorder %v867, 0
        %vm986 = vcmp.lt.s32.totalorder %v874, 0
        %vm987 = vcmp.lt.s32.totalorder %v881, 0
        %vm988 = vcmp.lt.s32.totalorder %v888, 0
        %vm989 = vcmp.lt.s32.totalorder %v895, 0
        %vm990 = vcmp.lt.s32.totalorder %v902, 0
        %vm991 = vcmp.lt.s32.totalorder %v909, 0
        %vm992 = vcmp.lt.s32.totalorder %v916, 0
        %vm993 = vcmp.lt.s32.totalorder %v923, 0
        %vm994 = vcmp.lt.s32.totalorder %v930, 0
        %vm995 = vmand %vm963, %vm931
        %vm996 = vmand %vm964, %vm932
        %vm997 = vmand %vm965, %vm933
        %vm998 = vmand %vm966, %vm934
        %vm999 = vmand %vm967, %vm935
        %vm1000 = vmand %vm968, %vm936
        %vm1001 = vmand %vm969, %vm937
        %vm1002 = vmand %vm970, %vm938
        %vm1003 = vmand %vm971, %vm939
        %vm1004 = vmand %vm972, %vm940
        %vm1005 = vmand %vm973, %vm941
        %vm1006 = vmand %vm974, %vm942
        %vm1007 = vmand %vm975, %vm943
        %vm1008 = vmand %vm976, %vm944
        %vm1009 = vmand %vm977, %vm945
        %vm1010 = vmand %vm978, %vm946
        %vm1011 = vmand %vm979, %vm947
        %vm1012 = vmand %vm980, %vm948
        %vm1013 = vmand %vm981, %vm949
        %vm1014 = vmand %vm982, %vm950
        %vm1015 = vmand %vm983, %vm951
        %vm1016 = vmand %vm984, %vm952
        %vm1017 = vmand %vm985, %vm953
        %vm1018 = vmand %vm986, %vm954
        %vm1019 = vmand %vm987, %vm955
        %vm1020 = vmand %vm988, %vm956
        %vm1021 = vmand %vm989, %vm957
        %vm1022 = vmand %vm990, %vm958
        %vm1023 = vmand %vm991, %vm959
        %vm1024 = vmand %vm992, %vm960
        %vm1025 = vmand %vm993, %vm961
        %vm1026 = vmand %vm994, %vm962
        %v1027 = vadd.s32 %v713, 16
        %v1028 = vadd.s32 %v720, 16
        %v1029 = vadd.s32 %v727, 16
        %v1030 = vadd.s32 %v734, 16
        %v1031 = vadd.s32 %v741, 16
        %v1032 = vadd.s32 %v748, 16
        %v1033 = vadd.s32 %v755, 16
        %v1034 = vadd.s32 %v762, 16
        %v1035 = vadd.s32 %v769, 16
        %v1036 = vadd.s32 %v776, 16
        %v1037 = vadd.s32 %v783, 16
        %v1038 = vadd.s32 %v790, 16
        %v1039 = vadd.s32 %v797, 16
        %v1040 = vadd.s32 %v804, 16
        %v1041 = vadd.s32 %v811, 16
        %v1042 = vadd.s32 %v818, 16
        %v1043 = vadd.s32 %v825, 16
        %v1044 = vadd.s32 %v832, 16
        %v1045 = vadd.s32 %v839, 16
        %v1046 = vadd.s32 %v846, 16
        %v1047 = vadd.s32 %v853, 16
        %v1048 = vadd.s32 %v860, 16
        %v1049 = vadd.s32 %v867, 16
        %v1050 = vadd.s32 %v874, 16
        %v1051 = vadd.s32 %v881, 16
        %v1052 = vadd.s32 %v888, 16
        %v1053 = vadd.s32 %v895, 16
        %v1054 = vadd.s32 %v902, 16
        %v1055 = vadd.s32 %v909, 16
        %v1056 = vadd.s32 %v916, 16
        %v1057 = vadd.s32 %v923, 16
        %v1058 = vadd.s32 %v930, 16
        %v1059 = vsel %vm995, %v1027, %v713
        %v1060 = vsel %vm996, %v1028, %v720
        %v1061 = vsel %vm997, %v1029, %v727
        %v1062 = vsel %vm998, %v1030, %v734
        %v1063 = vsel %vm999, %v1031, %v741
        %v1064 = vsel %vm1000, %v1032, %v748
        %v1065 = vsel %vm1001, %v1033, %v755
        %v1066 = vsel %vm1002, %v1034, %v762
        %v1067 = vsel %vm1003, %v1035, %v769
        %v1068 = vsel %vm1004, %v1036, %v776
        %v1069 = vsel %vm1005, %v1037, %v783
        %v1070 = vsel %vm1006, %v1038, %v790
        %v1071 = vsel %vm1007, %v1039, %v797
        %v1072 = vsel %vm1008, %v1040, %v804
        %v1073 = vsel %vm1009, %v1041, %v811
        %v1074 = vsel %vm1010, %v1042, %v818
        %v1075 = vsel %vm1011, %v1043, %v825
        %v1076 = vsel %vm1012, %v1044, %v832
        %v1077 = vsel %vm1013, %v1045, %v839
        %v1078 = vsel %vm1014, %v1046, %v846
        %v1079 = vsel %vm1015, %v1047, %v853
        %v1080 = vsel %vm1016, %v1048, %v860
        %v1081 = vsel %vm1017, %v1049, %v867
        %v1082 = vsel %vm1018, %v1050, %v874
        %v1083 = vsel %vm1019, %v1051, %v881
        %v1084 = vsel %vm1020, %v1052, %v888
        %v1085 = vsel %vm1021, %v1053, %v895
        %v1086 = vsel %vm1022, %v1054, %v902
        %v1087 = vsel %vm1023, %v1055, %v909
        %v1088 = vsel %vm1024, %v1056, %v916
        %v1089 = vsel %vm1025, %v1057, %v923
        %v1090 = vsel %vm1026, %v1058, %v930
        %vm1091 = vcmp.ne.s32.totalorder %v1059, 15
        %vm1092 = vcmp.ne.s32.totalorder %v1060, 15
        %vm1093 = vcmp.ne.s32.totalorder %v1061, 15
        %vm1094 = vcmp.ne.s32.totalorder %v1062, 15
        %vm1095 = vcmp.ne.s32.totalorder %v1063, 15
        %vm1096 = vcmp.ne.s32.totalorder %v1064, 15
        %vm1097 = vcmp.ne.s32.totalorder %v1065, 15
        %vm1098 = vcmp.ne.s32.totalorder %v1066, 15
        %vm1099 = vcmp.ne.s32.totalorder %v1067, 15
        %vm1100 = vcmp.ne.s32.totalorder %v1068, 15
        %vm1101 = vcmp.ne.s32.totalorder %v1069, 15
        %vm1102 = vcmp.ne.s32.totalorder %v1070, 15
        %vm1103 = vcmp.ne.s32.totalorder %v1071, 15
        %vm1104 = vcmp.ne.s32.totalorder %v1072, 15
        %vm1105 = vcmp.ne.s32.totalorder %v1073, 15
        %vm1106 = vcmp.ne.s32.totalorder %v1074, 15
        %vm1107 = vcmp.ne.s32.totalorder %v1075, 15
        %vm1108 = vcmp.ne.s32.totalorder %v1076, 15
        %vm1109 = vcmp.ne.s32.totalorder %v1077, 15
        %vm1110 = vcmp.ne.s32.totalorder %v1078, 15
        %vm1111 = vcmp.ne.s32.totalorder %v1079, 15
        %vm1112 = vcmp.ne.s32.totalorder %v1080, 15
        %vm1113 = vcmp.ne.s32.totalorder %v1081, 15
        %vm1114 = vcmp.ne.s32.totalorder %v1082, 15
        %vm1115 = vcmp.ne.s32.totalorder %v1083, 15
        %vm1116 = vcmp.ne.s32.totalorder %v1084, 15
        %vm1117 = vcmp.ne.s32.totalorder %v1085, 15
        %vm1118 = vcmp.ne.s32.totalorder %v1086, 15
        %vm1119 = vcmp.ne.s32.totalorder %v1087, 15
        %vm1120 = vcmp.ne.s32.totalorder %v1088, 15
        %vm1121 = vcmp.ne.s32.totalorder %v1089, 15
        %vm1122 = vcmp.ne.s32.totalorder %v1090, 15
        %vm1123 = vcmp.ne.s32.totalorder %v1059, 0
        %vm1124 = vcmp.ne.s32.totalorder %v1060, 0
        %vm1125 = vcmp.ne.s32.totalorder %v1061, 0
        %vm1126 = vcmp.ne.s32.totalorder %v1062, 0
        %vm1127 = vcmp.ne.s32.totalorder %v1063, 0
        %vm1128 = vcmp.ne.s32.totalorder %v1064, 0
        %vm1129 = vcmp.ne.s32.totalorder %v1065, 0
        %vm1130 = vcmp.ne.s32.totalorder %v1066, 0
        %vm1131 = vcmp.ne.s32.totalorder %v1067, 0
        %vm1132 = vcmp.ne.s32.totalorder %v1068, 0
        %vm1133 = vcmp.ne.s32.totalorder %v1069, 0
        %vm1134 = vcmp.ne.s32.totalorder %v1070, 0
        %vm1135 = vcmp.ne.s32.totalorder %v1071, 0
        %vm1136 = vcmp.ne.s32.totalorder %v1072, 0
        %vm1137 = vcmp.ne.s32.totalorder %v1073, 0
        %vm1138 = vcmp.ne.s32.totalorder %v1074, 0
        %vm1139 = vcmp.ne.s32.totalorder %v1075, 0
        %vm1140 = vcmp.ne.s32.totalorder %v1076, 0
        %vm1141 = vcmp.ne.s32.totalorder %v1077, 0
        %vm1142 = vcmp.ne.s32.totalorder %v1078, 0
        %vm1143 = vcmp.ne.s32.totalorder %v1079, 0
        %vm1144 = vcmp.ne.s32.totalorder %v1080, 0
        %vm1145 = vcmp.ne.s32.totalorder %v1081, 0
        %vm1146 = vcmp.ne.s32.totalorder %v1082, 0
        %vm1147 = vcmp.ne.s32.totalorder %v1083, 0
        %vm1148 = vcmp.ne.s32.totalorder %v1084, 0
        %vm1149 = vcmp.ne.s32.totalorder %v1085, 0
        %vm1150 = vcmp.ne.s32.totalorder %v1086, 0
        %vm1151 = vcmp.ne.s32.totalorder %v1087, 0
        %vm1152 = vcmp.ne.s32.totalorder %v1088, 0
        %vm1153 = vcmp.ne.s32.totalorder %v1089, 0
        %vm1154 = vcmp.ne.s32.totalorder %v1090, 0
        %vm1155 = vcmp.lt.s32.totalorder %v675, 240
        %vm1156 = vcmp.lt.s32.totalorder %v676, 240
        %vm1157 = vcmp.lt.s32.totalorder %v677, 240
        %vm1158 = vcmp.lt.s32.totalorder %v678, 240
        %vm1159 = vcmp.lt.s32.totalorder %v679, 240
        %vm1160 = vcmp.lt.s32.totalorder %v680, 240
        %vm1161 = vcmp.lt.s32.totalorder %v681, 240
        %vm1162 = vcmp.lt.s32.totalorder %v682, 240
        %vm1163 = vcmp.lt.s32.totalorder %v683, 240
        %vm1164 = vcmp.lt.s32.totalorder %v684, 240
        %vm1165 = vcmp.lt.s32.totalorder %v685, 240
        %vm1166 = vcmp.lt.s32.totalorder %v686, 240
        %vm1167 = vcmp.lt.s32.totalorder %v687, 240
        %vm1168 = vcmp.lt.s32.totalorder %v688, 240
        %vm1169 = vcmp.lt.s32.totalorder %v689, 240
        %vm1170 = vcmp.lt.s32.totalorder %v690, 240
        %vm1171 = vcmp.lt.s32.totalorder %v691, 240
        %vm1172 = vcmp.lt.s32.totalorder %v692, 240
        %vm1173 = vcmp.lt.s32.totalorder %v693, 240
        %vm1174 = vcmp.lt.s32.totalorder %v694, 240
        %vm1175 = vcmp.lt.s32.totalorder %v695, 240
        %vm1176 = vcmp.lt.s32.totalorder %v696, 240
        %vm1177 = vcmp.lt.s32.totalorder %v697, 240
        %vm1178 = vcmp.lt.s32.totalorder %v698, 240
        %vm1179 = vcmp.lt.s32.totalorder %v699, 240
        %vm1180 = vcmp.lt.s32.totalorder %v700, 240
        %vm1181 = vcmp.lt.s32.totalorder %v701, 240
        %vm1182 = vcmp.lt.s32.totalorder %v702, 240
        %vm1183 = vcmp.lt.s32.totalorder %v703, 240
        %vm1184 = vcmp.lt.s32.totalorder %v704, 240
        %vm1185 = vcmp.lt.s32.totalorder %v705, 240
        %vm1186 = vcmp.lt.s32.totalorder %v706, 240
        %vm1187 = vcmp.ge.s32.totalorder %v675, 16
        %vm1188 = vcmp.ge.s32.totalorder %v676, 16
        %vm1189 = vcmp.ge.s32.totalorder %v677, 16
        %vm1190 = vcmp.ge.s32.totalorder %v678, 16
        %vm1191 = vcmp.ge.s32.totalorder %v679, 16
        %vm1192 = vcmp.ge.s32.totalorder %v680, 16
        %vm1193 = vcmp.ge.s32.totalorder %v681, 16
        %vm1194 = vcmp.ge.s32.totalorder %v682, 16
        %vm1195 = vcmp.ge.s32.totalorder %v683, 16
        %vm1196 = vcmp.ge.s32.totalorder %v684, 16
        %vm1197 = vcmp.ge.s32.totalorder %v685, 16
        %vm1198 = vcmp.ge.s32.totalorder %v686, 16
        %vm1199 = vcmp.ge.s32.totalorder %v687, 16
        %vm1200 = vcmp.ge.s32.totalorder %v688, 16
        %vm1201 = vcmp.ge.s32.totalorder %v689, 16
        %vm1202 = vcmp.ge.s32.totalorder %v690, 16
        %vm1203 = vcmp.ge.s32.totalorder %v691, 16
        %vm1204 = vcmp.ge.s32.totalorder %v692, 16
        %vm1205 = vcmp.ge.s32.totalorder %v693, 16
        %vm1206 = vcmp.ge.s32.totalorder %v694, 16
        %vm1207 = vcmp.ge.s32.totalorder %v695, 16
        %vm1208 = vcmp.ge.s32.totalorder %v696, 16
        %vm1209 = vcmp.ge.s32.totalorder %v697, 16
        %vm1210 = vcmp.ge.s32.totalorder %v698, 16
        %vm1211 = vcmp.ge.s32.totalorder %v699, 16
        %vm1212 = vcmp.ge.s32.totalorder %v700, 16
        %vm1213 = vcmp.ge.s32.totalorder %v701, 16
        %vm1214 = vcmp.ge.s32.totalorder %v702, 16
        %vm1215 = vcmp.ge.s32.totalorder %v703, 16
        %vm1216 = vcmp.ge.s32.totalorder %v704, 16
        %vm1217 = vcmp.ge.s32.totalorder %v705, 16
        %vm1218 = vcmp.ge.s32.totalorder %v706, 16
        %v1219 = vld [vmem:[#allocation7] sm:$0x77]
        %v1220 = vld [vmem:[#allocation7 + $0x8] sm:$0x77]
        %v1221 = vld [vmem:[#allocation7 + $0x10] sm:$0x77]
        %v1222 = vld [vmem:[%s4] sm:$0x3]
        %v1223 = vld [vmem:[%s6] sm:$0x1]
        %v1224 = vsel %vm1091, %v484, 0.0
        %v1225 = vsel %vm1091, %v486, 0.0
        %v1226 = vsel %vm1092, %v490, 0.0
        %v1227 = vsel %vm1092, %v492, 0.0
        %v1228 = vsel %vm1093, %v496, 0.0
        %v1229 = vsel %vm1093, %v498, 0.0
        %v1230 = vsel %vm1094, %v502, 0.0
        %v1231 = vsel %vm1094, %v504, 0.0
        %v1232 = vsel %vm1095, %v508, 0.0
        %v1233 = vsel %vm1095, %v510, 0.0
        %v1234 = vsel %vm1096, %v514, 0.0
        %v1235 = vsel %vm1096, %v516, 0.0
        %v1236 = vsel %vm1097, %v520, 0.0
        %v1237 = vsel %vm1097, %v522, 0.0
        %v1238 = vsel %vm1098, %v526, 0.0
        %v1239 = vsel %vm1098, %v528, 0.0
        %v1240 = vsel %vm1099, %v532, 0.0
        %v1241 = vsel %vm1099, %v534, 0.0
        %v1242 = vsel %vm1100, %v538, 0.0
        %v1243 = vsel %vm1100, %v540, 0.0
        %v1244 = vsel %vm1101, %v544, 0.0
        %v1245 = vsel %vm1101, %v546, 0.0
        %v1246 = vsel %vm1102, %v550, 0.0
        %v1247 = vsel %vm1102, %v552, 0.0
        %v1248 = vsel %vm1103, %v556, 0.0
        %v1249 = vsel %vm1103, %v558, 0.0
        %v1250 = vsel %vm1104, %v562, 0.0
        %v1251 = vsel %vm1104, %v564, 0.0
        %v1252 = vsel %vm1105, %v568, 0.0
        %v1253 = vsel %vm1105, %v570, 0.0
        %v1254 = vsel %vm1106, %v574, 0.0
        %v1255 = vsel %vm1106, %v576, 0.0
        %v1256 = vsel %vm1107, %v580, 0.0
        %v1257 = vsel %vm1107, %v582, 0.0
        %v1258 = vsel %vm1108, %v586, 0.0
        %v1259 = vsel %vm1108, %v588, 0.0
        %v1260 = vsel %vm1109, %v592, 0.0
        %v1261 = vsel %vm1109, %v594, 0.0
        %v1262 = vsel %vm1110, %v598, 0.0
        %v1263 = vsel %vm1110, %v600, 0.0
        %v1264 = vsel %vm1111, %v604, 0.0
        %v1265 = vsel %vm1111, %v606, 0.0
        %v1266 = vsel %vm1112, %v610, 0.0
        %v1267 = vsel %vm1112, %v612, 0.0
        %v1268 = vsel %vm1113, %v616, 0.0
        %v1269 = vsel %vm1113, %v618, 0.0
        %v1270 = vsel %vm1114, %v622, 0.0
        %v1271 = vsel %vm1114, %v624, 0.0
        %v1272 = vsel %vm1115, %v628, 0.0
        %v1273 = vsel %vm1115, %v630, 0.0
        %v1274 = vsel %vm1116, %v634, 0.0
        %v1275 = vsel %vm1116, %v636, 0.0
        %v1276 = vsel %vm1117, %v640, 0.0
        %v1277 = vsel %vm1117, %v642, 0.0
        %v1278 = vsel %vm1118, %v646, 0.0
        %v1279 = vsel %vm1118, %v648, 0.0
        %v1280 = vsel %vm1119, %v652, 0.0
        %v1281 = vsel %vm1119, %v654, 0.0
        %v1282 = vsel %vm1120, %v658, 0.0
        %v1283 = vsel %vm1120, %v660, 0.0
        %v1284 = vsel %vm1121, %v664, 0.0
        %v1285 = vsel %vm1121, %v666, 0.0
        %v1286 = vsel %vm1122, %v670, 0.0
        %v1287 = vsel %vm1122, %v672, 0.0
        %v1288 = vrot.slane %v1224, 7
        %v1289 = vrot.slane %v1225, 7
        %v1290 = vrot.slane %v1226, 7
        %v1291 = vrot.slane %v1227, 7
        %v1292 = vrot.slane %v1228, 7
        %v1293 = vrot.slane %v1229, 7
        %v1294 = vrot.slane %v1230, 7
        %v1295 = vrot.slane %v1231, 7
        %v1296 = vrot.slane %v1232, 7
        %v1297 = vrot.slane %v1233, 7
        %v1298 = vrot.slane %v1234, 7
        %v1299 = vrot.slane %v1235, 7
        %v1300 = vrot.slane %v1236, 7
        %v1301 = vrot.slane %v1237, 7
        %v1302 = vrot.slane %v1238, 7
        %v1303 = vrot.slane %v1239, 7
        %v1304 = vrot.slane %v1240, 7
        %v1305 = vrot.slane %v1241, 7
        %v1306 = vrot.slane %v1242, 7
        %v1307 = vrot.slane %v1243, 7
        %v1308 = vrot.slane %v1244, 7
        %v1309 = vrot.slane %v1245, 7
        %v1310 = vrot.slane %v1246, 7
        %v1311 = vrot.slane %v1247, 7
        %v1312 = vrot.slane %v1248, 7
        %v1313 = vrot.slane %v1249, 7
        %v1314 = vrot.slane %v1250, 7
        %v1315 = vrot.slane %v1251, 7
        %v1316 = vrot.slane %v1252, 7
        %v1317 = vrot.slane %v1253, 7
        %v1318 = vrot.slane %v1254, 7
        %v1319 = vrot.slane %v1255, 7
        %v1320 = vrot.slane %v1256, 7
        %v1321 = vrot.slane %v1257, 7
        %v1322 = vrot.slane %v1258, 7
        %v1323 = vrot.slane %v1259, 7
        %v1324 = vrot.slane %v1260, 7
        %v1325 = vrot.slane %v1261, 7
        %v1326 = vrot.slane %v1262, 7
        %v1327 = vrot.slane %v1263, 7
        %v1328 = vrot.slane %v1264, 7
        %v1329 = vrot.slane %v1265, 7
        %v1330 = vrot.slane %v1266, 7
        %v1331 = vrot.slane %v1267, 7
        %v1332 = vrot.slane %v1268, 7
        %v1333 = vrot.slane %v1269, 7
        %v1334 = vrot.slane %v1270, 7
        %v1335 = vrot.slane %v1271, 7
        %v1336 = vrot.slane %v1272, 7
        %v1337 = vrot.slane %v1273, 7
        %v1338 = vrot.slane %v1274, 7
        %v1339 = vrot.slane %v1275, 7
        %v1340 = vrot.slane %v1276, 7
        %v1341 = vrot.slane %v1277, 7
        %v1342 = vrot.slane %v1278, 7
        %v1343 = vrot.slane %v1279, 7
        %v1344 = vrot.slane %v1280, 7
        %v1345 = vrot.slane %v1281, 7
        %v1346 = vrot.slane %v1282, 7
        %v1347 = vrot.slane %v1283, 7
        %v1348 = vrot.slane %v1284, 7
        %v1349 = vrot.slane %v1285, 7
        %v1350 = vrot.slane %v1286, 7
        %v1351 = vrot.slane %v1287, 7
        %vm1352 = vcmp.lt.s32.totalorder %v675, 1
        %v1353 = vsel %vm1352, %v1348, %v1350
        %v1354 = vsel %vm1352, %v1349, %v1351
        %v1355 = vsel %vm1352, %v1346, %v1348
        %v1356 = vsel %vm1352, %v1347, %v1349
        %v1357 = vsel %vm1352, %v1344, %v1346
        %v1358 = vsel %vm1352, %v1345, %v1347
        %v1359 = vsel %vm1352, %v1342, %v1344
        %v1360 = vsel %vm1352, %v1343, %v1345
        %v1361 = vsel %vm1352, %v1340, %v1342
        %v1362 = vsel %vm1352, %v1341, %v1343
        %v1363 = vsel %vm1352, %v1338, %v1340
        %v1364 = vsel %vm1352, %v1339, %v1341
        %v1365 = vsel %vm1352, %v1336, %v1338
        %v1366 = vsel %vm1352, %v1337, %v1339
        %v1367 = vsel %vm1352, %v1334, %v1336
        %v1368 = vsel %vm1352, %v1335, %v1337
        %v1369 = vsel %vm1352, %v1332, %v1334
        %v1370 = vsel %vm1352, %v1333, %v1335
        %v1371 = vsel %vm1352, %v1330, %v1332
        %v1372 = vsel %vm1352, %v1331, %v1333
        %v1373 = vsel %vm1352, %v1328, %v1330
        %v1374 = vsel %vm1352, %v1329, %v1331
        %v1375 = vsel %vm1352, %v1326, %v1328
        %v1376 = vsel %vm1352, %v1327, %v1329
        %v1377 = vsel %vm1352, %v1324, %v1326
        %v1378 = vsel %vm1352, %v1325, %v1327
        %v1379 = vsel %vm1352, %v1322, %v1324
        %v1380 = vsel %vm1352, %v1323, %v1325
        %v1381 = vsel %vm1352, %v1320, %v1322
        %v1382 = vsel %vm1352, %v1321, %v1323
        %v1383 = vsel %vm1352, %v1318, %v1320
        %v1384 = vsel %vm1352, %v1319, %v1321
        %v1385 = vsel %vm1352, %v1316, %v1318
        %v1386 = vsel %vm1352, %v1317, %v1319
        %v1387 = vsel %vm1352, %v1314, %v1316
        %v1388 = vsel %vm1352, %v1315, %v1317
        %v1389 = vsel %vm1352, %v1312, %v1314
        %v1390 = vsel %vm1352, %v1313, %v1315
        %v1391 = vsel %vm1352, %v1310, %v1312
        %v1392 = vsel %vm1352, %v1311, %v1313
        %v1393 = vsel %vm1352, %v1308, %v1310
        %v1394 = vsel %vm1352, %v1309, %v1311
        %v1395 = vsel %vm1352, %v1306, %v1308
        %v1396 = vsel %vm1352, %v1307, %v1309
        %v1397 = vsel %vm1352, %v1304, %v1306
        %v1398 = vsel %vm1352, %v1305, %v1307
        %v1399 = vsel %vm1352, %v1302, %v1304
        %v1400 = vsel %vm1352, %v1303, %v1305
        %v1401 = vsel %vm1352, %v1300, %v1302
        %v1402 = vsel %vm1352, %v1301, %v1303
        %v1403 = vsel %vm1352, %v1298, %v1300
        %v1404 = vsel %vm1352, %v1299, %v1301
        %v1405 = vsel %vm1352, %v1296, %v1298
        %v1406 = vsel %vm1352, %v1297, %v1299
        %v1407 = vsel %vm1352, %v1294, %v1296
        %v1408 = vsel %vm1352, %v1295, %v1297
        %v1409 = vsel %vm1352, %v1292, %v1294
        %v1410 = vsel %vm1352, %v1293, %v1295
        %v1411 = vsel %vm1352, %v1290, %v1292
        %v1412 = vsel %vm1352, %v1291, %v1293
        %v1413 = vsel %vm1352, %v1288, %v1290
        %v1414 = vsel %vm1352, %v1289, %v1291
        %v1415 = vsel %vm1352, %v1350, %v1288
        %v1416 = vsel %vm1352, %v1351, %v1289
        %v1417 = vsel %vm1123, %v484, 0.0
        %v1418 = vsel %vm1123, %v486, 0.0
        %v1419 = vsel %vm1124, %v490, 0.0
        %v1420 = vsel %vm1124, %v492, 0.0
        %v1421 = vsel %vm1125, %v496, 0.0
        %v1422 = vsel %vm1125, %v498, 0.0
        %v1423 = vsel %vm1126, %v502, 0.0
        %v1424 = vsel %vm1126, %v504, 0.0
        %v1425 = vsel %vm1127, %v508, 0.0
        %v1426 = vsel %vm1127, %v510, 0.0
        %v1427 = vsel %vm1128, %v514, 0.0
        %v1428 = vsel %vm1128, %v516, 0.0
        %v1429 = vsel %vm1129, %v520, 0.0
        %v1430 = vsel %vm1129, %v522, 0.0
        %v1431 = vsel %vm1130, %v526, 0.0
        %v1432 = vsel %vm1130, %v528, 0.0
        %v1433 = vsel %vm1131, %v532, 0.0
        %v1434 = vsel %vm1131, %v534, 0.0
        %v1435 = vsel %vm1132, %v538, 0.0
        %v1436 = vsel %vm1132, %v540, 0.0
        %v1437 = vsel %vm1133, %v544, 0.0
        %v1438 = vsel %vm1133, %v546, 0.0
        %v1439 = vsel %vm1134, %v550, 0.0
        %v1440 = vsel %vm1134, %v552, 0.0
        %v1441 = vsel %vm1135, %v556, 0.0
        %v1442 = vsel %vm1135, %v558, 0.0
        %v1443 = vsel %vm1136, %v562, 0.0
        %v1444 = vsel %vm1136, %v564, 0.0
        %v1445 = vsel %vm1137, %v568, 0.0
        %v1446 = vsel %vm1137, %v570, 0.0
        %v1447 = vsel %vm1138, %v574, 0.0
        %v1448 = vsel %vm1138, %v576, 0.0
        %v1449 = vsel %vm1139, %v580, 0.0
        %v1450 = vsel %vm1139, %v582, 0.0
        %v1451 = vsel %vm1140, %v586, 0.0
        %v1452 = vsel %vm1140, %v588, 0.0
        %v1453 = vsel %vm1141, %v592, 0.0
        %v1454 = vsel %vm1141, %v594, 0.0
        %v1455 = vsel %vm1142, %v598, 0.0
        %v1456 = vsel %vm1142, %v600, 0.0
        %v1457 = vsel %vm1143, %v604, 0.0
        %v1458 = vsel %vm1143, %v606, 0.0
        %v1459 = vsel %vm1144, %v610, 0.0
        %v1460 = vsel %vm1144, %v612, 0.0
        %v1461 = vsel %vm1145, %v616, 0.0
        %v1462 = vsel %vm1145, %v618, 0.0
        %v1463 = vsel %vm1146, %v622, 0.0
        %v1464 = vsel %vm1146, %v624, 0.0
        %v1465 = vsel %vm1147, %v628, 0.0
        %v1466 = vsel %vm1147, %v630, 0.0
        %v1467 = vsel %vm1148, %v634, 0.0
        %v1468 = vsel %vm1148, %v636, 0.0
        %v1469 = vsel %vm1149, %v640, 0.0
        %v1470 = vsel %vm1149, %v642, 0.0
        %v1471 = vsel %vm1150, %v646, 0.0
        %v1472 = vsel %vm1150, %v648, 0.0
        %v1473 = vsel %vm1151, %v652, 0.0
        %v1474 = vsel %vm1151, %v654, 0.0
        %v1475 = vsel %vm1152, %v658, 0.0
        %v1476 = vsel %vm1152, %v660, 0.0
        %v1477 = vsel %vm1153, %v664, 0.0
        %v1478 = vsel %vm1153, %v666, 0.0
        %v1479 = vsel %vm1154, %v670, 0.0
        %v1480 = vsel %vm1154, %v672, 0.0
        %v1481 = vrot.slane %v1417, 1
        %v1482 = vrot.slane %v1418, 1
        %v1483 = vrot.slane %v1419, 1
        %v1484 = vrot.slane %v1420, 1
        %v1485 = vrot.slane %v1421, 1
        %v1486 = vrot.slane %v1422, 1
        %v1487 = vrot.slane %v1423, 1
        %v1488 = vrot.slane %v1424, 1
        %v1489 = vrot.slane %v1425, 1
        %v1490 = vrot.slane %v1426, 1
        %v1491 = vrot.slane %v1427, 1
        %v1492 = vrot.slane %v1428, 1
        %v1493 = vrot.slane %v1429, 1
        %v1494 = vrot.slane %v1430, 1
        %v1495 = vrot.slane %v1431, 1
        %v1496 = vrot.slane %v1432, 1
        %v1497 = vrot.slane %v1433, 1
        %v1498 = vrot.slane %v1434, 1
        %v1499 = vrot.slane %v1435, 1
        %v1500 = vrot.slane %v1436, 1
        %v1501 = vrot.slane %v1437, 1
        %v1502 = vrot.slane %v1438, 1
        %v1503 = vrot.slane %v1439, 1
        %v1504 = vrot.slane %v1440, 1
        %v1505 = vrot.slane %v1441, 1
        %v1506 = vrot.slane %v1442, 1
        %v1507 = vrot.slane %v1443, 1
        %v1508 = vrot.slane %v1444, 1
        %v1509 = vrot.slane %v1445, 1
        %v1510 = vrot.slane %v1446, 1
        %v1511 = vrot.slane %v1447, 1
        %v1512 = vrot.slane %v1448, 1
        %v1513 = vrot.slane %v1449, 1
        %v1514 = vrot.slane %v1450, 1
        %v1515 = vrot.slane %v1451, 1
        %v1516 = vrot.slane %v1452, 1
        %v1517 = vrot.slane %v1453, 1
        %v1518 = vrot.slane %v1454, 1
        %v1519 = vrot.slane %v1455, 1
        %v1520 = vrot.slane %v1456, 1
        %v1521 = vrot.slane %v1457, 1
        %v1522 = vrot.slane %v1458, 1
        %v1523 = vrot.slane %v1459, 1
        %v1524 = vrot.slane %v1460, 1
        %v1525 = vrot.slane %v1461, 1
        %v1526 = vrot.slane %v1462, 1
        %v1527 = vrot.slane %v1463, 1
        %v1528 = vrot.slane %v1464, 1
        %v1529 = vrot.slane %v1465, 1
        %v1530 = vrot.slane %v1466, 1
        %v1531 = vrot.slane %v1467, 1
        %v1532 = vrot.slane %v1468, 1
        %v1533 = vrot.slane %v1469, 1
        %v1534 = vrot.slane %v1470, 1
        %v1535 = vrot.slane %v1471, 1
        %v1536 = vrot.slane %v1472, 1
        %v1537 = vrot.slane %v1473, 1
        %v1538 = vrot.slane %v1474, 1
        %v1539 = vrot.slane %v1475, 1
        %v1540 = vrot.slane %v1476, 1
        %v1541 = vrot.slane %v1477, 1
        %v1542 = vrot.slane %v1478, 1
        %v1543 = vrot.slane %v1479, 1
        %v1544 = vrot.slane %v1480, 1
        %vm1545 = vcmp.lt.s32.totalorder %v675, 7
        %v1546 = vsel %vm1545, %v1541, %v1543
        %v1547 = vsel %vm1545, %v1542, %v1544
        %v1548 = vsel %vm1545, %v1539, %v1541
        %v1549 = vsel %vm1545, %v1540, %v1542
        %v1550 = vsel %vm1545, %v1537, %v1539
        %v1551 = vsel %vm1545, %v1538, %v1540
        %v1552 = vsel %vm1545, %v1535, %v1537
        %v1553 = vsel %vm1545, %v1536, %v1538
        %v1554 = vsel %vm1545, %v1533, %v1535
        %v1555 = vsel %vm1545, %v1534, %v1536
        %v1556 = vsel %vm1545, %v1531, %v1533
        %v1557 = vsel %vm1545, %v1532, %v1534
        %v1558 = vsel %vm1545, %v1529, %v1531
        %v1559 = vsel %vm1545, %v1530, %v1532
        %v1560 = vsel %vm1545, %v1527, %v1529
        %v1561 = vsel %vm1545, %v1528, %v1530
        %v1562 = vsel %vm1545, %v1525, %v1527
        %v1563 = vsel %vm1545, %v1526, %v1528
        %v1564 = vsel %vm1545, %v1523, %v1525
        %v1565 = vsel %vm1545, %v1524, %v1526
        %v1566 = vsel %vm1545, %v1521, %v1523
        %v1567 = vsel %vm1545, %v1522, %v1524
        %v1568 = vsel %vm1545, %v1519, %v1521
        %v1569 = vsel %vm1545, %v1520, %v1522
        %v1570 = vsel %vm1545, %v1517, %v1519
        %v1571 = vsel %vm1545, %v1518, %v1520
        %v1572 = vsel %vm1545, %v1515, %v1517
        %v1573 = vsel %vm1545, %v1516, %v1518
        %v1574 = vsel %vm1545, %v1513, %v1515
        %v1575 = vsel %vm1545, %v1514, %v1516
        %v1576 = vsel %vm1545, %v1511, %v1513
        %v1577 = vsel %vm1545, %v1512, %v1514
        %v1578 = vsel %vm1545, %v1509, %v1511
        %v1579 = vsel %vm1545, %v1510, %v1512
        %v1580 = vsel %vm1545, %v1507, %v1509
        %v1581 = vsel %vm1545, %v1508, %v1510
        %v1582 = vsel %vm1545, %v1505, %v1507
        %v1583 = vsel %vm1545, %v1506, %v1508
        %v1584 = vsel %vm1545, %v1503, %v1505
        %v1585 = vsel %vm1545, %v1504, %v1506
        %v1586 = vsel %vm1545, %v1501, %v1503
        %v1587 = vsel %vm1545, %v1502, %v1504
        %v1588 = vsel %vm1545, %v1499, %v1501
        %v1589 = vsel %vm1545, %v1500, %v1502
        %v1590 = vsel %vm1545, %v1497, %v1499
        %v1591 = vsel %vm1545, %v1498, %v1500
        %v1592 = vsel %vm1545, %v1495, %v1497
        %v1593 = vsel %vm1545, %v1496, %v1498
        %v1594 = vsel %vm1545, %v1493, %v1495
        %v1595 = vsel %vm1545, %v1494, %v1496
        %v1596 = vsel %vm1545, %v1491, %v1493
        %v1597 = vsel %vm1545, %v1492, %v1494
        %v1598 = vsel %vm1545, %v1489, %v1491
        %v1599 = vsel %vm1545, %v1490, %v1492
        %v1600 = vsel %vm1545, %v1487, %v1489
        %v1601 = vsel %vm1545, %v1488, %v1490
        %v1602 = vsel %vm1545, %v1485, %v1487
        %v1603 = vsel %vm1545, %v1486, %v1488
        %v1604 = vsel %vm1545, %v1483, %v1485
        %v1605 = vsel %vm1545, %v1484, %v1486
        %v1606 = vsel %vm1545, %v1481, %v1483
        %v1607 = vsel %vm1545, %v1482, %v1484
        %v1608 = vsel %vm1545, %v1543, %v1481
        %v1609 = vsel %vm1545, %v1544, %v1482
        %v1611 = vlaneseq
        %v1612 = vshrl.u32 %v1611, 7
        %v1613 = vsub.s32 0, %v1612
        %v1614 = vrot.slane %v1219, %v1613
        %v1615 = vlaneseq
        %v1616 = vshrl.u32 %v1615, 7
        %v1617 = vsub.s32 4, %v1616
        %v1618 = vrot.slane %v1219, %v1617
        %v1621 = vlaneseq
        %v1622 = vshrl.u32 %v1621, 7
        %v1623 = vsub.s32 0, %v1622
        %v1624 = vrot.slane %v1614, %v1623
        %v1625 = vlaneseq
        %v1626 = vshrl.u32 %v1625, 7
        %v1627 = vsub.s32 0, %v1626
        %v1628 = vrot.slane %v1618, %v1627
        %v1629 = vmul.f32 %v1415, %v1624
        %v1630 = vmul.f32 %v1416, %v1628
        %v1631 = vmul.f32 %v1413, %v1624
        %v1632 = vmul.f32 %v1414, %v1628
        %v1633 = vmul.f32 %v1411, %v1624
        %v1634 = vmul.f32 %v1412, %v1628
        %v1635 = vmul.f32 %v1409, %v1624
        %v1636 = vmul.f32 %v1410, %v1628
        %v1637 = vmul.f32 %v1407, %v1624
        %v1638 = vmul.f32 %v1408, %v1628
        %v1639 = vmul.f32 %v1405, %v1624
        %v1640 = vmul.f32 %v1406, %v1628
        %v1641 = vmul.f32 %v1403, %v1624
        %v1642 = vmul.f32 %v1404, %v1628
        %v1643 = vmul.f32 %v1401, %v1624
        %v1644 = vmul.f32 %v1402, %v1628
        %v1645 = vmul.f32 %v1399, %v1624
        %v1646 = vmul.f32 %v1400, %v1628
        %v1647 = vmul.f32 %v1397, %v1624
        %v1648 = vmul.f32 %v1398, %v1628
        %v1649 = vmul.f32 %v1395, %v1624
        %v1650 = vmul.f32 %v1396, %v1628
        %v1651 = vmul.f32 %v1393, %v1624
        %v1652 = vmul.f32 %v1394, %v1628
        %v1653 = vmul.f32 %v1391, %v1624
        %v1654 = vmul.f32 %v1392, %v1628
        %v1655 = vmul.f32 %v1389, %v1624
        %v1656 = vmul.f32 %v1390, %v1628
        %v1657 = vmul.f32 %v1387, %v1624
        %v1658 = vmul.f32 %v1388, %v1628
        %v1659 = vmul.f32 %v1385, %v1624
        %v1660 = vmul.f32 %v1386, %v1628
        %v1661 = vmul.f32 %v1383, %v1624
        %v1662 = vmul.f32 %v1384, %v1628
        %v1663 = vmul.f32 %v1381, %v1624
        %v1664 = vmul.f32 %v1382, %v1628
        %v1665 = vmul.f32 %v1379, %v1624
        %v1666 = vmul.f32 %v1380, %v1628
        %v1667 = vmul.f32 %v1377, %v1624
        %v1668 = vmul.f32 %v1378, %v1628
        %v1669 = vmul.f32 %v1375, %v1624
        %v1670 = vmul.f32 %v1376, %v1628
        %v1671 = vmul.f32 %v1373, %v1624
        %v1672 = vmul.f32 %v1374, %v1628
        %v1673 = vmul.f32 %v1371, %v1624
        %v1674 = vmul.f32 %v1372, %v1628
        %v1675 = vmul.f32 %v1369, %v1624
        %v1676 = vmul.f32 %v1370, %v1628
        %v1677 = vmul.f32 %v1367, %v1624
        %v1678 = vmul.f32 %v1368, %v1628
        %v1679 = vmul.f32 %v1365, %v1624
        %v1680 = vmul.f32 %v1366, %v1628
        %v1681 = vmul.f32 %v1363, %v1624
        %v1682 = vmul.f32 %v1364, %v1628
        %v1683 = vmul.f32 %v1361, %v1624
        %v1684 = vmul.f32 %v1362, %v1628
        %v1685 = vmul.f32 %v1359, %v1624
        %v1686 = vmul.f32 %v1360, %v1628
        %v1687 = vmul.f32 %v1357, %v1624
        %v1688 = vmul.f32 %v1358, %v1628
        %v1689 = vmul.f32 %v1355, %v1624
        %v1690 = vmul.f32 %v1356, %v1628
        %v1691 = vmul.f32 %v1353, %v1624
        %v1692 = vmul.f32 %v1354, %v1628
        %v1693 = vlaneseq
        %v1694 = vshrl.u32 %v1693, 7
        %v1695 = vsub.s32 1, %v1694
        %v1696 = vrot.slane %v1219, %v1695
        %v1697 = vlaneseq
        %v1698 = vshrl.u32 %v1697, 7
        %v1699 = vsub.s32 5, %v1698
        %v1700 = vrot.slane %v1219, %v1699
        %v1703 = vlaneseq
        %v1704 = vshrl.u32 %v1703, 7
        %v1705 = vsub.s32 1, %v1704
        %v1706 = vrot.slane %v1696, %v1705
        %v1707 = vlaneseq
        %v1708 = vshrl.u32 %v1707, 7
        %v1709 = vsub.s32 1, %v1708
        %v1710 = vrot.slane %v1700, %v1709
        %v1711 = vmul.f32 %v484, %v1706
        %v1712 = vmul.f32 %v486, %v1710
        %v1713 = vmul.f32 %v490, %v1706
        %v1714 = vmul.f32 %v492, %v1710
        %v1715 = vmul.f32 %v496, %v1706
        %v1716 = vmul.f32 %v498, %v1710
        %v1717 = vmul.f32 %v502, %v1706
        %v1718 = vmul.f32 %v504, %v1710
        %v1719 = vmul.f32 %v508, %v1706
        %v1720 = vmul.f32 %v510, %v1710
        %v1721 = vmul.f32 %v514, %v1706
        %v1722 = vmul.f32 %v516, %v1710
        %v1723 = vmul.f32 %v520, %v1706
        %v1724 = vmul.f32 %v522, %v1710
        %v1725 = vmul.f32 %v526, %v1706
        %v1726 = vmul.f32 %v528, %v1710
        %v1727 = vmul.f32 %v532, %v1706
        %v1728 = vmul.f32 %v534, %v1710
        %v1729 = vmul.f32 %v538, %v1706
        %v1730 = vmul.f32 %v540, %v1710
        %v1731 = vmul.f32 %v544, %v1706
        %v1732 = vmul.f32 %v546, %v1710
        %v1733 = vmul.f32 %v550, %v1706
        %v1734 = vmul.f32 %v552, %v1710
        %v1735 = vmul.f32 %v556, %v1706
        %v1736 = vmul.f32 %v558, %v1710
        %v1737 = vmul.f32 %v562, %v1706
        %v1738 = vmul.f32 %v564, %v1710
        %v1739 = vmul.f32 %v568, %v1706
        %v1740 = vmul.f32 %v570, %v1710
        %v1741 = vmul.f32 %v574, %v1706
        %v1742 = vmul.f32 %v576, %v1710
        %v1743 = vmul.f32 %v580, %v1706
        %v1744 = vmul.f32 %v582, %v1710
        %v1745 = vmul.f32 %v586, %v1706
        %v1746 = vmul.f32 %v588, %v1710
        %v1747 = vmul.f32 %v592, %v1706
        %v1748 = vmul.f32 %v594, %v1710
        %v1749 = vmul.f32 %v598, %v1706
        %v1750 = vmul.f32 %v600, %v1710
        %v1751 = vmul.f32 %v604, %v1706
        %v1752 = vmul.f32 %v606, %v1710
        %v1753 = vmul.f32 %v610, %v1706
        %v1754 = vmul.f32 %v612, %v1710
        %v1755 = vmul.f32 %v616, %v1706
        %v1756 = vmul.f32 %v618, %v1710
        %v1757 = vmul.f32 %v622, %v1706
        %v1758 = vmul.f32 %v624, %v1710
        %v1759 = vmul.f32 %v628, %v1706
        %v1760 = vmul.f32 %v630, %v1710
        %v1761 = vmul.f32 %v634, %v1706
        %v1762 = vmul.f32 %v636, %v1710
        %v1763 = vmul.f32 %v640, %v1706
        %v1764 = vmul.f32 %v642, %v1710
        %v1765 = vmul.f32 %v646, %v1706
        %v1766 = vmul.f32 %v648, %v1710
        %v1767 = vmul.f32 %v652, %v1706
        %v1768 = vmul.f32 %v654, %v1710
        %v1769 = vmul.f32 %v658, %v1706
        %v1770 = vmul.f32 %v660, %v1710
        %v1771 = vmul.f32 %v664, %v1706
        %v1772 = vmul.f32 %v666, %v1710
        %v1773 = vmul.f32 %v670, %v1706
        %v1774 = vmul.f32 %v672, %v1710
        %v1775 = vadd.f32 %v1629, %v1711
        %v1776 = vadd.f32 %v1630, %v1712
        %v1777 = vadd.f32 %v1631, %v1713
        %v1778 = vadd.f32 %v1632, %v1714
        %v1779 = vadd.f32 %v1633, %v1715
        %v1780 = vadd.f32 %v1634, %v1716
        %v1781 = vadd.f32 %v1635, %v1717
        %v1782 = vadd.f32 %v1636, %v1718
        %v1783 = vadd.f32 %v1637, %v1719
        %v1784 = vadd.f32 %v1638, %v1720
        %v1785 = vadd.f32 %v1639, %v1721
        %v1786 = vadd.f32 %v1640, %v1722
        %v1787 = vadd.f32 %v1641, %v1723
        %v1788 = vadd.f32 %v1642, %v1724
        %v1789 = vadd.f32 %v1643, %v1725
        %v1790 = vadd.f32 %v1644, %v1726
        %v1791 = vadd.f32 %v1645, %v1727
        %v1792 = vadd.f32 %v1646, %v1728
        %v1793 = vadd.f32 %v1647, %v1729
        %v1794 = vadd.f32 %v1648, %v1730
        %v1795 = vadd.f32 %v1649, %v1731
        %v1796 = vadd.f32 %v1650, %v1732
        %v1797 = vadd.f32 %v1651, %v1733
        %v1798 = vadd.f32 %v1652, %v1734
        %v1799 = vadd.f32 %v1653, %v1735
        %v1800 = vadd.f32 %v1654, %v1736
        %v1801 = vadd.f32 %v1655, %v1737
        %v1802 = vadd.f32 %v1656, %v1738
        %v1803 = vadd.f32 %v1657, %v1739
        %v1804 = vadd.f32 %v1658, %v1740
        %v1805 = vadd.f32 %v1659, %v1741
        %v1806 = vadd.f32 %v1660, %v1742
        %v1807 = vadd.f32 %v1661, %v1743
        %v1808 = vadd.f32 %v1662, %v1744
        %v1809 = vadd.f32 %v1663, %v1745
        %v1810 = vadd.f32 %v1664, %v1746
        %v1811 = vadd.f32 %v1665, %v1747
        %v1812 = vadd.f32 %v1666, %v1748
        %v1813 = vadd.f32 %v1667, %v1749
        %v1814 = vadd.f32 %v1668, %v1750
        %v1815 = vadd.f32 %v1669, %v1751
        %v1816 = vadd.f32 %v1670, %v1752
        %v1817 = vadd.f32 %v1671, %v1753
        %v1818 = vadd.f32 %v1672, %v1754
        %v1819 = vadd.f32 %v1673, %v1755
        %v1820 = vadd.f32 %v1674, %v1756
        %v1821 = vadd.f32 %v1675, %v1757
        %v1822 = vadd.f32 %v1676, %v1758
        %v1823 = vadd.f32 %v1677, %v1759
        %v1824 = vadd.f32 %v1678, %v1760
        %v1825 = vadd.f32 %v1679, %v1761
        %v1826 = vadd.f32 %v1680, %v1762
        %v1827 = vadd.f32 %v1681, %v1763
        %v1828 = vadd.f32 %v1682, %v1764
        %v1829 = vadd.f32 %v1683, %v1765
        %v1830 = vadd.f32 %v1684, %v1766
        %v1831 = vadd.f32 %v1685, %v1767
        %v1832 = vadd.f32 %v1686, %v1768
        %v1833 = vadd.f32 %v1687, %v1769
        %v1834 = vadd.f32 %v1688, %v1770
        %v1835 = vadd.f32 %v1689, %v1771
        %v1836 = vadd.f32 %v1690, %v1772
        %v1837 = vadd.f32 %v1691, %v1773
        %v1838 = vadd.f32 %v1692, %v1774
        %v1839 = vlaneseq
        %v1840 = vshrl.u32 %v1839, 7
        %v1841 = vsub.s32 2, %v1840
        %v1842 = vrot.slane %v1219, %v1841
        %v1843 = vlaneseq
        %v1844 = vshrl.u32 %v1843, 7
        %v1845 = vsub.s32 6, %v1844
        %v1846 = vrot.slane %v1219, %v1845
        %v1849 = vlaneseq
        %v1850 = vshrl.u32 %v1849, 7
        %v1851 = vsub.s32 2, %v1850
        %v1852 = vrot.slane %v1842, %v1851
        %v1853 = vlaneseq
        %v1854 = vshrl.u32 %v1853, 7
        %v1855 = vsub.s32 2, %v1854
        %v1856 = vrot.slane %v1846, %v1855
        %v1857 = vmul.f32 %v1606, %v1852
        %v1858 = vmul.f32 %v1607, %v1856
        %v1859 = vmul.f32 %v1604, %v1852
        %v1860 = vmul.f32 %v1605, %v1856
        %v1861 = vmul.f32 %v1602, %v1852
        %v1862 = vmul.f32 %v1603, %v1856
        %v1863 = vmul.f32 %v1600, %v1852
        %v1864 = vmul.f32 %v1601, %v1856
        %v1865 = vmul.f32 %v1598, %v1852
        %v1866 = vmul.f32 %v1599, %v1856
        %v1867 = vmul.f32 %v1596, %v1852
        %v1868 = vmul.f32 %v1597, %v1856
        %v1869 = vmul.f32 %v1594, %v1852
        %v1870 = vmul.f32 %v1595, %v1856
        %v1871 = vmul.f32 %v1592, %v1852
        %v1872 = vmul.f32 %v1593, %v1856
        %v1873 = vmul.f32 %v1590, %v1852
        %v1874 = vmul.f32 %v1591, %v1856
        %v1875 = vmul.f32 %v1588, %v1852
        %v1876 = vmul.f32 %v1589, %v1856
        %v1877 = vmul.f32 %v1586, %v1852
        %v1878 = vmul.f32 %v1587, %v1856
        %v1879 = vmul.f32 %v1584, %v1852
        %v1880 = vmul.f32 %v1585, %v1856
        %v1881 = vmul.f32 %v1582, %v1852
        %v1882 = vmul.f32 %v1583, %v1856
        %v1883 = vmul.f32 %v1580, %v1852
        %v1884 = vmul.f32 %v1581, %v1856
        %v1885 = vmul.f32 %v1578, %v1852
        %v1886 = vmul.f32 %v1579, %v1856
        %v1887 = vmul.f32 %v1576, %v1852
        %v1888 = vmul.f32 %v1577, %v1856
        %v1889 = vmul.f32 %v1574, %v1852
        %v1890 = vmul.f32 %v1575, %v1856
        %v1891 = vmul.f32 %v1572, %v1852
        %v1892 = vmul.f32 %v1573, %v1856
        %v1893 = vmul.f32 %v1570, %v1852
        %v1894 = vmul.f32 %v1571, %v1856
        %v1895 = vmul.f32 %v1568, %v1852
        %v1896 = vmul.f32 %v1569, %v1856
        %v1897 = vmul.f32 %v1566, %v1852
        %v1898 = vmul.f32 %v1567, %v1856
        %v1899 = vmul.f32 %v1564, %v1852
        %v1900 = vmul.f32 %v1565, %v1856
        %v1901 = vmul.f32 %v1562, %v1852
        %v1902 = vmul.f32 %v1563, %v1856
        %v1903 = vmul.f32 %v1560, %v1852
        %v1904 = vmul.f32 %v1561, %v1856
        %v1905 = vmul.f32 %v1558, %v1852
        %v1906 = vmul.f32 %v1559, %v1856
        %v1907 = vmul.f32 %v1556, %v1852
        %v1908 = vmul.f32 %v1557, %v1856
        %v1909 = vmul.f32 %v1554, %v1852
        %v1910 = vmul.f32 %v1555, %v1856
        %v1911 = vmul.f32 %v1552, %v1852
        %v1912 = vmul.f32 %v1553, %v1856
        %v1913 = vmul.f32 %v1550, %v1852
        %v1914 = vmul.f32 %v1551, %v1856
        %v1915 = vmul.f32 %v1548, %v1852
        %v1916 = vmul.f32 %v1549, %v1856
        %v1917 = vmul.f32 %v1546, %v1852
        %v1918 = vmul.f32 %v1547, %v1856
        %v1919 = vmul.f32 %v1608, %v1852
        %v1920 = vmul.f32 %v1609, %v1856
        %v1921 = vadd.f32 %v1775, %v1857
        %v1922 = vadd.f32 %v1776, %v1858
        %v1923 = vadd.f32 %v1777, %v1859
        %v1924 = vadd.f32 %v1778, %v1860
        %v1925 = vadd.f32 %v1779, %v1861
        %v1926 = vadd.f32 %v1780, %v1862
        %v1927 = vadd.f32 %v1781, %v1863
        %v1928 = vadd.f32 %v1782, %v1864
        %v1929 = vadd.f32 %v1783, %v1865
        %v1930 = vadd.f32 %v1784, %v1866
        %v1931 = vadd.f32 %v1785, %v1867
        %v1932 = vadd.f32 %v1786, %v1868
        %v1933 = vadd.f32 %v1787, %v1869
        %v1934 = vadd.f32 %v1788, %v1870
        %v1935 = vadd.f32 %v1789, %v1871
        %v1936 = vadd.f32 %v1790, %v1872
        %v1937 = vadd.f32 %v1791, %v1873
        %v1938 = vadd.f32 %v1792, %v1874
        %v1939 = vadd.f32 %v1793, %v1875
        %v1940 = vadd.f32 %v1794, %v1876
        %v1941 = vadd.f32 %v1795, %v1877
        %v1942 = vadd.f32 %v1796, %v1878
        %v1943 = vadd.f32 %v1797, %v1879
        %v1944 = vadd.f32 %v1798, %v1880
        %v1945 = vadd.f32 %v1799, %v1881
        %v1946 = vadd.f32 %v1800, %v1882
        %v1947 = vadd.f32 %v1801, %v1883
        %v1948 = vadd.f32 %v1802, %v1884
        %v1949 = vadd.f32 %v1803, %v1885
        %v1950 = vadd.f32 %v1804, %v1886
        %v1951 = vadd.f32 %v1805, %v1887
        %v1952 = vadd.f32 %v1806, %v1888
        %v1953 = vadd.f32 %v1807, %v1889
        %v1954 = vadd.f32 %v1808, %v1890
        %v1955 = vadd.f32 %v1809, %v1891
        %v1956 = vadd.f32 %v1810, %v1892
        %v1957 = vadd.f32 %v1811, %v1893
        %v1958 = vadd.f32 %v1812, %v1894
        %v1959 = vadd.f32 %v1813, %v1895
        %v1960 = vadd.f32 %v1814, %v1896
        %v1961 = vadd.f32 %v1815, %v1897
        %v1962 = vadd.f32 %v1816, %v1898
        %v1963 = vadd.f32 %v1817, %v1899
        %v1964 = vadd.f32 %v1818, %v1900
        %v1965 = vadd.f32 %v1819, %v1901
        %v1966 = vadd.f32 %v1820, %v1902
        %v1967 = vadd.f32 %v1821, %v1903
        %v1968 = vadd.f32 %v1822, %v1904
        %v1969 = vadd.f32 %v1823, %v1905
        %v1970 = vadd.f32 %v1824, %v1906
        %v1971 = vadd.f32 %v1825, %v1907
        %v1972 = vadd.f32 %v1826, %v1908
        %v1973 = vadd.f32 %v1827, %v1909
        %v1974 = vadd.f32 %v1828, %v1910
        %v1975 = vadd.f32 %v1829, %v1911
        %v1976 = vadd.f32 %v1830, %v1912
        %v1977 = vadd.f32 %v1831, %v1913
        %v1978 = vadd.f32 %v1832, %v1914
        %v1979 = vadd.f32 %v1833, %v1915
        %v1980 = vadd.f32 %v1834, %v1916
        %v1981 = vadd.f32 %v1835, %v1917
        %v1982 = vadd.f32 %v1836, %v1918
        %v1983 = vadd.f32 %v1837, %v1919
        %v1984 = vadd.f32 %v1838, %v1920
        %v1986 = vlaneseq
        %v1987 = vshrl.u32 %v1986, 7
        %v1988 = vsub.s32 0, %v1987
        %v1989 = vrot.slane %v1220, %v1988
        %v1990 = vlaneseq
        %v1991 = vshrl.u32 %v1990, 7
        %v1992 = vsub.s32 4, %v1991
        %v1993 = vrot.slane %v1220, %v1992
        %v1996 = vlaneseq
        %v1997 = vshrl.u32 %v1996, 7
        %v1998 = vsub.s32 0, %v1997
        %v1999 = vrot.slane %v1989, %v1998
        %v2000 = vlaneseq
        %v2001 = vshrl.u32 %v2000, 7
        %v2002 = vsub.s32 0, %v2001
        %v2003 = vrot.slane %v1993, %v2002
        %v2004 = vmul.f32 %v1415, %v1999
        %v2005 = vmul.f32 %v1416, %v2003
        %v2006 = vmul.f32 %v1413, %v1999
        %v2007 = vmul.f32 %v1414, %v2003
        %v2008 = vmul.f32 %v1411, %v1999
        %v2009 = vmul.f32 %v1412, %v2003
        %v2010 = vmul.f32 %v1409, %v1999
        %v2011 = vmul.f32 %v1410, %v2003
        %v2012 = vmul.f32 %v1407, %v1999
        %v2013 = vmul.f32 %v1408, %v2003
        %v2014 = vmul.f32 %v1405, %v1999
        %v2015 = vmul.f32 %v1406, %v2003
        %v2016 = vmul.f32 %v1403, %v1999
        %v2017 = vmul.f32 %v1404, %v2003
        %v2018 = vmul.f32 %v1401, %v1999
        %v2019 = vmul.f32 %v1402, %v2003
        %v2020 = vmul.f32 %v1399, %v1999
        %v2021 = vmul.f32 %v1400, %v2003
        %v2022 = vmul.f32 %v1397, %v1999
        %v2023 = vmul.f32 %v1398, %v2003
        %v2024 = vmul.f32 %v1395, %v1999
        %v2025 = vmul.f32 %v1396, %v2003
        %v2026 = vmul.f32 %v1393, %v1999
        %v2027 = vmul.f32 %v1394, %v2003
        %v2028 = vmul.f32 %v1391, %v1999
        %v2029 = vmul.f32 %v1392, %v2003
        %v2030 = vmul.f32 %v1389, %v1999
        %v2031 = vmul.f32 %v1390, %v2003
        %v2032 = vmul.f32 %v1387, %v1999
        %v2033 = vmul.f32 %v1388, %v2003
        %v2034 = vmul.f32 %v1385, %v1999
        %v2035 = vmul.f32 %v1386, %v2003
        %v2036 = vmul.f32 %v1383, %v1999
        %v2037 = vmul.f32 %v1384, %v2003
        %v2038 = vmul.f32 %v1381, %v1999
        %v2039 = vmul.f32 %v1382, %v2003
        %v2040 = vmul.f32 %v1379, %v1999
        %v2041 = vmul.f32 %v1380, %v2003
        %v2042 = vmul.f32 %v1377, %v1999
        %v2043 = vmul.f32 %v1378, %v2003
        %v2044 = vmul.f32 %v1375, %v1999
        %v2045 = vmul.f32 %v1376, %v2003
        %v2046 = vmul.f32 %v1373, %v1999
        %v2047 = vmul.f32 %v1374, %v2003
        %v2048 = vmul.f32 %v1371, %v1999
        %v2049 = vmul.f32 %v1372, %v2003
        %v2050 = vmul.f32 %v1369, %v1999
        %v2051 = vmul.f32 %v1370, %v2003
        %v2052 = vmul.f32 %v1367, %v1999
        %v2053 = vmul.f32 %v1368, %v2003
        %v2054 = vmul.f32 %v1365, %v1999
        %v2055 = vmul.f32 %v1366, %v2003
        %v2056 = vmul.f32 %v1363, %v1999
        %v2057 = vmul.f32 %v1364, %v2003
        %v2058 = vmul.f32 %v1361, %v1999
        %v2059 = vmul.f32 %v1362, %v2003
        %v2060 = vmul.f32 %v1359, %v1999
        %v2061 = vmul.f32 %v1360, %v2003
        %v2062 = vmul.f32 %v1357, %v1999
        %v2063 = vmul.f32 %v1358, %v2003
        %v2064 = vmul.f32 %v1355, %v1999
        %v2065 = vmul.f32 %v1356, %v2003
        %v2066 = vmul.f32 %v1353, %v1999
        %v2067 = vmul.f32 %v1354, %v2003
        %v2068 = vlaneseq
        %v2069 = vshrl.u32 %v2068, 7
        %v2070 = vsub.s32 1, %v2069
        %v2071 = vrot.slane %v1220, %v2070
        %v2072 = vlaneseq
        %v2073 = vshrl.u32 %v2072, 7
        %v2074 = vsub.s32 5, %v2073
        %v2075 = vrot.slane %v1220, %v2074
        %v2078 = vlaneseq
        %v2079 = vshrl.u32 %v2078, 7
        %v2080 = vsub.s32 1, %v2079
        %v2081 = vrot.slane %v2071, %v2080
        %v2082 = vlaneseq
        %v2083 = vshrl.u32 %v2082, 7
        %v2084 = vsub.s32 1, %v2083
        %v2085 = vrot.slane %v2075, %v2084
        %v2086 = vmul.f32 %v484, %v2081
        %v2087 = vmul.f32 %v486, %v2085
        %v2088 = vmul.f32 %v490, %v2081
        %v2089 = vmul.f32 %v492, %v2085
        %v2090 = vmul.f32 %v496, %v2081
        %v2091 = vmul.f32 %v498, %v2085
        %v2092 = vmul.f32 %v502, %v2081
        %v2093 = vmul.f32 %v504, %v2085
        %v2094 = vmul.f32 %v508, %v2081
        %v2095 = vmul.f32 %v510, %v2085
        %v2096 = vmul.f32 %v514, %v2081
        %v2097 = vmul.f32 %v516, %v2085
        %v2098 = vmul.f32 %v520, %v2081
        %v2099 = vmul.f32 %v522, %v2085
        %v2100 = vmul.f32 %v526, %v2081
        %v2101 = vmul.f32 %v528, %v2085
        %v2102 = vmul.f32 %v532, %v2081
        %v2103 = vmul.f32 %v534, %v2085
        %v2104 = vmul.f32 %v538, %v2081
        %v2105 = vmul.f32 %v540, %v2085
        %v2106 = vmul.f32 %v544, %v2081
        %v2107 = vmul.f32 %v546, %v2085
        %v2108 = vmul.f32 %v550, %v2081
        %v2109 = vmul.f32 %v552, %v2085
        %v2110 = vmul.f32 %v556, %v2081
        %v2111 = vmul.f32 %v558, %v2085
        %v2112 = vmul.f32 %v562, %v2081
        %v2113 = vmul.f32 %v564, %v2085
        %v2114 = vmul.f32 %v568, %v2081
        %v2115 = vmul.f32 %v570, %v2085
        %v2116 = vmul.f32 %v574, %v2081
        %v2117 = vmul.f32 %v576, %v2085
        %v2118 = vmul.f32 %v580, %v2081
        %v2119 = vmul.f32 %v582, %v2085
        %v2120 = vmul.f32 %v586, %v2081
        %v2121 = vmul.f32 %v588, %v2085
        %v2122 = vmul.f32 %v592, %v2081
        %v2123 = vmul.f32 %v594, %v2085
        %v2124 = vmul.f32 %v598, %v2081
        %v2125 = vmul.f32 %v600, %v2085
        %v2126 = vmul.f32 %v604, %v2081
        %v2127 = vmul.f32 %v606, %v2085
        %v2128 = vmul.f32 %v610, %v2081
        %v2129 = vmul.f32 %v612, %v2085
        %v2130 = vmul.f32 %v616, %v2081
        %v2131 = vmul.f32 %v618, %v2085
        %v2132 = vmul.f32 %v622, %v2081
        %v2133 = vmul.f32 %v624, %v2085
        %v2134 = vmul.f32 %v628, %v2081
        %v2135 = vmul.f32 %v630, %v2085
        %v2136 = vmul.f32 %v634, %v2081
        %v2137 = vmul.f32 %v636, %v2085
        %v2138 = vmul.f32 %v640, %v2081
        %v2139 = vmul.f32 %v642, %v2085
        %v2140 = vmul.f32 %v646, %v2081
        %v2141 = vmul.f32 %v648, %v2085
        %v2142 = vmul.f32 %v652, %v2081
        %v2143 = vmul.f32 %v654, %v2085
        %v2144 = vmul.f32 %v658, %v2081
        %v2145 = vmul.f32 %v660, %v2085
        %v2146 = vmul.f32 %v664, %v2081
        %v2147 = vmul.f32 %v666, %v2085
        %v2148 = vmul.f32 %v670, %v2081
        %v2149 = vmul.f32 %v672, %v2085
        %v2150 = vadd.f32 %v2004, %v2086
        %v2151 = vadd.f32 %v2005, %v2087
        %v2152 = vadd.f32 %v2006, %v2088
        %v2153 = vadd.f32 %v2007, %v2089
        %v2154 = vadd.f32 %v2008, %v2090
        %v2155 = vadd.f32 %v2009, %v2091
        %v2156 = vadd.f32 %v2010, %v2092
        %v2157 = vadd.f32 %v2011, %v2093
        %v2158 = vadd.f32 %v2012, %v2094
        %v2159 = vadd.f32 %v2013, %v2095
        %v2160 = vadd.f32 %v2014, %v2096
        %v2161 = vadd.f32 %v2015, %v2097
        %v2162 = vadd.f32 %v2016, %v2098
        %v2163 = vadd.f32 %v2017, %v2099
        %v2164 = vadd.f32 %v2018, %v2100
        %v2165 = vadd.f32 %v2019, %v2101
        %v2166 = vadd.f32 %v2020, %v2102
        %v2167 = vadd.f32 %v2021, %v2103
        %v2168 = vadd.f32 %v2022, %v2104
        %v2169 = vadd.f32 %v2023, %v2105
        %v2170 = vadd.f32 %v2024, %v2106
        %v2171 = vadd.f32 %v2025, %v2107
        %v2172 = vadd.f32 %v2026, %v2108
        %v2173 = vadd.f32 %v2027, %v2109
        %v2174 = vadd.f32 %v2028, %v2110
        %v2175 = vadd.f32 %v2029, %v2111
        %v2176 = vadd.f32 %v2030, %v2112
        %v2177 = vadd.f32 %v2031, %v2113
        %v2178 = vadd.f32 %v2032, %v2114
        %v2179 = vadd.f32 %v2033, %v2115
        %v2180 = vadd.f32 %v2034, %v2116
        %v2181 = vadd.f32 %v2035, %v2117
        %v2182 = vadd.f32 %v2036, %v2118
        %v2183 = vadd.f32 %v2037, %v2119
        %v2184 = vadd.f32 %v2038, %v2120
        %v2185 = vadd.f32 %v2039, %v2121
        %v2186 = vadd.f32 %v2040, %v2122
        %v2187 = vadd.f32 %v2041, %v2123
        %v2188 = vadd.f32 %v2042, %v2124
        %v2189 = vadd.f32 %v2043, %v2125
        %v2190 = vadd.f32 %v2044, %v2126
        %v2191 = vadd.f32 %v2045, %v2127
        %v2192 = vadd.f32 %v2046, %v2128
        %v2193 = vadd.f32 %v2047, %v2129
        %v2194 = vadd.f32 %v2048, %v2130
        %v2195 = vadd.f32 %v2049, %v2131
        %v2196 = vadd.f32 %v2050, %v2132
        %v2197 = vadd.f32 %v2051, %v2133
        %v2198 = vadd.f32 %v2052, %v2134
        %v2199 = vadd.f32 %v2053, %v2135
        %v2200 = vadd.f32 %v2054, %v2136
        %v2201 = vadd.f32 %v2055, %v2137
        %v2202 = vadd.f32 %v2056, %v2138
        %v2203 = vadd.f32 %v2057, %v2139
        %v2204 = vadd.f32 %v2058, %v2140
        %v2205 = vadd.f32 %v2059, %v2141
        %v2206 = vadd.f32 %v2060, %v2142
        %v2207 = vadd.f32 %v2061, %v2143
        %v2208 = vadd.f32 %v2062, %v2144
        %v2209 = vadd.f32 %v2063, %v2145
        %v2210 = vadd.f32 %v2064, %v2146
        %v2211 = vadd.f32 %v2065, %v2147
        %v2212 = vadd.f32 %v2066, %v2148
        %v2213 = vadd.f32 %v2067, %v2149
        %v2214 = vlaneseq
        %v2215 = vshrl.u32 %v2214, 7
        %v2216 = vsub.s32 2, %v2215
        %v2217 = vrot.slane %v1220, %v2216
        %v2218 = vlaneseq
        %v2219 = vshrl.u32 %v2218, 7
        %v2220 = vsub.s32 6, %v2219
        %v2221 = vrot.slane %v1220, %v2220
        %v2224 = vlaneseq
        %v2225 = vshrl.u32 %v2224, 7
        %v2226 = vsub.s32 2, %v2225
        %v2227 = vrot.slane %v2217, %v2226
        %v2228 = vlaneseq
        %v2229 = vshrl.u32 %v2228, 7
        %v2230 = vsub.s32 2, %v2229
        %v2231 = vrot.slane %v2221, %v2230
        %v2232 = vmul.f32 %v1606, %v2227
        %v2233 = vmul.f32 %v1607, %v2231
        %v2234 = vmul.f32 %v1604, %v2227
        %v2235 = vmul.f32 %v1605, %v2231
        %v2236 = vmul.f32 %v1602, %v2227
        %v2237 = vmul.f32 %v1603, %v2231
        %v2238 = vmul.f32 %v1600, %v2227
        %v2239 = vmul.f32 %v1601, %v2231
        %v2240 = vmul.f32 %v1598, %v2227
        %v2241 = vmul.f32 %v1599, %v2231
        %v2242 = vmul.f32 %v1596, %v2227
        %v2243 = vmul.f32 %v1597, %v2231
        %v2244 = vmul.f32 %v1594, %v2227
        %v2245 = vmul.f32 %v1595, %v2231
        %v2246 = vmul.f32 %v1592, %v2227
        %v2247 = vmul.f32 %v1593, %v2231
        %v2248 = vmul.f32 %v1590, %v2227
        %v2249 = vmul.f32 %v1591, %v2231
        %v2250 = vmul.f32 %v1588, %v2227
        %v2251 = vmul.f32 %v1589, %v2231
        %v2252 = vmul.f32 %v1586, %v2227
        %v2253 = vmul.f32 %v1587, %v2231
        %v2254 = vmul.f32 %v1584, %v2227
        %v2255 = vmul.f32 %v1585, %v2231
        %v2256 = vmul.f32 %v1582, %v2227
        %v2257 = vmul.f32 %v1583, %v2231
        %v2258 = vmul.f32 %v1580, %v2227
        %v2259 = vmul.f32 %v1581, %v2231
        %v2260 = vmul.f32 %v1578, %v2227
        %v2261 = vmul.f32 %v1579, %v2231
        %v2262 = vmul.f32 %v1576, %v2227
        %v2263 = vmul.f32 %v1577, %v2231
        %v2264 = vmul.f32 %v1574, %v2227
        %v2265 = vmul.f32 %v1575, %v2231
        %v2266 = vmul.f32 %v1572, %v2227
        %v2267 = vmul.f32 %v1573, %v2231
        %v2268 = vmul.f32 %v1570, %v2227
        %v2269 = vmul.f32 %v1571, %v2231
        %v2270 = vmul.f32 %v1568, %v2227
        %v2271 = vmul.f32 %v1569, %v2231
        %v2272 = vmul.f32 %v1566, %v2227
        %v2273 = vmul.f32 %v1567, %v2231
        %v2274 = vmul.f32 %v1564, %v2227
        %v2275 = vmul.f32 %v1565, %v2231
        %v2276 = vmul.f32 %v1562, %v2227
        %v2277 = vmul.f32 %v1563, %v2231
        %v2278 = vmul.f32 %v1560, %v2227
        %v2279 = vmul.f32 %v1561, %v2231
        %v2280 = vmul.f32 %v1558, %v2227
        %v2281 = vmul.f32 %v1559, %v2231
        %v2282 = vmul.f32 %v1556, %v2227
        %v2283 = vmul.f32 %v1557, %v2231
        %v2284 = vmul.f32 %v1554, %v2227
        %v2285 = vmul.f32 %v1555, %v2231
        %v2286 = vmul.f32 %v1552, %v2227
        %v2287 = vmul.f32 %v1553, %v2231
        %v2288 = vmul.f32 %v1550, %v2227
        %v2289 = vmul.f32 %v1551, %v2231
        %v2290 = vmul.f32 %v1548, %v2227
        %v2291 = vmul.f32 %v1549, %v2231
        %v2292 = vmul.f32 %v1546, %v2227
        %v2293 = vmul.f32 %v1547, %v2231
        %v2294 = vmul.f32 %v1608, %v2227
        %v2295 = vmul.f32 %v1609, %v2231
        %v2296 = vadd.f32 %v2150, %v2232
        %v2297 = vadd.f32 %v2151, %v2233
        %v2298 = vadd.f32 %v2152, %v2234
        %v2299 = vadd.f32 %v2153, %v2235
        %v2300 = vadd.f32 %v2154, %v2236
        %v2301 = vadd.f32 %v2155, %v2237
        %v2302 = vadd.f32 %v2156, %v2238
        %v2303 = vadd.f32 %v2157, %v2239
        %v2304 = vadd.f32 %v2158, %v2240
        %v2305 = vadd.f32 %v2159, %v2241
        %v2306 = vadd.f32 %v2160, %v2242
        %v2307 = vadd.f32 %v2161, %v2243
        %v2308 = vadd.f32 %v2162, %v2244
        %v2309 = vadd.f32 %v2163, %v2245
        %v2310 = vadd.f32 %v2164, %v2246
        %v2311 = vadd.f32 %v2165, %v2247
        %v2312 = vadd.f32 %v2166, %v2248
        %v2313 = vadd.f32 %v2167, %v2249
        %v2314 = vadd.f32 %v2168, %v2250
        %v2315 = vadd.f32 %v2169, %v2251
        %v2316 = vadd.f32 %v2170, %v2252
        %v2317 = vadd.f32 %v2171, %v2253
        %v2318 = vadd.f32 %v2172, %v2254
        %v2319 = vadd.f32 %v2173, %v2255
        %v2320 = vadd.f32 %v2174, %v2256
        %v2321 = vadd.f32 %v2175, %v2257
        %v2322 = vadd.f32 %v2176, %v2258
        %v2323 = vadd.f32 %v2177, %v2259
        %v2324 = vadd.f32 %v2178, %v2260
        %v2325 = vadd.f32 %v2179, %v2261
        %v2326 = vadd.f32 %v2180, %v2262
        %v2327 = vadd.f32 %v2181, %v2263
        %v2328 = vadd.f32 %v2182, %v2264
        %v2329 = vadd.f32 %v2183, %v2265
        %v2330 = vadd.f32 %v2184, %v2266
        %v2331 = vadd.f32 %v2185, %v2267
        %v2332 = vadd.f32 %v2186, %v2268
        %v2333 = vadd.f32 %v2187, %v2269
        %v2334 = vadd.f32 %v2188, %v2270
        %v2335 = vadd.f32 %v2189, %v2271
        %v2336 = vadd.f32 %v2190, %v2272
        %v2337 = vadd.f32 %v2191, %v2273
        %v2338 = vadd.f32 %v2192, %v2274
        %v2339 = vadd.f32 %v2193, %v2275
        %v2340 = vadd.f32 %v2194, %v2276
        %v2341 = vadd.f32 %v2195, %v2277
        %v2342 = vadd.f32 %v2196, %v2278
        %v2343 = vadd.f32 %v2197, %v2279
        %v2344 = vadd.f32 %v2198, %v2280
        %v2345 = vadd.f32 %v2199, %v2281
        %v2346 = vadd.f32 %v2200, %v2282
        %v2347 = vadd.f32 %v2201, %v2283
        %v2348 = vadd.f32 %v2202, %v2284
        %v2349 = vadd.f32 %v2203, %v2285
        %v2350 = vadd.f32 %v2204, %v2286
        %v2351 = vadd.f32 %v2205, %v2287
        %v2352 = vadd.f32 %v2206, %v2288
        %v2353 = vadd.f32 %v2207, %v2289
        %v2354 = vadd.f32 %v2208, %v2290
        %v2355 = vadd.f32 %v2209, %v2291
        %v2356 = vadd.f32 %v2210, %v2292
        %v2357 = vadd.f32 %v2211, %v2293
        %v2358 = vadd.f32 %v2212, %v2294
        %v2359 = vadd.f32 %v2213, %v2295
        %v2361 = vlaneseq
        %v2362 = vshrl.u32 %v2361, 7
        %v2363 = vsub.s32 0, %v2362
        %v2364 = vrot.slane %v1221, %v2363
        %v2365 = vlaneseq
        %v2366 = vshrl.u32 %v2365, 7
        %v2367 = vsub.s32 4, %v2366
        %v2368 = vrot.slane %v1221, %v2367
        %v2371 = vlaneseq
        %v2372 = vshrl.u32 %v2371, 7
        %v2373 = vsub.s32 0, %v2372
        %v2374 = vrot.slane %v2364, %v2373
        %v2375 = vlaneseq
        %v2376 = vshrl.u32 %v2375, 7
        %v2377 = vsub.s32 0, %v2376
        %v2378 = vrot.slane %v2368, %v2377
        %v2379 = vmul.f32 %v1415, %v2374
        %v2380 = vmul.f32 %v1416, %v2378
        %v2381 = vmul.f32 %v1413, %v2374
        %v2382 = vmul.f32 %v1414, %v2378
        %v2383 = vmul.f32 %v1411, %v2374
        %v2384 = vmul.f32 %v1412, %v2378
        %v2385 = vmul.f32 %v1409, %v2374
        %v2386 = vmul.f32 %v1410, %v2378
        %v2387 = vmul.f32 %v1407, %v2374
        %v2388 = vmul.f32 %v1408, %v2378
        %v2389 = vmul.f32 %v1405, %v2374
        %v2390 = vmul.f32 %v1406, %v2378
        %v2391 = vmul.f32 %v1403, %v2374
        %v2392 = vmul.f32 %v1404, %v2378
        %v2393 = vmul.f32 %v1401, %v2374
        %v2394 = vmul.f32 %v1402, %v2378
        %v2395 = vmul.f32 %v1399, %v2374
        %v2396 = vmul.f32 %v1400, %v2378
        %v2397 = vmul.f32 %v1397, %v2374
        %v2398 = vmul.f32 %v1398, %v2378
        %v2399 = vmul.f32 %v1395, %v2374
        %v2400 = vmul.f32 %v1396, %v2378
        %v2401 = vmul.f32 %v1393, %v2374
        %v2402 = vmul.f32 %v1394, %v2378
        %v2403 = vmul.f32 %v1391, %v2374
        %v2404 = vmul.f32 %v1392, %v2378
        %v2405 = vmul.f32 %v1389, %v2374
        %v2406 = vmul.f32 %v1390, %v2378
        %v2407 = vmul.f32 %v1387, %v2374
        %v2408 = vmul.f32 %v1388, %v2378
        %v2409 = vmul.f32 %v1385, %v2374
        %v2410 = vmul.f32 %v1386, %v2378
        %v2411 = vmul.f32 %v1383, %v2374
        %v2412 = vmul.f32 %v1384, %v2378
        %v2413 = vmul.f32 %v1381, %v2374
        %v2414 = vmul.f32 %v1382, %v2378
        %v2415 = vmul.f32 %v1379, %v2374
        %v2416 = vmul.f32 %v1380, %v2378
        %v2417 = vmul.f32 %v1377, %v2374
        %v2418 = vmul.f32 %v1378, %v2378
        %v2419 = vmul.f32 %v1375, %v2374
        %v2420 = vmul.f32 %v1376, %v2378
        %v2421 = vmul.f32 %v1373, %v2374
        %v2422 = vmul.f32 %v1374, %v2378
        %v2423 = vmul.f32 %v1371, %v2374
        %v2424 = vmul.f32 %v1372, %v2378
        %v2425 = vmul.f32 %v1369, %v2374
        %v2426 = vmul.f32 %v1370, %v2378
        %v2427 = vmul.f32 %v1367, %v2374
        %v2428 = vmul.f32 %v1368, %v2378
        %v2429 = vmul.f32 %v1365, %v2374
        %v2430 = vmul.f32 %v1366, %v2378
        %v2431 = vmul.f32 %v1363, %v2374
        %v2432 = vmul.f32 %v1364, %v2378
        %v2433 = vmul.f32 %v1361, %v2374
        %v2434 = vmul.f32 %v1362, %v2378
        %v2435 = vmul.f32 %v1359, %v2374
        %v2436 = vmul.f32 %v1360, %v2378
        %v2437 = vmul.f32 %v1357, %v2374
        %v2438 = vmul.f32 %v1358, %v2378
        %v2439 = vmul.f32 %v1355, %v2374
        %v2440 = vmul.f32 %v1356, %v2378
        %v2441 = vmul.f32 %v1353, %v2374
        %v2442 = vmul.f32 %v1354, %v2378
        %v2443 = vlaneseq
        %v2444 = vshrl.u32 %v2443, 7
        %v2445 = vsub.s32 1, %v2444
        %v2446 = vrot.slane %v1221, %v2445
        %v2447 = vlaneseq
        %v2448 = vshrl.u32 %v2447, 7
        %v2449 = vsub.s32 5, %v2448
        %v2450 = vrot.slane %v1221, %v2449
        %v2453 = vlaneseq
        %v2454 = vshrl.u32 %v2453, 7
        %v2455 = vsub.s32 1, %v2454
        %v2456 = vrot.slane %v2446, %v2455
        %v2457 = vlaneseq
        %v2458 = vshrl.u32 %v2457, 7
        %v2459 = vsub.s32 1, %v2458
        %v2460 = vrot.slane %v2450, %v2459
        %v2461 = vmul.f32 %v484, %v2456
        %v2462 = vmul.f32 %v486, %v2460
        %v2463 = vmul.f32 %v490, %v2456
        %v2464 = vmul.f32 %v492, %v2460
        %v2465 = vmul.f32 %v496, %v2456
        %v2466 = vmul.f32 %v498, %v2460
        %v2467 = vmul.f32 %v502, %v2456
        %v2468 = vmul.f32 %v504, %v2460
        %v2469 = vmul.f32 %v508, %v2456
        %v2470 = vmul.f32 %v510, %v2460
        %v2471 = vmul.f32 %v514, %v2456
        %v2472 = vmul.f32 %v516, %v2460
        %v2473 = vmul.f32 %v520, %v2456
        %v2474 = vmul.f32 %v522, %v2460
        %v2475 = vmul.f32 %v526, %v2456
        %v2476 = vmul.f32 %v528, %v2460
        %v2477 = vmul.f32 %v532, %v2456
        %v2478 = vmul.f32 %v534, %v2460
        %v2479 = vmul.f32 %v538, %v2456
        %v2480 = vmul.f32 %v540, %v2460
        %v2481 = vmul.f32 %v544, %v2456
        %v2482 = vmul.f32 %v546, %v2460
        %v2483 = vmul.f32 %v550, %v2456
        %v2484 = vmul.f32 %v552, %v2460
        %v2485 = vmul.f32 %v556, %v2456
        %v2486 = vmul.f32 %v558, %v2460
        %v2487 = vmul.f32 %v562, %v2456
        %v2488 = vmul.f32 %v564, %v2460
        %v2489 = vmul.f32 %v568, %v2456
        %v2490 = vmul.f32 %v570, %v2460
        %v2491 = vmul.f32 %v574, %v2456
        %v2492 = vmul.f32 %v576, %v2460
        %v2493 = vmul.f32 %v580, %v2456
        %v2494 = vmul.f32 %v582, %v2460
        %v2495 = vmul.f32 %v586, %v2456
        %v2496 = vmul.f32 %v588, %v2460
        %v2497 = vmul.f32 %v592, %v2456
        %v2498 = vmul.f32 %v594, %v2460
        %v2499 = vmul.f32 %v598, %v2456
        %v2500 = vmul.f32 %v600, %v2460
        %v2501 = vmul.f32 %v604, %v2456
        %v2502 = vmul.f32 %v606, %v2460
        %v2503 = vmul.f32 %v610, %v2456
        %v2504 = vmul.f32 %v612, %v2460
        %v2505 = vmul.f32 %v616, %v2456
        %v2506 = vmul.f32 %v618, %v2460
        %v2507 = vmul.f32 %v622, %v2456
        %v2508 = vmul.f32 %v624, %v2460
        %v2509 = vmul.f32 %v628, %v2456
        %v2510 = vmul.f32 %v630, %v2460
        %v2511 = vmul.f32 %v634, %v2456
        %v2512 = vmul.f32 %v636, %v2460
        %v2513 = vmul.f32 %v640, %v2456
        %v2514 = vmul.f32 %v642, %v2460
        %v2515 = vmul.f32 %v646, %v2456
        %v2516 = vmul.f32 %v648, %v2460
        %v2517 = vmul.f32 %v652, %v2456
        %v2518 = vmul.f32 %v654, %v2460
        %v2519 = vmul.f32 %v658, %v2456
        %v2520 = vmul.f32 %v660, %v2460
        %v2521 = vmul.f32 %v664, %v2456
        %v2522 = vmul.f32 %v666, %v2460
        %v2523 = vmul.f32 %v670, %v2456
        %v2524 = vmul.f32 %v672, %v2460
        %v2525 = vadd.f32 %v2379, %v2461
        %v2526 = vadd.f32 %v2380, %v2462
        %v2527 = vadd.f32 %v2381, %v2463
        %v2528 = vadd.f32 %v2382, %v2464
        %v2529 = vadd.f32 %v2383, %v2465
        %v2530 = vadd.f32 %v2384, %v2466
        %v2531 = vadd.f32 %v2385, %v2467
        %v2532 = vadd.f32 %v2386, %v2468
        %v2533 = vadd.f32 %v2387, %v2469
        %v2534 = vadd.f32 %v2388, %v2470
        %v2535 = vadd.f32 %v2389, %v2471
        %v2536 = vadd.f32 %v2390, %v2472
        %v2537 = vadd.f32 %v2391, %v2473
        %v2538 = vadd.f32 %v2392, %v2474
        %v2539 = vadd.f32 %v2393, %v2475
        %v2540 = vadd.f32 %v2394, %v2476
        %v2541 = vadd.f32 %v2395, %v2477
        %v2542 = vadd.f32 %v2396, %v2478
        %v2543 = vadd.f32 %v2397, %v2479
        %v2544 = vadd.f32 %v2398, %v2480
        %v2545 = vadd.f32 %v2399, %v2481
        %v2546 = vadd.f32 %v2400, %v2482
        %v2547 = vadd.f32 %v2401, %v2483
        %v2548 = vadd.f32 %v2402, %v2484
        %v2549 = vadd.f32 %v2403, %v2485
        %v2550 = vadd.f32 %v2404, %v2486
        %v2551 = vadd.f32 %v2405, %v2487
        %v2552 = vadd.f32 %v2406, %v2488
        %v2553 = vadd.f32 %v2407, %v2489
        %v2554 = vadd.f32 %v2408, %v2490
        %v2555 = vadd.f32 %v2409, %v2491
        %v2556 = vadd.f32 %v2410, %v2492
        %v2557 = vadd.f32 %v2411, %v2493
        %v2558 = vadd.f32 %v2412, %v2494
        %v2559 = vadd.f32 %v2413, %v2495
        %v2560 = vadd.f32 %v2414, %v2496
        %v2561 = vadd.f32 %v2415, %v2497
        %v2562 = vadd.f32 %v2416, %v2498
        %v2563 = vadd.f32 %v2417, %v2499
        %v2564 = vadd.f32 %v2418, %v2500
        %v2565 = vadd.f32 %v2419, %v2501
        %v2566 = vadd.f32 %v2420, %v2502
        %v2567 = vadd.f32 %v2421, %v2503
        %v2568 = vadd.f32 %v2422, %v2504
        %v2569 = vadd.f32 %v2423, %v2505
        %v2570 = vadd.f32 %v2424, %v2506
        %v2571 = vadd.f32 %v2425, %v2507
        %v2572 = vadd.f32 %v2426, %v2508
        %v2573 = vadd.f32 %v2427, %v2509
        %v2574 = vadd.f32 %v2428, %v2510
        %v2575 = vadd.f32 %v2429, %v2511
        %v2576 = vadd.f32 %v2430, %v2512
        %v2577 = vadd.f32 %v2431, %v2513
        %v2578 = vadd.f32 %v2432, %v2514
        %v2579 = vadd.f32 %v2433, %v2515
        %v2580 = vadd.f32 %v2434, %v2516
        %v2581 = vadd.f32 %v2435, %v2517
        %v2582 = vadd.f32 %v2436, %v2518
        %v2583 = vadd.f32 %v2437, %v2519
        %v2584 = vadd.f32 %v2438, %v2520
        %v2585 = vadd.f32 %v2439, %v2521
        %v2586 = vadd.f32 %v2440, %v2522
        %v2587 = vadd.f32 %v2441, %v2523
        %v2588 = vadd.f32 %v2442, %v2524
        %v2589 = vlaneseq
        %v2590 = vshrl.u32 %v2589, 7
        %v2591 = vsub.s32 2, %v2590
        %v2592 = vrot.slane %v1221, %v2591
        %v2593 = vlaneseq
        %v2594 = vshrl.u32 %v2593, 7
        %v2595 = vsub.s32 6, %v2594
        %v2596 = vrot.slane %v1221, %v2595
        %v2599 = vlaneseq
        %v2600 = vshrl.u32 %v2599, 7
        %v2601 = vsub.s32 2, %v2600
        %v2602 = vrot.slane %v2592, %v2601
        %v2603 = vlaneseq
        %v2604 = vshrl.u32 %v2603, 7
        %v2605 = vsub.s32 2, %v2604
        %v2606 = vrot.slane %v2596, %v2605
        %v2607 = vmul.f32 %v1606, %v2602
        %v2608 = vmul.f32 %v1607, %v2606
        %v2609 = vmul.f32 %v1604, %v2602
        %v2610 = vmul.f32 %v1605, %v2606
        %v2611 = vmul.f32 %v1602, %v2602
        %v2612 = vmul.f32 %v1603, %v2606
        %v2613 = vmul.f32 %v1600, %v2602
        %v2614 = vmul.f32 %v1601, %v2606
        %v2615 = vmul.f32 %v1598, %v2602
        %v2616 = vmul.f32 %v1599, %v2606
        %v2617 = vmul.f32 %v1596, %v2602
        %v2618 = vmul.f32 %v1597, %v2606
        %v2619 = vmul.f32 %v1594, %v2602
        %v2620 = vmul.f32 %v1595, %v2606
        %v2621 = vmul.f32 %v1592, %v2602
        %v2622 = vmul.f32 %v1593, %v2606
        %v2623 = vmul.f32 %v1590, %v2602
        %v2624 = vmul.f32 %v1591, %v2606
        %v2625 = vmul.f32 %v1588, %v2602
        %v2626 = vmul.f32 %v1589, %v2606
        %v2627 = vmul.f32 %v1586, %v2602
        %v2628 = vmul.f32 %v1587, %v2606
        %v2629 = vmul.f32 %v1584, %v2602
        %v2630 = vmul.f32 %v1585, %v2606
        %v2631 = vmul.f32 %v1582, %v2602
        %v2632 = vmul.f32 %v1583, %v2606
        %v2633 = vmul.f32 %v1580, %v2602
        %v2634 = vmul.f32 %v1581, %v2606
        %v2635 = vmul.f32 %v1578, %v2602
        %v2636 = vmul.f32 %v1579, %v2606
        %v2637 = vmul.f32 %v1576, %v2602
        %v2638 = vmul.f32 %v1577, %v2606
        %v2639 = vmul.f32 %v1574, %v2602
        %v2640 = vmul.f32 %v1575, %v2606
        %v2641 = vmul.f32 %v1572, %v2602
        %v2642 = vmul.f32 %v1573, %v2606
        %v2643 = vmul.f32 %v1570, %v2602
        %v2644 = vmul.f32 %v1571, %v2606
        %v2645 = vmul.f32 %v1568, %v2602
        %v2646 = vmul.f32 %v1569, %v2606
        %v2647 = vmul.f32 %v1566, %v2602
        %v2648 = vmul.f32 %v1567, %v2606
        %v2649 = vmul.f32 %v1564, %v2602
        %v2650 = vmul.f32 %v1565, %v2606
        %v2651 = vmul.f32 %v1562, %v2602
        %v2652 = vmul.f32 %v1563, %v2606
        %v2653 = vmul.f32 %v1560, %v2602
        %v2654 = vmul.f32 %v1561, %v2606
        %v2655 = vmul.f32 %v1558, %v2602
        %v2656 = vmul.f32 %v1559, %v2606
        %v2657 = vmul.f32 %v1556, %v2602
        %v2658 = vmul.f32 %v1557, %v2606
        %v2659 = vmul.f32 %v1554, %v2602
        %v2660 = vmul.f32 %v1555, %v2606
        %v2661 = vmul.f32 %v1552, %v2602
        %v2662 = vmul.f32 %v1553, %v2606
        %v2663 = vmul.f32 %v1550, %v2602
        %v2664 = vmul.f32 %v1551, %v2606
        %v2665 = vmul.f32 %v1548, %v2602
        %v2666 = vmul.f32 %v1549, %v2606
        %v2667 = vmul.f32 %v1546, %v2602
        %v2668 = vmul.f32 %v1547, %v2606
        %v2669 = vmul.f32 %v1608, %v2602
        %v2670 = vmul.f32 %v1609, %v2606
        %v2671 = vadd.f32 %v2525, %v2607
        %v2672 = vadd.f32 %v2526, %v2608
        %v2673 = vadd.f32 %v2527, %v2609
        %v2674 = vadd.f32 %v2528, %v2610
        %v2675 = vadd.f32 %v2529, %v2611
        %v2676 = vadd.f32 %v2530, %v2612
        %v2677 = vadd.f32 %v2531, %v2613
        %v2678 = vadd.f32 %v2532, %v2614
        %v2679 = vadd.f32 %v2533, %v2615
        %v2680 = vadd.f32 %v2534, %v2616
        %v2681 = vadd.f32 %v2535, %v2617
        %v2682 = vadd.f32 %v2536, %v2618
        %v2683 = vadd.f32 %v2537, %v2619
        %v2684 = vadd.f32 %v2538, %v2620
        %v2685 = vadd.f32 %v2539, %v2621
        %v2686 = vadd.f32 %v2540, %v2622
        %v2687 = vadd.f32 %v2541, %v2623
        %v2688 = vadd.f32 %v2542, %v2624
        %v2689 = vadd.f32 %v2543, %v2625
        %v2690 = vadd.f32 %v2544, %v2626
        %v2691 = vadd.f32 %v2545, %v2627
        %v2692 = vadd.f32 %v2546, %v2628
        %v2693 = vadd.f32 %v2547, %v2629
        %v2694 = vadd.f32 %v2548, %v2630
        %v2695 = vadd.f32 %v2549, %v2631
        %v2696 = vadd.f32 %v2550, %v2632
        %v2697 = vadd.f32 %v2551, %v2633
        %v2698 = vadd.f32 %v2552, %v2634
        %v2699 = vadd.f32 %v2553, %v2635
        %v2700 = vadd.f32 %v2554, %v2636
        %v2701 = vadd.f32 %v2555, %v2637
        %v2702 = vadd.f32 %v2556, %v2638
        %v2703 = vadd.f32 %v2557, %v2639
        %v2704 = vadd.f32 %v2558, %v2640
        %v2705 = vadd.f32 %v2559, %v2641
        %v2706 = vadd.f32 %v2560, %v2642
        %v2707 = vadd.f32 %v2561, %v2643
        %v2708 = vadd.f32 %v2562, %v2644
        %v2709 = vadd.f32 %v2563, %v2645
        %v2710 = vadd.f32 %v2564, %v2646
        %v2711 = vadd.f32 %v2565, %v2647
        %v2712 = vadd.f32 %v2566, %v2648
        %v2713 = vadd.f32 %v2567, %v2649
        %v2714 = vadd.f32 %v2568, %v2650
        %v2715 = vadd.f32 %v2569, %v2651
        %v2716 = vadd.f32 %v2570, %v2652
        %v2717 = vadd.f32 %v2571, %v2653
        %v2718 = vadd.f32 %v2572, %v2654
        %v2719 = vadd.f32 %v2573, %v2655
        %v2720 = vadd.f32 %v2574, %v2656
        %v2721 = vadd.f32 %v2575, %v2657
        %v2722 = vadd.f32 %v2576, %v2658
        %v2723 = vadd.f32 %v2577, %v2659
        %v2724 = vadd.f32 %v2578, %v2660
        %v2725 = vadd.f32 %v2579, %v2661
        %v2726 = vadd.f32 %v2580, %v2662
        %v2727 = vadd.f32 %v2581, %v2663
        %v2728 = vadd.f32 %v2582, %v2664
        %v2729 = vadd.f32 %v2583, %v2665
        %v2730 = vadd.f32 %v2584, %v2666
        %v2731 = vadd.f32 %v2585, %v2667
        %v2732 = vadd.f32 %v2586, %v2668
        %v2733 = vadd.f32 %v2587, %v2669
        %v2734 = vadd.f32 %v2588, %v2670
        %v2735 = vsel %vm1155, %v1921, 0.0
        %v2736 = vsel %vm1155, %v1922, 0.0
        %v2737 = vsel %vm1156, %v1923, 0.0
        %v2738 = vsel %vm1156, %v1924, 0.0
        %v2739 = vsel %vm1157, %v1925, 0.0
        %v2740 = vsel %vm1157, %v1926, 0.0
        %v2741 = vsel %vm1158, %v1927, 0.0
        %v2742 = vsel %vm1158, %v1928, 0.0
        %v2743 = vsel %vm1159, %v1929, 0.0
        %v2744 = vsel %vm1159, %v1930, 0.0
        %v2745 = vsel %vm1160, %v1931, 0.0
        %v2746 = vsel %vm1160, %v1932, 0.0
        %v2747 = vsel %vm1161, %v1933, 0.0
        %v2748 = vsel %vm1161, %v1934, 0.0
        %v2749 = vsel %vm1162, %v1935, 0.0
        %v2750 = vsel %vm1162, %v1936, 0.0
        %v2751 = vsel %vm1163, %v1937, 0.0
        %v2752 = vsel %vm1163, %v1938, 0.0
        %v2753 = vsel %vm1164, %v1939, 0.0
        %v2754 = vsel %vm1164, %v1940, 0.0
        %v2755 = vsel %vm1165, %v1941, 0.0
        %v2756 = vsel %vm1165, %v1942, 0.0
        %v2757 = vsel %vm1166, %v1943, 0.0
        %v2758 = vsel %vm1166, %v1944, 0.0
        %v2759 = vsel %vm1167, %v1945, 0.0
        %v2760 = vsel %vm1167, %v1946, 0.0
        %v2761 = vsel %vm1168, %v1947, 0.0
        %v2762 = vsel %vm1168, %v1948, 0.0
        %v2763 = vsel %vm1169, %v1949, 0.0
        %v2764 = vsel %vm1169, %v1950, 0.0
        %v2765 = vsel %vm1170, %v1951, 0.0
        %v2766 = vsel %vm1170, %v1952, 0.0
        %v2767 = vsel %vm1171, %v1953, 0.0
        %v2768 = vsel %vm1171, %v1954, 0.0
        %v2769 = vsel %vm1172, %v1955, 0.0
        %v2770 = vsel %vm1172, %v1956, 0.0
        %v2771 = vsel %vm1173, %v1957, 0.0
        %v2772 = vsel %vm1173, %v1958, 0.0
        %v2773 = vsel %vm1174, %v1959, 0.0
        %v2774 = vsel %vm1174, %v1960, 0.0
        %v2775 = vsel %vm1175, %v1961, 0.0
        %v2776 = vsel %vm1175, %v1962, 0.0
        %v2777 = vsel %vm1176, %v1963, 0.0
        %v2778 = vsel %vm1176, %v1964, 0.0
        %v2779 = vsel %vm1177, %v1965, 0.0
        %v2780 = vsel %vm1177, %v1966, 0.0
        %v2781 = vsel %vm1178, %v1967, 0.0
        %v2782 = vsel %vm1178, %v1968, 0.0
        %v2783 = vsel %vm1179, %v1969, 0.0
        %v2784 = vsel %vm1179, %v1970, 0.0
        %v2785 = vsel %vm1180, %v1971, 0.0
        %v2786 = vsel %vm1180, %v1972, 0.0
        %v2787 = vsel %vm1181, %v1973, 0.0
        %v2788 = vsel %vm1181, %v1974, 0.0
        %v2789 = vsel %vm1182, %v1975, 0.0
        %v2790 = vsel %vm1182, %v1976, 0.0
        %v2791 = vsel %vm1183, %v1977, 0.0
        %v2792 = vsel %vm1183, %v1978, 0.0
        %v2793 = vsel %vm1184, %v1979, 0.0
        %v2794 = vsel %vm1184, %v1980, 0.0
        %v2795 = vsel %vm1185, %v1981, 0.0
        %v2796 = vsel %vm1185, %v1982, 0.0
        %v2797 = vsel %vm1186, %v1983, 0.0
        %v2798 = vsel %vm1186, %v1984, 0.0
        %v2799 = vadd.f32 %v2296, %v2795
        %v2800 = vadd.f32 %v2297, %v2796
        %v2801 = vadd.f32 %v2298, %v2797
        %v2802 = vadd.f32 %v2299, %v2798
        %v2803 = vadd.f32 %v2300, %v2735
        %v2804 = vadd.f32 %v2301, %v2736
        %v2805 = vadd.f32 %v2302, %v2737
        %v2806 = vadd.f32 %v2303, %v2738
        %v2807 = vadd.f32 %v2304, %v2739
        %v2808 = vadd.f32 %v2305, %v2740
        %v2809 = vadd.f32 %v2306, %v2741
        %v2810 = vadd.f32 %v2307, %v2742
        %v2811 = vadd.f32 %v2308, %v2743
        %v2812 = vadd.f32 %v2309, %v2744
        %v2813 = vadd.f32 %v2310, %v2745
        %v2814 = vadd.f32 %v2311, %v2746
        %v2815 = vadd.f32 %v2312, %v2747
        %v2816 = vadd.f32 %v2313, %v2748
        %v2817 = vadd.f32 %v2314, %v2749
        %v2818 = vadd.f32 %v2315, %v2750
        %v2819 = vadd.f32 %v2316, %v2751
        %v2820 = vadd.f32 %v2317, %v2752
        %v2821 = vadd.f32 %v2318, %v2753
        %v2822 = vadd.f32 %v2319, %v2754
        %v2823 = vadd.f32 %v2320, %v2755
        %v2824 = vadd.f32 %v2321, %v2756
        %v2825 = vadd.f32 %v2322, %v2757
        %v2826 = vadd.f32 %v2323, %v2758
        %v2827 = vadd.f32 %v2324, %v2759
        %v2828 = vadd.f32 %v2325, %v2760
        %v2829 = vadd.f32 %v2326, %v2761
        %v2830 = vadd.f32 %v2327, %v2762
        %v2831 = vadd.f32 %v2328, %v2763
        %v2832 = vadd.f32 %v2329, %v2764
        %v2833 = vadd.f32 %v2330, %v2765
        %v2834 = vadd.f32 %v2331, %v2766
        %v2835 = vadd.f32 %v2332, %v2767
        %v2836 = vadd.f32 %v2333, %v2768
        %v2837 = vadd.f32 %v2334, %v2769
        %v2838 = vadd.f32 %v2335, %v2770
        %v2839 = vadd.f32 %v2336, %v2771
        %v2840 = vadd.f32 %v2337, %v2772
        %v2841 = vadd.f32 %v2338, %v2773
        %v2842 = vadd.f32 %v2339, %v2774
        %v2843 = vadd.f32 %v2340, %v2775
        %v2844 = vadd.f32 %v2341, %v2776
        %v2845 = vadd.f32 %v2342, %v2777
        %v2846 = vadd.f32 %v2343, %v2778
        %v2847 = vadd.f32 %v2344, %v2779
        %v2848 = vadd.f32 %v2345, %v2780
        %v2849 = vadd.f32 %v2346, %v2781
        %v2850 = vadd.f32 %v2347, %v2782
        %v2851 = vadd.f32 %v2348, %v2783
        %v2852 = vadd.f32 %v2349, %v2784
        %v2853 = vadd.f32 %v2350, %v2785
        %v2854 = vadd.f32 %v2351, %v2786
        %v2855 = vadd.f32 %v2352, %v2787
        %v2856 = vadd.f32 %v2353, %v2788
        %v2857 = vadd.f32 %v2354, %v2789
        %v2858 = vadd.f32 %v2355, %v2790
        %v2859 = vadd.f32 %v2356, %v2791
        %v2860 = vadd.f32 %v2357, %v2792
        %v2861 = vadd.f32 %v2358, %v2793
        %v2862 = vadd.f32 %v2359, %v2794
        %v2863 = vsel %vm1187, %v2671, 0.0
        %v2864 = vsel %vm1187, %v2672, 0.0
        %v2865 = vsel %vm1188, %v2673, 0.0
        %v2866 = vsel %vm1188, %v2674, 0.0
        %v2867 = vsel %vm1189, %v2675, 0.0
        %v2868 = vsel %vm1189, %v2676, 0.0
        %v2869 = vsel %vm1190, %v2677, 0.0
        %v2870 = vsel %vm1190, %v2678, 0.0
        %v2871 = vsel %vm1191, %v2679, 0.0
        %v2872 = vsel %vm1191, %v2680, 0.0
        %v2873 = vsel %vm1192, %v2681, 0.0
        %v2874 = vsel %vm1192, %v2682, 0.0
        %v2875 = vsel %vm1193, %v2683, 0.0
        %v2876 = vsel %vm1193, %v2684, 0.0
        %v2877 = vsel %vm1194, %v2685, 0.0
        %v2878 = vsel %vm1194, %v2686, 0.0
        %v2879 = vsel %vm1195, %v2687, 0.0
        %v2880 = vsel %vm1195, %v2688, 0.0
        %v2881 = vsel %vm1196, %v2689, 0.0
        %v2882 = vsel %vm1196, %v2690, 0.0
        %v2883 = vsel %vm1197, %v2691, 0.0
        %v2884 = vsel %vm1197, %v2692, 0.0
        %v2885 = vsel %vm1198, %v2693, 0.0
        %v2886 = vsel %vm1198, %v2694, 0.0
        %v2887 = vsel %vm1199, %v2695, 0.0
        %v2888 = vsel %vm1199, %v2696, 0.0
        %v2889 = vsel %vm1200, %v2697, 0.0
        %v2890 = vsel %vm1200, %v2698, 0.0
        %v2891 = vsel %vm1201, %v2699, 0.0
        %v2892 = vsel %vm1201, %v2700, 0.0
        %v2893 = vsel %vm1202, %v2701, 0.0
        %v2894 = vsel %vm1202, %v2702, 0.0
        %v2895 = vsel %vm1203, %v2703, 0.0
        %v2896 = vsel %vm1203, %v2704, 0.0
        %v2897 = vsel %vm1204, %v2705, 0.0
        %v2898 = vsel %vm1204, %v2706, 0.0
        %v2899 = vsel %vm1205, %v2707, 0.0
        %v2900 = vsel %vm1205, %v2708, 0.0
        %v2901 = vsel %vm1206, %v2709, 0.0
        %v2902 = vsel %vm1206, %v2710, 0.0
        %v2903 = vsel %vm1207, %v2711, 0.0
        %v2904 = vsel %vm1207, %v2712, 0.0
        %v2905 = vsel %vm1208, %v2713, 0.0
        %v2906 = vsel %vm1208, %v2714, 0.0
        %v2907 = vsel %vm1209, %v2715, 0.0
        %v2908 = vsel %vm1209, %v2716, 0.0
        %v2909 = vsel %vm1210, %v2717, 0.0
        %v2910 = vsel %vm1210, %v2718, 0.0
        %v2911 = vsel %vm1211, %v2719, 0.0
        %v2912 = vsel %vm1211, %v2720, 0.0
        %v2913 = vsel %vm1212, %v2721, 0.0
        %v2914 = vsel %vm1212, %v2722, 0.0
        %v2915 = vsel %vm1213, %v2723, 0.0
        %v2916 = vsel %vm1213, %v2724, 0.0
        %v2917 = vsel %vm1214, %v2725, 0.0
        %v2918 = vsel %vm1214, %v2726, 0.0
        %v2919 = vsel %vm1215, %v2727, 0.0
        %v2920 = vsel %vm1215, %v2728, 0.0
        %v2921 = vsel %vm1216, %v2729, 0.0
        %v2922 = vsel %vm1216, %v2730, 0.0
        %v2923 = vsel %vm1217, %v2731, 0.0
        %v2924 = vsel %vm1217, %v2732, 0.0
        %v2925 = vsel %vm1218, %v2733, 0.0
        %v2926 = vsel %vm1218, %v2734, 0.0
        %v2927 = vadd.f32 %v2799, %v2867
        %v2928 = vadd.f32 %v2800, %v2868
        %v2929 = vadd.f32 %v2801, %v2869
        %v2930 = vadd.f32 %v2802, %v2870
        %v2931 = vadd.f32 %v2803, %v2871
        %v2932 = vadd.f32 %v2804, %v2872
        %v2933 = vadd.f32 %v2805, %v2873
        %v2934 = vadd.f32 %v2806, %v2874
        %v2935 = vadd.f32 %v2807, %v2875
        %v2936 = vadd.f32 %v2808, %v2876
        %v2937 = vadd.f32 %v2809, %v2877
        %v2938 = vadd.f32 %v2810, %v2878
        %v2939 = vadd.f32 %v2811, %v2879
        %v2940 = vadd.f32 %v2812, %v2880
        %v2941 = vadd.f32 %v2813, %v2881
        %v2942 = vadd.f32 %v2814, %v2882
        %v2943 = vadd.f32 %v2815, %v2883
        %v2944 = vadd.f32 %v2816, %v2884
        %v2945 = vadd.f32 %v2817, %v2885
        %v2946 = vadd.f32 %v2818, %v2886
        %v2947 = vadd.f32 %v2819, %v2887
        %v2948 = vadd.f32 %v2820, %v2888
        %v2949 = vadd.f32 %v2821, %v2889
        %v2950 = vadd.f32 %v2822, %v2890
        %v2951 = vadd.f32 %v2823, %v2891
        %v2952 = vadd.f32 %v2824, %v2892
        %v2953 = vadd.f32 %v2825, %v2893
        %v2954 = vadd.f32 %v2826, %v2894
        %v2955 = vadd.f32 %v2827, %v2895
        %v2956 = vadd.f32 %v2828, %v2896
        %v2957 = vadd.f32 %v2829, %v2897
        %v2958 = vadd.f32 %v2830, %v2898
        %v2959 = vadd.f32 %v2831, %v2899
        %v2960 = vadd.f32 %v2832, %v2900
        %v2961 = vadd.f32 %v2833, %v2901
        %v2962 = vadd.f32 %v2834, %v2902
        %v2963 = vadd.f32 %v2835, %v2903
        %v2964 = vadd.f32 %v2836, %v2904
        %v2965 = vadd.f32 %v2837, %v2905
        %v2966 = vadd.f32 %v2838, %v2906
        %v2967 = vadd.f32 %v2839, %v2907
        %v2968 = vadd.f32 %v2840, %v2908
        %v2969 = vadd.f32 %v2841, %v2909
        %v2970 = vadd.f32 %v2842, %v2910
        %v2971 = vadd.f32 %v2843, %v2911
        %v2972 = vadd.f32 %v2844, %v2912
        %v2973 = vadd.f32 %v2845, %v2913
        %v2974 = vadd.f32 %v2846, %v2914
        %v2975 = vadd.f32 %v2847, %v2915
        %v2976 = vadd.f32 %v2848, %v2916
        %v2977 = vadd.f32 %v2849, %v2917
        %v2978 = vadd.f32 %v2850, %v2918
        %v2979 = vadd.f32 %v2851, %v2919
        %v2980 = vadd.f32 %v2852, %v2920
        %v2981 = vadd.f32 %v2853, %v2921
        %v2982 = vadd.f32 %v2854, %v2922
        %v2983 = vadd.f32 %v2855, %v2923
        %v2984 = vadd.f32 %v2856, %v2924
        %v2985 = vadd.f32 %v2857, %v2925
        %v2986 = vadd.f32 %v2858, %v2926
        %v2987 = vadd.f32 %v2859, %v2863
        %v2988 = vadd.f32 %v2860, %v2864
        %v2989 = vadd.f32 %v2861, %v2865
        %v2990 = vadd.f32 %v2862, %v2866
        %v2992 = vlaneseq
        %v2993 = vshrl.u32 %v2992, 7
        %v2994 = vsub.s32 0, %v2993
        %v2995 = vrot.slane %v1222, %v2994
        %v2996 = vlaneseq
        %v2997 = vshrl.u32 %v2996, 7
        %v2998 = vsub.s32 1, %v2997
        %v2999 = vrot.slane %v1222, %v2998
        %v3002 = vadd.f32 %v2927, %v2995
        %v3003 = vadd.f32 %v2928, %v2999
        %v3004 = vadd.f32 %v2929, %v2995
        %v3005 = vadd.f32 %v2930, %v2999
        %v3006 = vadd.f32 %v2931, %v2995
        %v3007 = vadd.f32 %v2932, %v2999
        %v3008 = vadd.f32 %v2933, %v2995
        %v3009 = vadd.f32 %v2934, %v2999
        %v3010 = vadd.f32 %v2935, %v2995
        %v3011 = vadd.f32 %v2936, %v2999
        %v3012 = vadd.f32 %v2937, %v2995
        %v3013 = vadd.f32 %v2938, %v2999
        %v3014 = vadd.f32 %v2939, %v2995
        %v3015 = vadd.f32 %v2940, %v2999
        %v3016 = vadd.f32 %v2941, %v2995
        %v3017 = vadd.f32 %v2942, %v2999
        %v3018 = vadd.f32 %v2943, %v2995
        %v3019 = vadd.f32 %v2944, %v2999
        %v3020 = vadd.f32 %v2945, %v2995
        %v3021 = vadd.f32 %v2946, %v2999
        %v3022 = vadd.f32 %v2947, %v2995
        %v3023 = vadd.f32 %v2948, %v2999
        %v3024 = vadd.f32 %v2949, %v2995
        %v3025 = vadd.f32 %v2950, %v2999
        %v3026 = vadd.f32 %v2951, %v2995
        %v3027 = vadd.f32 %v2952, %v2999
        %v3028 = vadd.f32 %v2953, %v2995
        %v3029 = vadd.f32 %v2954, %v2999
        %v3030 = vadd.f32 %v2955, %v2995
        %v3031 = vadd.f32 %v2956, %v2999
        %v3032 = vadd.f32 %v2957, %v2995
        %v3033 = vadd.f32 %v2958, %v2999
        %v3034 = vadd.f32 %v2959, %v2995
        %v3035 = vadd.f32 %v2960, %v2999
        %v3036 = vadd.f32 %v2961, %v2995
        %v3037 = vadd.f32 %v2962, %v2999
        %v3038 = vadd.f32 %v2963, %v2995
        %v3039 = vadd.f32 %v2964, %v2999
        %v3040 = vadd.f32 %v2965, %v2995
        %v3041 = vadd.f32 %v2966, %v2999
        %v3042 = vadd.f32 %v2967, %v2995
        %v3043 = vadd.f32 %v2968, %v2999
        %v3044 = vadd.f32 %v2969, %v2995
        %v3045 = vadd.f32 %v2970, %v2999
        %v3046 = vadd.f32 %v2971, %v2995
        %v3047 = vadd.f32 %v2972, %v2999
        %v3048 = vadd.f32 %v2973, %v2995
        %v3049 = vadd.f32 %v2974, %v2999
        %v3050 = vadd.f32 %v2975, %v2995
        %v3051 = vadd.f32 %v2976, %v2999
        %v3052 = vadd.f32 %v2977, %v2995
        %v3053 = vadd.f32 %v2978, %v2999
        %v3054 = vadd.f32 %v2979, %v2995
        %v3055 = vadd.f32 %v2980, %v2999
        %v3056 = vadd.f32 %v2981, %v2995
        %v3057 = vadd.f32 %v2982, %v2999
        %v3058 = vadd.f32 %v2983, %v2995
        %v3059 = vadd.f32 %v2984, %v2999
        %v3060 = vadd.f32 %v2985, %v2995
        %v3061 = vadd.f32 %v2986, %v2999
        %v3062 = vadd.f32 %v2987, %v2995
        %v3063 = vadd.f32 %v2988, %v2999
        %v3064 = vadd.f32 %v2989, %v2995
        %v3065 = vadd.f32 %v2990, %v2999
        %v3066 = vmul.f32 %v3002, 0.5
        %v3067 = vmul.f32 %v3003, 0.5
        %v3068 = vmul.f32 %v3004, 0.5
        %v3069 = vmul.f32 %v3005, 0.5
        %v3070 = vmul.f32 %v3006, 0.5
        %v3071 = vmul.f32 %v3007, 0.5
        %v3072 = vmul.f32 %v3008, 0.5
        %v3073 = vmul.f32 %v3009, 0.5
        %v3074 = vmul.f32 %v3010, 0.5
        %v3075 = vmul.f32 %v3011, 0.5
        %v3076 = vmul.f32 %v3012, 0.5
        %v3077 = vmul.f32 %v3013, 0.5
        %v3078 = vmul.f32 %v3014, 0.5
        %v3079 = vmul.f32 %v3015, 0.5
        %v3080 = vmul.f32 %v3016, 0.5
        %v3081 = vmul.f32 %v3017, 0.5
        %v3082 = vmul.f32 %v3018, 0.5
        %v3083 = vmul.f32 %v3019, 0.5
        %v3084 = vmul.f32 %v3020, 0.5
        %v3085 = vmul.f32 %v3021, 0.5
        %v3086 = vmul.f32 %v3022, 0.5
        %v3087 = vmul.f32 %v3023, 0.5
        %v3088 = vmul.f32 %v3024, 0.5
        %v3089 = vmul.f32 %v3025, 0.5
        %v3090 = vmul.f32 %v3026, 0.5
        %v3091 = vmul.f32 %v3027, 0.5
        %v3092 = vmul.f32 %v3028, 0.5
        %v3093 = vmul.f32 %v3029, 0.5
        %v3094 = vmul.f32 %v3030, 0.5
        %v3095 = vmul.f32 %v3031, 0.5
        %v3096 = vmul.f32 %v3032, 0.5
        %v3097 = vmul.f32 %v3033, 0.5
        %v3098 = vmul.f32 %v3034, 0.5
        %v3099 = vmul.f32 %v3035, 0.5
        %v3100 = vmul.f32 %v3036, 0.5
        %v3101 = vmul.f32 %v3037, 0.5
        %v3102 = vmul.f32 %v3038, 0.5
        %v3103 = vmul.f32 %v3039, 0.5
        %v3104 = vmul.f32 %v3040, 0.5
        %v3105 = vmul.f32 %v3041, 0.5
        %v3106 = vmul.f32 %v3042, 0.5
        %v3107 = vmul.f32 %v3043, 0.5
        %v3108 = vmul.f32 %v3044, 0.5
        %v3109 = vmul.f32 %v3045, 0.5
        %v3110 = vmul.f32 %v3046, 0.5
        %v3111 = vmul.f32 %v3047, 0.5
        %v3112 = vmul.f32 %v3048, 0.5
        %v3113 = vmul.f32 %v3049, 0.5
        %v3114 = vmul.f32 %v3050, 0.5
        %v3115 = vmul.f32 %v3051, 0.5
        %v3116 = vmul.f32 %v3052, 0.5
        %v3117 = vmul.f32 %v3053, 0.5
        %v3118 = vmul.f32 %v3054, 0.5
        %v3119 = vmul.f32 %v3055, 0.5
        %v3120 = vmul.f32 %v3056, 0.5
        %v3121 = vmul.f32 %v3057, 0.5
        %v3122 = vmul.f32 %v3058, 0.5
        %v3123 = vmul.f32 %v3059, 0.5
        %v3124 = vmul.f32 %v3060, 0.5
        %v3125 = vmul.f32 %v3061, 0.5
        %v3126 = vmul.f32 %v3062, 0.5
        %v3127 = vmul.f32 %v3063, 0.5
        %v3128 = vmul.f32 %v3064, 0.5
        %v3129 = vmul.f32 %v3065, 0.5
        %v3130 = vmul.f32 %v3002, 0.70710677
        %v3131 = vmul.f32 %v3003, 0.70710677
        %v3132 = vmul.f32 %v3004, 0.70710677
        %v3133 = vmul.f32 %v3005, 0.70710677
        %v3134 = vmul.f32 %v3006, 0.70710677
        %v3135 = vmul.f32 %v3007, 0.70710677
        %v3136 = vmul.f32 %v3008, 0.70710677
        %v3137 = vmul.f32 %v3009, 0.70710677
        %v3138 = vmul.f32 %v3010, 0.70710677
        %v3139 = vmul.f32 %v3011, 0.70710677
        %v3140 = vmul.f32 %v3012, 0.70710677
        %v3141 = vmul.f32 %v3013, 0.70710677
        %v3142 = vmul.f32 %v3014, 0.70710677
        %v3143 = vmul.f32 %v3015, 0.70710677
        %v3144 = vmul.f32 %v3016, 0.70710677
        %v3145 = vmul.f32 %v3017, 0.70710677
        %v3146 = vmul.f32 %v3018, 0.70710677
        %v3147 = vmul.f32 %v3019, 0.70710677
        %v3148 = vmul.f32 %v3020, 0.70710677
        %v3149 = vmul.f32 %v3021, 0.70710677
        %v3150 = vmul.f32 %v3022, 0.70710677
        %v3151 = vmul.f32 %v3023, 0.70710677
        %v3152 = vmul.f32 %v3024, 0.70710677
        %v3153 = vmul.f32 %v3025, 0.70710677
        %v3154 = vmul.f32 %v3026, 0.70710677
        %v3155 = vmul.f32 %v3027, 0.70710677
        %v3156 = vmul.f32 %v3028, 0.70710677
        %v3157 = vmul.f32 %v3029, 0.70710677
        %v3158 = vmul.f32 %v3030, 0.70710677
        %v3159 = vmul.f32 %v3031, 0.70710677
        %v3160 = vmul.f32 %v3032, 0.70710677
        %v3161 = vmul.f32 %v3033, 0.70710677
        %v3162 = vmul.f32 %v3034, 0.70710677
        %v3163 = vmul.f32 %v3035, 0.70710677
        %v3164 = vmul.f32 %v3036, 0.70710677
        %v3165 = vmul.f32 %v3037, 0.70710677
        %v3166 = vmul.f32 %v3038, 0.70710677
        %v3167 = vmul.f32 %v3039, 0.70710677
        %v3168 = vmul.f32 %v3040, 0.70710677
        %v3169 = vmul.f32 %v3041, 0.70710677
        %v3170 = vmul.f32 %v3042, 0.70710677
        %v3171 = vmul.f32 %v3043, 0.70710677
        %v3172 = vmul.f32 %v3044, 0.70710677
        %v3173 = vmul.f32 %v3045, 0.70710677
        %v3174 = vmul.f32 %v3046, 0.70710677
        %v3175 = vmul.f32 %v3047, 0.70710677
        %v3176 = vmul.f32 %v3048, 0.70710677
        %v3177 = vmul.f32 %v3049, 0.70710677
        %v3178 = vmul.f32 %v3050, 0.70710677
        %v3179 = vmul.f32 %v3051, 0.70710677
        %v3180 = vmul.f32 %v3052, 0.70710677
        %v3181 = vmul.f32 %v3053, 0.70710677
        %v3182 = vmul.f32 %v3054, 0.70710677
        %v3183 = vmul.f32 %v3055, 0.70710677
        %v3184 = vmul.f32 %v3056, 0.70710677
        %v3185 = vmul.f32 %v3057, 0.70710677
        %v3186 = vmul.f32 %v3058, 0.70710677
        %v3187 = vmul.f32 %v3059, 0.70710677
        %v3188 = vmul.f32 %v3060, 0.70710677
        %v3189 = vmul.f32 %v3061, 0.70710677
        %v3190 = vmul.f32 %v3062, 0.70710677
        %v3191 = vmul.f32 %v3063, 0.70710677
        %v3192 = vmul.f32 %v3064, 0.70710677
        %v3193 = vmul.f32 %v3065, 0.70710677
        %v3194 = verf.f32.pop %v3130
        %v3195 = verf.f32.pop %v3131
        %v3196 = verf.f32.pop %v3132
        %v3197 = verf.f32.pop %v3133
        %v3198 = verf.f32.pop %v3134
        %v3199 = verf.f32.pop %v3135
        %v3200 = verf.f32.pop %v3136
        %v3201 = verf.f32.pop %v3137
        %v3202 = verf.f32.pop %v3138
        %v3203 = verf.f32.pop %v3139
        %v3204 = verf.f32.pop %v3140
        %v3205 = verf.f32.pop %v3141
        %v3206 = verf.f32.pop %v3142
        %v3207 = verf.f32.pop %v3143
        %v3208 = verf.f32.pop %v3144
        %v3209 = verf.f32.pop %v3145
        %v3210 = verf.f32.pop %v3146
        %v3211 = verf.f32.pop %v3147
        %v3212 = verf.f32.pop %v3148
        %v3213 = verf.f32.pop %v3149
        %v3214 = verf.f32.pop %v3150
        %v3215 = verf.f32.pop %v3151
        %v3216 = verf.f32.pop %v3152
        %v3217 = verf.f32.pop %v3153
        %v3218 = verf.f32.pop %v3154
        %v3219 = verf.f32.pop %v3155
        %v3220 = verf.f32.pop %v3156
        %v3221 = verf.f32.pop %v3157
        %v3222 = verf.f32.pop %v3158
        %v3223 = verf.f32.pop %v3159
        %v3224 = verf.f32.pop %v3160
        %v3225 = verf.f32.pop %v3161
        %v3226 = verf.f32.pop %v3162
        %v3227 = verf.f32.pop %v3163
        %v3228 = verf.f32.pop %v3164
        %v3229 = verf.f32.pop %v3165
        %v3230 = verf.f32.pop %v3166
        %v3231 = verf.f32.pop %v3167
        %v3232 = verf.f32.pop %v3168
        %v3233 = verf.f32.pop %v3169
        %v3234 = verf.f32.pop %v3170
        %v3235 = verf.f32.pop %v3171
        %v3236 = verf.f32.pop %v3172
        %v3237 = verf.f32.pop %v3173
        %v3238 = verf.f32.pop %v3174
        %v3239 = verf.f32.pop %v3175
        %v3240 = verf.f32.pop %v3176
        %v3241 = verf.f32.pop %v3177
        %v3242 = verf.f32.pop %v3178
        %v3243 = verf.f32.pop %v3179
        %v3244 = verf.f32.pop %v3180
        %v3245 = verf.f32.pop %v3181
        %v3246 = verf.f32.pop %v3182
        %v3247 = verf.f32.pop %v3183
        %v3248 = verf.f32.pop %v3184
        %v3249 = verf.f32.pop %v3185
        %v3250 = verf.f32.pop %v3186
        %v3251 = verf.f32.pop %v3187
        %v3252 = verf.f32.pop %v3188
        %v3253 = verf.f32.pop %v3189
        %v3254 = verf.f32.pop %v3190
        %v3255 = verf.f32.pop %v3191
        %v3256 = verf.f32.pop %v3192
        %v3257 = verf.f32.pop %v3193
        %v3258 = vadd.f32 %v3194, 1.0
        %v3259 = vadd.f32 %v3195, 1.0
        %v3260 = vadd.f32 %v3196, 1.0
        %v3261 = vadd.f32 %v3197, 1.0
        %v3262 = vadd.f32 %v3198, 1.0
        %v3263 = vadd.f32 %v3199, 1.0
        %v3264 = vadd.f32 %v3200, 1.0
        %v3265 = vadd.f32 %v3201, 1.0
        %v3266 = vadd.f32 %v3202, 1.0
        %v3267 = vadd.f32 %v3203, 1.0
        %v3268 = vadd.f32 %v3204, 1.0
        %v3269 = vadd.f32 %v3205, 1.0
        %v3270 = vadd.f32 %v3206, 1.0
        %v3271 = vadd.f32 %v3207, 1.0
        %v3272 = vadd.f32 %v3208, 1.0
        %v3273 = vadd.f32 %v3209, 1.0
        %v3274 = vadd.f32 %v3210, 1.0
        %v3275 = vadd.f32 %v3211, 1.0
        %v3276 = vadd.f32 %v3212, 1.0
        %v3277 = vadd.f32 %v3213, 1.0
        %v3278 = vadd.f32 %v3214, 1.0
        %v3279 = vadd.f32 %v3215, 1.0
        %v3280 = vadd.f32 %v3216, 1.0
        %v3281 = vadd.f32 %v3217, 1.0
        %v3282 = vadd.f32 %v3218, 1.0
        %v3283 = vadd.f32 %v3219, 1.0
        %v3284 = vadd.f32 %v3220, 1.0
        %v3285 = vadd.f32 %v3221, 1.0
        %v3286 = vadd.f32 %v3222, 1.0
        %v3287 = vadd.f32 %v3223, 1.0
        %v3288 = vadd.f32 %v3224, 1.0
        %v3289 = vadd.f32 %v3225, 1.0
        %v3290 = vadd.f32 %v3226, 1.0
        %v3291 = vadd.f32 %v3227, 1.0
        %v3292 = vadd.f32 %v3228, 1.0
        %v3293 = vadd.f32 %v3229, 1.0
        %v3294 = vadd.f32 %v3230, 1.0
        %v3295 = vadd.f32 %v3231, 1.0
        %v3296 = vadd.f32 %v3232, 1.0
        %v3297 = vadd.f32 %v3233, 1.0
        %v3298 = vadd.f32 %v3234, 1.0
        %v3299 = vadd.f32 %v3235, 1.0
        %v3300 = vadd.f32 %v3236, 1.0
        %v3301 = vadd.f32 %v3237, 1.0
        %v3302 = vadd.f32 %v3238, 1.0
        %v3303 = vadd.f32 %v3239, 1.0
        %v3304 = vadd.f32 %v3240, 1.0
        %v3305 = vadd.f32 %v3241, 1.0
        %v3306 = vadd.f32 %v3242, 1.0
        %v3307 = vadd.f32 %v3243, 1.0
        %v3308 = vadd.f32 %v3244, 1.0
        %v3309 = vadd.f32 %v3245, 1.0
        %v3310 = vadd.f32 %v3246, 1.0
        %v3311 = vadd.f32 %v3247, 1.0
        %v3312 = vadd.f32 %v3248, 1.0
        %v3313 = vadd.f32 %v3249, 1.0
        %v3314 = vadd.f32 %v3250, 1.0
        %v3315 = vadd.f32 %v3251, 1.0
        %v3316 = vadd.f32 %v3252, 1.0
        %v3317 = vadd.f32 %v3253, 1.0
        %v3318 = vadd.f32 %v3254, 1.0
        %v3319 = vadd.f32 %v3255, 1.0
        %v3320 = vadd.f32 %v3256, 1.0
        %v3321 = vadd.f32 %v3257, 1.0
        %v3322 = vmul.f32 %v3066, %v3258
        %v3323 = vmul.f32 %v3067, %v3259
        %v3324 = vmul.f32 %v3068, %v3260
        %v3325 = vmul.f32 %v3069, %v3261
        %v3326 = vmul.f32 %v3070, %v3262
        %v3327 = vmul.f32 %v3071, %v3263
        %v3328 = vmul.f32 %v3072, %v3264
        %v3329 = vmul.f32 %v3073, %v3265
        %v3330 = vmul.f32 %v3074, %v3266
        %v3331 = vmul.f32 %v3075, %v3267
        %v3332 = vmul.f32 %v3076, %v3268
        %v3333 = vmul.f32 %v3077, %v3269
        %v3334 = vmul.f32 %v3078, %v3270
        %v3335 = vmul.f32 %v3079, %v3271
        %v3336 = vmul.f32 %v3080, %v3272
        %v3337 = vmul.f32 %v3081, %v3273
        %v3338 = vmul.f32 %v3082, %v3274
        %v3339 = vmul.f32 %v3083, %v3275
        %v3340 = vmul.f32 %v3084, %v3276
        %v3341 = vmul.f32 %v3085, %v3277
        %v3342 = vmul.f32 %v3086, %v3278
        %v3343 = vmul.f32 %v3087, %v3279
        %v3344 = vmul.f32 %v3088, %v3280
        %v3345 = vmul.f32 %v3089, %v3281
        %v3346 = vmul.f32 %v3090, %v3282
        %v3347 = vmul.f32 %v3091, %v3283
        %v3348 = vmul.f32 %v3092, %v3284
        %v3349 = vmul.f32 %v3093, %v3285
        %v3350 = vmul.f32 %v3094, %v3286
        %v3351 = vmul.f32 %v3095, %v3287
        %v3352 = vmul.f32 %v3096, %v3288
        %v3353 = vmul.f32 %v3097, %v3289
        %v3354 = vmul.f32 %v3098, %v3290
        %v3355 = vmul.f32 %v3099, %v3291
        %v3356 = vmul.f32 %v3100, %v3292
        %v3357 = vmul.f32 %v3101, %v3293
        %v3358 = vmul.f32 %v3102, %v3294
        %v3359 = vmul.f32 %v3103, %v3295
        %v3360 = vmul.f32 %v3104, %v3296
        %v3361 = vmul.f32 %v3105, %v3297
        %v3362 = vmul.f32 %v3106, %v3298
        %v3363 = vmul.f32 %v3107, %v3299
        %v3364 = vmul.f32 %v3108, %v3300
        %v3365 = vmul.f32 %v3109, %v3301
        %v3366 = vmul.f32 %v3110, %v3302
        %v3367 = vmul.f32 %v3111, %v3303
        %v3368 = vmul.f32 %v3112, %v3304
        %v3369 = vmul.f32 %v3113, %v3305
        %v3370 = vmul.f32 %v3114, %v3306
        %v3371 = vmul.f32 %v3115, %v3307
        %v3372 = vmul.f32 %v3116, %v3308
        %v3373 = vmul.f32 %v3117, %v3309
        %v3374 = vmul.f32 %v3118, %v3310
        %v3375 = vmul.f32 %v3119, %v3311
        %v3376 = vmul.f32 %v3120, %v3312
        %v3377 = vmul.f32 %v3121, %v3313
        %v3378 = vmul.f32 %v3122, %v3314
        %v3379 = vmul.f32 %v3123, %v3315
        %v3380 = vmul.f32 %v3124, %v3316
        %v3381 = vmul.f32 %v3125, %v3317
        %v3382 = vmul.f32 %v3126, %v3318
        %v3383 = vmul.f32 %v3127, %v3319
        %v3384 = vmul.f32 %v3128, %v3320
        %v3385 = vmul.f32 %v3129, %v3321
        %v3386 = vld [vmem:[#allocation8] sm:$0xff]
        %v3387 = vld [vmem:[#allocation8 + $0x8] sm:$0xff]
        %v3388 = vld [vmem:[#allocation8 + $0x10] sm:$0xff]
        %v3389 = vld [vmem:[#allocation8 + $0x18] sm:$0xff]
        %v3390 = vld [vmem:[#allocation8 + $0x20] sm:$0xff]
        %v3391 = vld [vmem:[#allocation8 + $0x28] sm:$0xff]
        %v3392 = vld [vmem:[#allocation8 + $0x30] sm:$0xff]
        %v3393 = vld [vmem:[#allocation8 + $0x38] sm:$0xff]
        %v3394 = vld [vmem:[#allocation8 + $0x40] sm:$0xff]
        %v3395 = vld [vmem:[#allocation8 + $0x48] sm:$0xff]
        %v3396 = vld [vmem:[#allocation8 + $0x50] sm:$0xff]
        %v3397 = vld [vmem:[#allocation8 + $0x58] sm:$0xff]
        %v3398 = vld [vmem:[#allocation8 + $0x60] sm:$0xff]
        %v3399 = vld [vmem:[#allocation8 + $0x68] sm:$0xff]
        %v3400 = vld [vmem:[#allocation8 + $0x70] sm:$0xff]
        %v3401 = vld [vmem:[#allocation8 + $0x78] sm:$0xff]
        %v3402 = vld [vmem:[#allocation8 + $0x80] sm:$0xff]
        %v3403 = vld [vmem:[#allocation8 + $0x88] sm:$0xff]
        %v3404 = vld [vmem:[#allocation8 + $0x90] sm:$0xff]
        %v3405 = vld [vmem:[#allocation8 + $0x98] sm:$0xff]
        %v3406 = vld [vmem:[#allocation8 + $0xa0] sm:$0xff]
        %v3407 = vld [vmem:[#allocation8 + $0xa8] sm:$0xff]
        %v3408 = vld [vmem:[#allocation8 + $0xb0] sm:$0xff]
        %v3409 = vld [vmem:[#allocation8 + $0xb8] sm:$0xff]
        %v3410 = vld [vmem:[#allocation8 + $0xc0] sm:$0xff]
        %v3411 = vld [vmem:[#allocation8 + $0xc8] sm:$0xff]
        %v3412 = vld [vmem:[#allocation8 + $0xd0] sm:$0xff]
        %v3413 = vld [vmem:[#allocation8 + $0xd8] sm:$0xff]
        %v3414 = vld [vmem:[#allocation8 + $0xe0] sm:$0xff]
        %v3415 = vld [vmem:[#allocation8 + $0xe8] sm:$0xff]
        %v3416 = vld [vmem:[#allocation8 + $0xf0] sm:$0xff]
        %v3417 = vld [vmem:[#allocation8 + $0xf8] sm:$0xff]
        %v3419 = vlaneseq
        %v3420 = vshrl.u32 %v3419, 7
        %v3421 = vsub.s32 0, %v3420
        %v3422 = vrot.slane %v1223, %v3421
        %3424 = vmatprep.subr.mxu0 0.0
        %3425 = vmatpush1.msra.mxu0 %v3386
        %3426 = vmatprep.subr.mxu0 0.0
        %3427 = vmatpush1.msra.mxu0 %v3387
        %3428 = vmatprep.subr.mxu0 0.0
        %3429 = vmatpush1.msra.mxu0 %v3388
        %3430 = vmatprep.subr.mxu0 0.0
        %3431 = vmatpush1.msra.mxu0 %v3389
        %3432 = vmatprep.subr.mxu0 0.0
        %3433 = vmatpush1.msra.mxu0 %v3390
        %3434 = vmatprep.subr.mxu0 0.0
        %3435 = vmatpush1.msra.mxu0 %v3391
        %3436 = vmatprep.subr.mxu0 0.0
        %3437 = vmatpush1.msra.mxu0 %v3392
        %3438 = vmatprep.subr.mxu0 0.0
        %3439 = vmatpush1.msra.mxu0 %v3393
        %3440 = vmatprep.subr.mxu0 0.0
        %3441 = vmatpush1.msra.mxu0 %v3394
        %3442 = vmatprep.subr.mxu0 0.0
        %3443 = vmatpush1.msra.mxu0 %v3395
        %3444 = vmatprep.subr.mxu0 0.0
        %3445 = vmatpush1.msra.mxu0 %v3396
        %3446 = vmatprep.subr.mxu0 0.0
        %3447 = vmatpush1.msra.mxu0 %v3397
        %3448 = vmatprep.subr.mxu0 0.0
        %3449 = vmatpush1.msra.mxu0 %v3398
        %3450 = vmatprep.subr.mxu0 0.0
        %3451 = vmatpush1.msra.mxu0 %v3399
        %3452 = vmatprep.subr.mxu0 0.0
        %3453 = vmatpush1.msra.mxu0 %v3400
        %3454 = vmatprep.subr.mxu0 0.0
        %3455 = vmatpush1.msra.mxu0 %v3401
        %3456 = vmatprep.subr.mxu0 0.0
        %3457 = vmatpush1.msra.mxu0 %v3402
        %3458 = vmatprep.subr.mxu0 0.0
        %3459 = vmatpush1.msra.mxu0 %v3403
        %3460 = vmatprep.subr.mxu0 0.0
        %3461 = vmatpush1.msra.mxu0 %v3404
        %3462 = vmatprep.subr.mxu0 0.0
        %3463 = vmatpush1.msra.mxu0 %v3405
        %3464 = vmatprep.subr.mxu0 0.0
        %3465 = vmatpush1.msra.mxu0 %v3406
        %3466 = vmatprep.subr.mxu0 0.0
        %3467 = vmatpush1.msra.mxu0 %v3407
        %3468 = vmatprep.subr.mxu0 0.0
        %3469 = vmatpush1.msra.mxu0 %v3408
        %3470 = vmatprep.subr.mxu0 0.0
        %3471 = vmatpush1.msra.mxu0 %v3409
        %3472 = vmatprep.subr.mxu0 0.0
        %3473 = vmatpush1.msra.mxu0 %v3410
        %3474 = vmatprep.subr.mxu0 0.0
        %3475 = vmatpush1.msra.mxu0 %v3411
        %3476 = vmatprep.subr.mxu0 0.0
        %3477 = vmatpush1.msra.mxu0 %v3412
        %3478 = vmatprep.subr.mxu0 0.0
        %3479 = vmatpush1.msra.mxu0 %v3413
        %3480 = vmatprep.subr.mxu0 0.0
        %3481 = vmatpush1.msra.mxu0 %v3414
        %3482 = vmatprep.subr.mxu0 0.0
        %3483 = vmatpush1.msra.mxu0 %v3415
        %3484 = vmatprep.subr.mxu0 0.0
        %3485 = vmatpush1.msra.mxu0 %v3416
        %3486 = vmatprep.subr.mxu0 0.0
        %3487 = vmatpush1.msra.mxu0 %v3417
        %3488 = vmatprep.mubr.f32.mxu0 %v3323
        %3489 = vmatmul.mubr.f32.gmra.mrb[0].mxu0 %v3322
        %v3490 = vpop.f32.mrb[0].mxu0
        %v3491 = vadd.f32 %v3422, %v3490
        %v3492 = vpop.f32.mrb[0].mxu0
        %3493 = vmatprep.mubr.f32.mxu0 %v3325
        %3494 = vmatmul.mubr.f32.gmra.mrb[0].mxu0 %v3324
        %v3495 = vpop.f32.mrb[0].mxu0
        %v3496 = vadd.f32 %v3422, %v3495
        %v3497 = vpop.f32.mrb[0].mxu0
        %3498 = vmatprep.mubr.f32.mxu0 %v3327
        %3499 = vmatmul.mubr.f32.gmra.mrb[0].mxu0 %v3326
        %v3500 = vpop.f32.mrb[0].mxu0
        %v3501 = vadd.f32 %v3422, %v3500
        %v3502 = vpop.f32.mrb[0].mxu0
        %3503 = vmatprep.mubr.f32.mxu0 %v3329
        %3504 = vmatmul.mubr.f32.gmra.mrb[0].mxu0 %v3328
        %v3505 = vpop.f32.mrb[0].mxu0
        %v3506 = vadd.f32 %v3422, %v3505
        %v3507 = vpop.f32.mrb[0].mxu0
        %3508 = vmatprep.mubr.f32.mxu0 %v3331
        %3509 = vmatmul.mubr.f32.gmra.mrb[0].mxu0 %v3330
        %v3510 = vpop.f32.mrb[0].mxu0
        %v3511 = vadd.f32 %v3422, %v3510
        %v3512 = vpop.f32.mrb[0].mxu0
        %3513 = vmatprep.mubr.f32.mxu0 %v3333
        %3514 = vmatmul.mubr.f32.gmra.mrb[0].mxu0 %v3332
        %v3515 = vpop.f32.mrb[0].mxu0
        %v3516 = vadd.f32 %v3422, %v3515
        %v3517 = vpop.f32.mrb[0].mxu0
        %3518 = vmatprep.mubr.f32.mxu0 %v3335
        %3519 = vmatmul.mubr.f32.gmra.mrb[0].mxu0 %v3334
        %v3520 = vpop.f32.mrb[0].mxu0
        %v3521 = vadd.f32 %v3422, %v3520
        %v3522 = vpop.f32.mrb[0].mxu0
        %3523 = vmatprep.mubr.f32.mxu0 %v3337
        %3524 = vmatmul.mubr.f32.gmra.mrb[0].mxu0 %v3336
        %v3525 = vpop.f32.mrb[0].mxu0
        %v3526 = vadd.f32 %v3422, %v3525
        %v3527 = vpop.f32.mrb[0].mxu0
        %3528 = vmatprep.mubr.f32.mxu0 %v3339
        %3529 = vmatmul.mubr.f32.gmra.mrb[0].mxu0 %v3338
        %v3530 = vpop.f32.mrb[0].mxu0
        %v3531 = vadd.f32 %v3422, %v3530
        %v3532 = vpop.f32.mrb[0].mxu0
        %3533 = vmatprep.mubr.f32.mxu0 %v3341
        %3534 = vmatmul.mubr.f32.gmra.mrb[0].mxu0 %v3340
        %v3535 = vpop.f32.mrb[0].mxu0
        %v3536 = vadd.f32 %v3422, %v3535
        %v3537 = vpop.f32.mrb[0].mxu0
        %3538 = vmatprep.mubr.f32.mxu0 %v3343
        %3539 = vmatmul.mubr.f32.gmra.mrb[0].mxu0 %v3342
        %v3540 = vpop.f32.mrb[0].mxu0
        %v3541 = vadd.f32 %v3422, %v3540
        %v3542 = vpop.f32.mrb[0].mxu0
        %3543 = vmatprep.mubr.f32.mxu0 %v3345
        %3544 = vmatmul.mubr.f32.gmra.mrb[0].mxu0 %v3344
        %v3545 = vpop.f32.mrb[0].mxu0
        %v3546 = vadd.f32 %v3422, %v3545
        %v3547 = vpop.f32.mrb[0].mxu0
        %3548 = vmatprep.mubr.f32.mxu0 %v3347
        %3549 = vmatmul.mubr.f32.gmra.mrb[0].mxu0 %v3346
        %v3550 = vpop.f32.mrb[0].mxu0
        %v3551 = vadd.f32 %v3422, %v3550
        %v3552 = vpop.f32.mrb[0].mxu0
        %3553 = vmatprep.mubr.f32.mxu0 %v3349
        %3554 = vmatmul.mubr.f32.gmra.mrb[0].mxu0 %v3348
        %v3555 = vpop.f32.mrb[0].mxu0
        %v3556 = vadd.f32 %v3422, %v3555
        %v3557 = vpop.f32.mrb[0].mxu0
        %3558 = vmatprep.mubr.f32.mxu0 %v3351
        %3559 = vmatmul.mubr.f32.gmra.mrb[0].mxu0 %v3350
        %v3560 = vpop.f32.mrb[0].mxu0
        %v3561 = vadd.f32 %v3422, %v3560
        %v3562 = vpop.f32.mrb[0].mxu0
        %3563 = vmatprep.mubr.f32.mxu0 %v3353
        %3564 = vmatmul.mubr.f32.gmra.mrb[0].mxu0 %v3352
        %v3565 = vpop.f32.mrb[0].mxu0
        %v3566 = vadd.f32 %v3422, %v3565
        %v3567 = vpop.f32.mrb[0].mxu0
        %3568 = vmatprep.mubr.f32.mxu0 %v3355
        %3569 = vmatmul.mubr.f32.gmra.mrb[0].mxu0 %v3354
        %v3570 = vpop.f32.mrb[0].mxu0
        %v3571 = vadd.f32 %v3422, %v3570
        %v3572 = vpop.f32.mrb[0].mxu0
        %3573 = vmatprep.mubr.f32.mxu0 %v3357
        %3574 = vmatmul.mubr.f32.gmra.mrb[0].mxu0 %v3356
        %v3575 = vpop.f32.mrb[0].mxu0
        %v3576 = vadd.f32 %v3422, %v3575
        %v3577 = vpop.f32.mrb[0].mxu0
        %3578 = vmatprep.mubr.f32.mxu0 %v3359
        %3579 = vmatmul.mubr.f32.gmra.mrb[0].mxu0 %v3358
        %v3580 = vpop.f32.mrb[0].mxu0
        %v3581 = vadd.f32 %v3422, %v3580
        %v3582 = vpop.f32.mrb[0].mxu0
        %3583 = vmatprep.mubr.f32.mxu0 %v3361
        %3584 = vmatmul.mubr.f32.gmra.mrb[0].mxu0 %v3360
        %v3585 = vpop.f32.mrb[0].mxu0
        %v3586 = vadd.f32 %v3422, %v3585
        %v3587 = vpop.f32.mrb[0].mxu0
        %3588 = vmatprep.mubr.f32.mxu0 %v3363
        %3589 = vmatmul.mubr.f32.gmra.mrb[0].mxu0 %v3362
        %v3590 = vpop.f32.mrb[0].mxu0
        %v3591 = vadd.f32 %v3422, %v3590
        %v3592 = vpop.f32.mrb[0].mxu0
        %3593 = vmatprep.mubr.f32.mxu0 %v3365
        %3594 = vmatmul.mubr.f32.gmra.mrb[0].mxu0 %v3364
        %v3595 = vpop.f32.mrb[0].mxu0
        %v3596 = vadd.f32 %v3422, %v3595
        %v3597 = vpop.f32.mrb[0].mxu0
        %3598 = vmatprep.mubr.f32.mxu0 %v3367
        %3599 = vmatmul.mubr.f32.gmra.mrb[0].mxu0 %v3366
        %v3600 = vpop.f32.mrb[0].mxu0
        %v3601 = vadd.f32 %v3422, %v3600
        %v3602 = vpop.f32.mrb[0].mxu0
        %3603 = vmatprep.mubr.f32.mxu0 %v3369
        %3604 = vmatmul.mubr.f32.gmra.mrb[0].mxu0 %v3368
        %v3605 = vpop.f32.mrb[0].mxu0
        %v3606 = vadd.f32 %v3422, %v3605
        %v3607 = vpop.f32.mrb[0].mxu0
        %3608 = vmatprep.mubr.f32.mxu0 %v3371
        %3609 = vmatmul.mubr.f32.gmra.mrb[0].mxu0 %v3370
        %v3610 = vpop.f32.mrb[0].mxu0
        %v3611 = vadd.f32 %v3422, %v3610
        %v3612 = vpop.f32.mrb[0].mxu0
        %3613 = vmatprep.mubr.f32.mxu0 %v3373
        %3614 = vmatmul.mubr.f32.gmra.mrb[0].mxu0 %v3372
        %v3615 = vpop.f32.mrb[0].mxu0
        %v3616 = vadd.f32 %v3422, %v3615
        %v3617 = vpop.f32.mrb[0].mxu0
        %3618 = vmatprep.mubr.f32.mxu0 %v3375
        %3619 = vmatmul.mubr.f32.gmra.mrb[0].mxu0 %v3374
        %v3620 = vpop.f32.mrb[0].mxu0
        %v3621 = vadd.f32 %v3422, %v3620
        %v3622 = vpop.f32.mrb[0].mxu0
        %3623 = vmatprep.mubr.f32.mxu0 %v3377
        %3624 = vmatmul.mubr.f32.gmra.mrb[0].mxu0 %v3376
        %v3625 = vpop.f32.mrb[0].mxu0
        %v3626 = vadd.f32 %v3422, %v3625
        %v3627 = vpop.f32.mrb[0].mxu0
        %3628 = vmatprep.mubr.f32.mxu0 %v3379
        %3629 = vmatmul.mubr.f32.gmra.mrb[0].mxu0 %v3378
        %v3630 = vpop.f32.mrb[0].mxu0
        %v3631 = vadd.f32 %v3422, %v3630
        %v3632 = vpop.f32.mrb[0].mxu0
        %3633 = vmatprep.mubr.f32.mxu0 %v3381
        %3634 = vmatmul.mubr.f32.gmra.mrb[0].mxu0 %v3380
        %v3635 = vpop.f32.mrb[0].mxu0
        %v3636 = vadd.f32 %v3422, %v3635
        %v3637 = vpop.f32.mrb[0].mxu0
        %3638 = vmatprep.mubr.f32.mxu0 %v3383
        %3639 = vmatmul.mubr.f32.gmra.mrb[0].mxu0 %v3382
        %v3640 = vpop.f32.mrb[0].mxu0
        %v3641 = vadd.f32 %v3422, %v3640
        %v3642 = vpop.f32.mrb[0].mxu0
        %3643 = vmatprep.mubr.f32.mxu0 %v3385
        %3644 = vmatmul.mubr.f32.gmra.mrb[0].mxu0 %v3384
        %v3645 = vpop.f32.mrb[0].mxu0
        %v3646 = vadd.f32 %v3422, %v3645
        %v3647 = vpop.f32.mrb[0].mxu0
        %3648 = vdwg.mxu0
        %3649 = vst [vmem:[%s340] sm:$0xff] %v3491
        %3650 = vst [vmem:[%s340 + $0x8] sm:$0xff] %v3496
        %3651 = vst [vmem:[%s340 + $0x10] sm:$0xff] %v3501
        %3652 = vst [vmem:[%s340 + $0x18] sm:$0xff] %v3506
        %3653 = vst [vmem:[%s340 + $0x20] sm:$0xff] %v3511
        %3654 = vst [vmem:[%s340 + $0x28] sm:$0xff] %v3516
        %3655 = vst [vmem:[%s340 + $0x30] sm:$0xff] %v3521
        %3656 = vst [vmem:[%s340 + $0x38] sm:$0xff] %v3526
        %3657 = vst [vmem:[%s340 + $0x40] sm:$0xff] %v3531
        %3658 = vst [vmem:[%s340 + $0x48] sm:$0xff] %v3536
        %3659 = vst [vmem:[%s340 + $0x50] sm:$0xff] %v3541
        %3660 = vst [vmem:[%s340 + $0x58] sm:$0xff] %v3546
        %3661 = vst [vmem:[%s340 + $0x60] sm:$0xff] %v3551
        %3662 = vst [vmem:[%s340 + $0x68] sm:$0xff] %v3556
        %3663 = vst [vmem:[%s340 + $0x70] sm:$0xff] %v3561
        %3664 = vst [vmem:[%s340 + $0x78] sm:$0xff] %v3566
        %3665 = vst [vmem:[%s340 + $0x80] sm:$0xff] %v3571
        %3666 = vst [vmem:[%s340 + $0x88] sm:$0xff] %v3576
        %3667 = vst [vmem:[%s340 + $0x90] sm:$0xff] %v3581
        %3668 = vst [vmem:[%s340 + $0x98] sm:$0xff] %v3586
        %3669 = vst [vmem:[%s340 + $0xa0] sm:$0xff] %v3591
        %3670 = vst [vmem:[%s340 + $0xa8] sm:$0xff] %v3596
        %3671 = vst [vmem:[%s340 + $0xb0] sm:$0xff] %v3601
        %3672 = vst [vmem:[%s340 + $0xb8] sm:$0xff] %v3606
        %3673 = vst [vmem:[%s340 + $0xc0] sm:$0xff] %v3611
        %3674 = vst [vmem:[%s340 + $0xc8] sm:$0xff] %v3616
        %3675 = vst [vmem:[%s340 + $0xd0] sm:$0xff] %v3621
        %3676 = vst [vmem:[%s340 + $0xd8] sm:$0xff] %v3626
        %3677 = vst [vmem:[%s340 + $0xe0] sm:$0xff] %v3631
        %3678 = vst [vmem:[%s340 + $0xe8] sm:$0xff] %v3636
        %3679 = vst [vmem:[%s340 + $0xf0] sm:$0xff] %v3641
        %3680 = vst [vmem:[%s340 + $0xf8] sm:$0xff] %v3646
        %s3681 = sand.u32 %s186, 1
        %s3682 = scalar_lea.sflag [#allocation4], %s3681
        %s3683 = sand.u32 %s186, 1
        %s3684 = smul.addr %s3683, 256
        %s3685 = scalar_lea.vmem [#allocation10], %s3684
        // Predicated region
        $region65: #{tpu_custom_call.1} parent=47 // pred_check
          %p3686 = pneg %p196
        $region66: #{tpu_custom_call.1} parent=47 // pred_check_branch
          %3688 = sbr.rel (%p3686) target = $region68
        $region67: #{tpu_custom_call.1} parent=47 // pred_region
          %s3690 = ssub.s32 4096, 4096
          %3691 = vsyncadd %s3682, %s3690
          %s3692 = smul.addr %s26, 32
          %s3693 = smul.addr %s3692, 128
          %s3694 = scalar_lea.hbm %s7, %s3693
          %s3695 = sshll.u32 %s3685, 4
          %s3696 = int_to_ptr.vmem [resolvable:$true] %s3695
          %3701 = dma.vmem_to_hbm [thread:$0]  %s3696, 4096, %s3694, %s3682, 128, 128, 8
        $region68: #{tpu_custom_call.1} parent=47 // pred_fallthru
          _
      $region48: #{tpu_custom_call.1} parent=5 // pred_fallthru
        _
      %p3702 = scmp.le.s32.totalorder 2, %s21
      // Predicated region
      $region69: #{tpu_custom_call.1} parent=5 // pred_check
        %p3703 = pneg %p3702
      $region70: #{tpu_custom_call.1} parent=5 // pred_check_branch
        %3705 = sbr.rel (%p3703) target = $region72
      $region71: #{tpu_custom_call.1} parent=5 // pred_region
        %s3706 = ssub.s32 %s21, 2
        // Predicated region
        $region73: #{tpu_custom_call.1} parent=71 // pred_check
          %p3707 = pneg %p202
        $region74: #{tpu_custom_call.1} parent=71 // pred_check_branch
          %3709 = sbr.rel (%p3707) target = $region76
        $region75: #{tpu_custom_call.1} parent=71 // pred_region
          %s3710 = sand.u32 %s187, 1
          %s3711 = scalar_lea.sflag [#allocation4], %s3710
          %s3712 = sand.u32 %s187, 1
          %s3713 = smul.addr %s3712, 256
          %s3714 = scalar_lea.vmem [#allocation10], %s3713
          %3715 = dma.done %s3711, 4096
        $region76: #{tpu_custom_call.1} parent=71 // pred_fallthru
          _
      $region72: #{tpu_custom_call.1} parent=5 // pred_fallthru
        _
    $region6: #{tpu_custom_call.1} parent=1 // loop_footer
      %s25 = sadd.s32 1, %s21
    $region7: #{tpu_custom_call.1} parent=1 // loop_footer_branch
      %20 = sbr.rel target = $region3
    $region8: #{tpu_custom_call.1} parent=1 // loop_exit
      _
    %3716 = vsyncpa [#allocation3], 1
    %s3717 = scalar_lea.sflag [#allocation3], 1
    %3718 = vsyncpa %s3717, 1
    %3719 = vsyncpa [#allocation6], 1
    %3720 = vsyncpa [#allocation9], 1
    %3721 = vsyncpa [#allocation4], 1
    %s3722 = scalar_lea.sflag [#allocation4], 1
    %3723 = vsyncpa %s3722, 1

</llo_original>
